<compile_context>
chip_gen: v7x
topology: tpu7x:2x2x1
jax: 0.10.0
libtpu: 0.0.40
codegen_flags: <defaults>
</compile_context>

<pallas_src>
import functools

import jax
import jax.numpy as jnp
from jax import lax
from jax.experimental import pallas as pl
from jax.experimental.pallas import tpu as pltpu


# ----------------------------------------------------------------------------
# Single fused Pallas kernel: encoder (L1+L2) -> decoder (L1+L2) -> out head
# ----------------------------------------------------------------------------
def _seq2seq_kernel(encx_ref, gt_ref, w1_ref, b1_ref, w2_ref, b2_ref,
                    outw_ref, outb_ref,
                    logits_ref, h1_ref, c1_ref, h2_ref, c2_ref,
                    *, T, B):
    L = h1_ref.shape[-1]
    f32 = jnp.float32

    w1 = w1_ref[...]              # (2L, 4L) = [W1_ih^T ; W1_hh^T]
    w1_hh = w1[L:2 * L, :]        # (L, 4L)  decoder layer-1 (input is structural zeros)
    b1 = b1_ref[...]              # (1, 4L)
    w2 = w2_ref[...]              # (3L, 4L) = [W2_ih^T top ; W2_ih^T bottom ; W2_hh^T]
    w2_enc = w2[L:3 * L, :]       # (2L, 4L) encoder layer-2 skips the zero first half
    b2 = b2_ref[...]              # (1, 4L)

    def cell(gates, c):
        # PyTorch gate order [i, f, g, o]; sigmoid/tanh computed on the full
        # (B, 4L) vreg once (EUP), then sliced.
        sg = jax.nn.sigmoid(gates)
        tg = jnp.tanh(gates)
        i = sg[:, 0:L]
        f = sg[:, L:2 * L]
        g = tg[:, 2 * L:3 * L]
        o = sg[:, 3 * L:4 * L]
        c_new = f * c + i * g
        h_new = o * jnp.tanh(c_new)
        return h_new, c_new

    zeros = jnp.zeros((B, L), f32)
    h1 = c1 = h2 = c2 = zeros

    # ---- encoder: both stacked LSTM layers fused in one unrolled time loop ----
    for t in range(T):
        x = encx_ref[t * B:(t + 1) * B, :]                       # (B, L)
        g1 = jnp.dot(jnp.concatenate([x, h1], axis=-1), w1,
                     preferred_element_type=f32) + b1
        h1, c1 = cell(g1, c1)
        # layer-2 input is concat([zeros, out1]); zero half dropped via w2_enc
        g2 = jnp.dot(jnp.concatenate([h1, h2], axis=-1), w2_enc,
                     preferred_element_type=f32) + b2
        h2, c2 = cell(g2, c2)

    # ---- decoder: layer-1 input is all zeros, layer-2 sees concat([gt, out1]) ----
    ys = []
    for t in range(T):
        g1 = jnp.dot(h1, w1_hh, preferred_element_type=f32) + b1  # no x term (zeros)
        h1, c1 = cell(g1, c1)
        gt_t = gt_ref[t * B:(t + 1) * B, :]                        # (B, L)
        g2 = jnp.dot(jnp.concatenate([gt_t, h1, h2], axis=-1), w2,
                     preferred_element_type=f32) + b2
        h2, c2 = cell(g2, c2)
        ys.append(h2)

    # ---- output head: one M = T*B matmul, single lane-dense store ----
    y = jnp.concatenate(ys, axis=0)                                # (T*B, L)
    logits_ref[...] = (jnp.dot(y, outw_ref[...], preferred_element_type=f32)
                       + outb_ref[...]).astype(logits_ref.dtype)
    h1_ref[...] = h1
    c1_ref[...] = c1
    h2_ref[...] = h2
    c2_ref[...] = c2


# ----------------------------------------------------------------------------
# One-time parameter preparation (transposes / bias sums / embed->dense table)
# ----------------------------------------------------------------------------
def prepare_kernel_params(params):
    # dense(embedding(tok)) == (emb @ dense_w^T + dense_b)[tok]
    emb_dense = (jnp.dot(params["emb"], params["dense_w"].T,
                         precision=lax.Precision.HIGHEST)
                 + params["dense_b"]).astype(jnp.float32)          # (V, L)
    w1 = jnp.concatenate([params["l1_wih"].T, params["l1_whh"].T], axis=0)  # (2L,4L)
    b1 = (params["l1_bih"] + params["l1_bhh"]).reshape(1, -1)
    w2 = jnp.concatenate([params["l2_wih"].T, params["l2_whh"].T], axis=0)  # (3L,4L)
    b2 = (params["l2_bih"] + params["l2_bhh"]).reshape(1, -1)
    outw = jnp.transpose(params["out_w"])                                   # (L, V)
    outb = params["out_b"].reshape(1, -1)
    return dict(emb_dense=emb_dense, w1=w1, b1=b1, w2=w2, b2=b2,
                outw=outw, outb=outb)


# ----------------------------------------------------------------------------
# NewSeq2seq forward (encoder_forward + decoder_forward), single kernel launch
# ----------------------------------------------------------------------------
def new_seq2seq_forward(kparams, inputs, targets):
    """inputs/targets: (T, B) int32 token ids. Returns (logits, (h1,c1), (h2,c2))."""
    T, B = inputs.shape
    L = kparams["w1"].shape[1] // 4
    N = kparams["outw"].shape[1]

    # embedding gather + dense done via precomputed table (plain-JAX glue)
    emb_dense = kparams["emb_dense"]
    enc_x = emb_dense[inputs].reshape(T * B, L)
    gt = emb_dense[targets].reshape(T * B, L)

    kernel = functools.partial(_seq2seq_kernel, T=T, B=B)

    def spec(shape):
        return pl.BlockSpec(shape, lambda i: (0, 0))

    logits2d, h1, c1, h2, c2 = pl.pallas_call(
        kernel,
        out_shape=(
            jax.ShapeDtypeStruct((T * B, N), jnp.float32),
            jax.ShapeDtypeStruct((B, L), jnp.float32),
            jax.ShapeDtypeStruct((B, L), jnp.float32),
            jax.ShapeDtypeStruct((B, L), jnp.float32),
            jax.ShapeDtypeStruct((B, L), jnp.float32),
        ),
        grid=(1,),
        in_specs=[
            spec(enc_x.shape), spec(gt.shape),
            spec(kparams["w1"].shape), spec(kparams["b1"].shape),
            spec(kparams["w2"].shape), spec(kparams["b2"].shape),
            spec(kparams["outw"].shape), spec(kparams["outb"].shape),
        ],
        out_specs=(
            spec((T * B, N)), spec((B, L)), spec((B, L)),
            spec((B, L)), spec((B, L)),
        ),
        compiler_params=pltpu.CompilerParams(
            dimension_semantics=("arbitrary",)),
    )(enc_x, gt, kparams["w1"], kparams["b1"], kparams["w2"],
      kparams["b2"], kparams["outw"], kparams["outb"])

    logits = logits2d.reshape(T, B, N)
    # PyTorch nn.LSTM hidden states carry a leading num_layers dim of 1.
    return logits, (h1[None], c1[None]), (h2[None], c2[None])


# ----------------------------------------------------------------------------
# Pure-JAX reference (for correctness check)
# ----------------------------------------------------------------------------
def _ref_lstm(x_seq, w_ih, w_hh, b_ih, b_hh, h0, c0):
    H = w_hh.shape[1]
    prec = lax.Precision.HIGHEST

    def step(carry, x):
        h, c = carry
        gates = (jnp.dot(x, w_ih.T, precision=prec)
                 + jnp.dot(h, w_hh.T, precision=prec) + b_ih + b_hh)
        i = jax.nn.sigmoid(gates[:, 0:H])
        f = jax.nn.sigmoid(gates[:, H:2 * H])
        g = jnp.tanh(gates[:, 2 * H:3 * H])
        o = jax.nn.sigmoid(gates[:, 3 * H:4 * H])
        c_new = f * c + i * g
        h_new = o * jnp.tanh(c_new)
        return (h_new, c_new), h_new

    (hT, cT), y = lax.scan(step, (h0, c0), x_seq)
    return y, hT, cT


def _ref_forward(params, inputs, targets, L):
    T, B = inputs.shape
    prec = lax.Precision.HIGHEST

    def embed_dense(tokens):
        emb = params["emb"][tokens]
        return jnp.dot(emb, params["dense_w"].T, precision=prec) + params["dense_b"]

    z_hc = jnp.zeros((B, L), jnp.float32)
    z_seq = jnp.zeros((T, B, L), jnp.float32)

    enc_x = embed_dense(inputs)
    enc_out1, eh1, ec1 = _ref_lstm(enc_x, params["l1_wih"], params["l1_whh"],
                                   params["l1_bih"], params["l1_bhh"], z_hc, z_hc)
    _, eh2, ec2 = _ref_lstm(jnp.concatenate([z_seq, enc_out1], -1),
                            params["l2_wih"], params["l2_whh"],
                            params["l2_bih"], params["l2_bhh"], z_hc, z_hc)

    gt = embed_dense(targets)
    dec_out1, dh1, dc1 = _ref_lstm(z_seq, params["l1_wih"], params["l1_whh"],
                                   params["l1_bih"], params["l1_bhh"], eh1, ec1)
    dec_out2, dh2, dc2 = _ref_lstm(jnp.concatenate([gt, dec_out1], -1),
                                   params["l2_wih"], params["l2_whh"],
                                   params["l2_bih"], params["l2_bhh"], eh2, ec2)
    logits = jnp.dot(dec_out2, params["out_w"].T, precision=prec) + params["out_b"]
    return logits, (dh1[None], dc1[None]), (dh2[None], dc2[None])


# ----------------------------------------------------------------------------
# Deterministic parameter init (PyTorch-style shapes)
# ----------------------------------------------------------------------------
def init_params(key, num_tokens, char_dim, latent_dim):
    L = latent_dim
    ks = jax.random.split(key, 12)
    u = lambda k, shape, bound: jax.random.uniform(
        k, shape, jnp.float32, -bound, bound)
    inv = lambda n: 1.0 / jnp.sqrt(jnp.float32(n))
    return {
        "emb": jax.random.normal(ks[0], (num_tokens, char_dim), jnp.float32),
        "dense_w": u(ks[1], (L, char_dim), inv(char_dim)),
        "dense_b": u(ks[2], (L,), inv(char_dim)),
        "l1_wih": u(ks[3], (4 * L, L), inv(L)),
        "l1_whh": u(ks[4], (4 * L, L), inv(L)),
        "l1_bih": u(ks[5], (4 * L,), inv(L)),
        "l1_bhh": u(ks[6], (4 * L,), inv(L)),
        "l2_wih": u(ks[7], (4 * L, 2 * L), inv(L)),
        "l2_whh": u(ks[8], (4 * L, L), inv(L)),
        "l2_bih": u(ks[9], (4 * L,), inv(L)),
        "l2_bhh": u(ks[10], (4 * L,), inv(L)),
        "out_w": u(ks[11], (num_tokens, L), inv(L)),
        "out_b": jnp.zeros((num_tokens,), jnp.float32),
    }


if __name__ == "__main__":
    num_tokens = 64
    char_dim = 16
    latent_dim = 32
    T = 8      # time_steps (opt.mxlen)
    B = 2      # batch

    key = jax.random.PRNGKey(0)
    kp, ki, kt = jax.random.split(key, 3)
    params = init_params(kp, num_tokens, char_dim, latent_dim)

    inputs = jax.random.randint(ki, (T, B), 0, num_tokens, dtype=jnp.int32)
    targets = jax.random.randint(kt, (T, B), 0, num_tokens, dtype=jnp.int32)

    kparams = prepare_kernel_params(params)          # one-time weight prep (hoisted)
    fwd = jax.jit(new_seq2seq_forward)

    logits, (h1, c1), (h2, c2) = fwd(kparams, inputs, targets)
    jax.block_until_ready((logits, h1, c1, h2, c2))

    # Correctness check against a pure-JAX reference.
    r_logits, (rh1, rc1), (rh2, rc2) = _ref_forward(params, inputs, targets, latent_dim)
    import numpy as np
    np.testing.assert_allclose(np.asarray(logits), np.asarray(r_logits), rtol=2e-3, atol=2e-3)
    np.testing.assert_allclose(np.asarray(h1), np.asarray(rh1), rtol=2e-3, atol=2e-3)
    np.testing.assert_allclose(np.asarray(c1), np.asarray(rc1), rtol=2e-3, atol=2e-3)
    np.testing.assert_allclose(np.asarray(h2), np.asarray(rh2), rtol=2e-3, atol=2e-3)
    np.testing.assert_allclose(np.asarray(c2), np.asarray(rc2), rtol=2e-3, atol=2e-3)

    assert logits.shape == (T, B, num_tokens)
    assert h1.shape == (1, B, latent_dim) and c1.shape == (1, B, latent_dim)
    assert h2.shape == (1, B, latent_dim) and c2.shape == (1, B, latent_dim)
    print("KERNEL_OK")
</pallas_src>

<mosaic_0001>
module attributes {stable_mosaic.version = 11 : i64} {
  func.func @_seq2seq_kernel(%arg0: i32, %arg1: memref<16x32xf32, #tpu.memory_space<vmem>>, %arg2: memref<16x32xf32, #tpu.memory_space<vmem>>, %arg3: memref<64x128xf32, #tpu.memory_space<vmem>>, %arg4: memref<1x128xf32, #tpu.memory_space<vmem>>, %arg5: memref<96x128xf32, #tpu.memory_space<vmem>>, %arg6: memref<1x128xf32, #tpu.memory_space<vmem>>, %arg7: memref<32x64xf32, #tpu.memory_space<vmem>>, %arg8: memref<1x64xf32, #tpu.memory_space<vmem>>, %arg9: memref<16x64xf32, #tpu.memory_space<vmem>>, %arg10: memref<2x32xf32, #tpu.memory_space<vmem>>, %arg11: memref<2x32xf32, #tpu.memory_space<vmem>>, %arg12: memref<2x32xf32, #tpu.memory_space<vmem>>, %arg13: memref<2x32xf32, #tpu.memory_space<vmem>>) attributes {dimension_semantics = [#tpu.dimension_semantics<arbitrary>], iteration_bounds = array<i64: 1>, scalar_prefetch = 0 : i64, scratch_operands = 0 : i64, tpu.core_type = #tpu.core_type<tc>, window_params = [{pipeline_mode = #tpu.pipeline_mode<synchronous>, transform_indices = @transform_0, window_bounds = array<i64: 16, 32>}, {pipeline_mode = #tpu.pipeline_mode<synchronous>, transform_indices = @transform_1, window_bounds = array<i64: 16, 32>}, {pipeline_mode = #tpu.pipeline_mode<synchronous>, transform_indices = @transform_2, window_bounds = array<i64: 64, 128>}, {pipeline_mode = #tpu.pipeline_mode<synchronous>, transform_indices = @transform_3, window_bounds = array<i64: 1, 128>}, {pipeline_mode = #tpu.pipeline_mode<synchronous>, transform_indices = @transform_4, window_bounds = array<i64: 96, 128>}, {pipeline_mode = #tpu.pipeline_mode<synchronous>, transform_indices = @transform_5, window_bounds = array<i64: 1, 128>}, {pipeline_mode = #tpu.pipeline_mode<synchronous>, transform_indices = @transform_6, window_bounds = array<i64: 32, 64>}, {pipeline_mode = #tpu.pipeline_mode<synchronous>, transform_indices = @transform_7, window_bounds = array<i64: 1, 64>}, {pipeline_mode = #tpu.pipeline_mode<synchronous>, transform_indices = @transform_8, window_bounds = array<i64: 16, 64>}, {pipeline_mode = #tpu.pipeline_mode<synchronous>, transform_indices = @transform_9, window_bounds = array<i64: 2, 32>}, {pipeline_mode = #tpu.pipeline_mode<synchronous>, transform_indices = @transform_10, window_bounds = array<i64: 2, 32>}, {pipeline_mode = #tpu.pipeline_mode<synchronous>, transform_indices = @transform_11, window_bounds = array<i64: 2, 32>}, {pipeline_mode = #tpu.pipeline_mode<synchronous>, transform_indices = @transform_12, window_bounds = array<i64: 2, 32>}]} {
    %c0 = arith.constant 0 : index
    %c0_0 = arith.constant 0 : index
    %0 = vector.load %arg3[%c0, %c0_0] : memref<64x128xf32, #tpu.memory_space<vmem>>, vector<64x128xf32>
    %1 = vector.extract_strided_slice %0 {offsets = [32, 0], sizes = [32, 128], strides = [1, 1]} : vector<64x128xf32> to vector<32x128xf32>
    %c0_1 = arith.constant 0 : index
    %c0_2 = arith.constant 0 : index
    %2 = vector.load %arg4[%c0_1, %c0_2] : memref<1x128xf32, #tpu.memory_space<vmem>>, vector<1x128xf32>
    %c0_3 = arith.constant 0 : index
    %c0_4 = arith.constant 0 : index
    %3 = vector.load %arg5[%c0_3, %c0_4] : memref<96x128xf32, #tpu.memory_space<vmem>>, vector<96x128xf32>
    %4 = vector.extract_strided_slice %3 {offsets = [32, 0], sizes = [64, 128], strides = [1, 1]} : vector<96x128xf32> to vector<64x128xf32>
    %c0_5 = arith.constant 0 : index
    %c0_6 = arith.constant 0 : index
    %5 = vector.load %arg6[%c0_5, %c0_6] : memref<1x128xf32, #tpu.memory_space<vmem>>, vector<1x128xf32>
    %cst = arith.constant 0.000000e+00 : f32
    %6 = vector.broadcast %cst : f32 to vector<2x32xf32>
    %c0_7 = arith.constant 0 : index
    %c0_8 = arith.constant 0 : index
    %7 = vector.load %arg1[%c0_7, %c0_8] : memref<16x32xf32, #tpu.memory_space<vmem>>, vector<2x32xf32>
    %8 = tpu.concatenate %7, %6 in 1 : vector<2x32xf32>, vector<2x32xf32> -> vector<2x64xf32>
    %cst_9 = arith.constant dense<0.000000e+00> : vector<2x128xf32>
    %9 = tpu.matmul %8, %0, %cst_9 {dimension_numbers = #tpu.dot_dimension_numbers<[1], [0], [0], [1], [0, 0, 1, 1], [], []>} : vector<2x64xf32>, vector<64x128xf32>, vector<2x128xf32> -> vector<2x128xf32>
    %10 = vector.broadcast %2 : vector<1x128xf32> to vector<2x128xf32>
    %11 = arith.addf %9, %10 : vector<2x128xf32>
    %12 = arith.negf %11 : vector<2x128xf32>
    %13 = math.exp %12 : vector<2x128xf32>
    %cst_10 = arith.constant 1.000000e+00 : f32
    %14 = vector.broadcast %cst_10 : f32 to vector<2x128xf32>
    %15 = arith.addf %14, %13 : vector<2x128xf32>
    %16 = arith.divf %14, %15 : vector<2x128xf32>
    %17 = math.tanh %11 : vector<2x128xf32>
    %18 = vector.extract_strided_slice %16 {offsets = [0, 0], sizes = [2, 32], strides = [1, 1]} : vector<2x128xf32> to vector<2x32xf32>
    %19 = vector.extract_strided_slice %16 {offsets = [0, 32], sizes = [2, 32], strides = [1, 1]} : vector<2x128xf32> to vector<2x32xf32>
    %20 = vector.extract_strided_slice %17 {offsets = [0, 64], sizes = [2, 32], strides = [1, 1]} : vector<2x128xf32> to vector<2x32xf32>
    %21 = vector.extract_strided_slice %16 {offsets = [0, 96], sizes = [2, 32], strides = [1, 1]} : vector<2x128xf32> to vector<2x32xf32>
    %22 = arith.mulf %19, %6 : vector<2x32xf32>
    %23 = arith.mulf %18, %20 : vector<2x32xf32>
    %24 = arith.addf %22, %23 : vector<2x32xf32>
    %25 = math.tanh %24 : vector<2x32xf32>
    %26 = arith.mulf %21, %25 : vector<2x32xf32>
    %27 = tpu.concatenate %26, %6 in 1 : vector<2x32xf32>, vector<2x32xf32> -> vector<2x64xf32>
    %cst_11 = arith.constant dense<0.000000e+00> : vector<2x128xf32>
    %28 = tpu.matmul %27, %4, %cst_11 {dimension_numbers = #tpu.dot_dimension_numbers<[1], [0], [0], [1], [0, 0, 1, 1], [], []>} : vector<2x64xf32>, vector<64x128xf32>, vector<2x128xf32> -> vector<2x128xf32>
    %29 = vector.broadcast %5 : vector<1x128xf32> to vector<2x128xf32>
    %30 = arith.addf %28, %29 : vector<2x128xf32>
    %31 = arith.negf %30 : vector<2x128xf32>
    %32 = math.exp %31 : vector<2x128xf32>
    %cst_12 = arith.constant 1.000000e+00 : f32
    %33 = vector.broadcast %cst_12 : f32 to vector<2x128xf32>
    %34 = arith.addf %33, %32 : vector<2x128xf32>
    %35 = arith.divf %33, %34 : vector<2x128xf32>
    %36 = math.tanh %30 : vector<2x128xf32>
    %37 = vector.extract_strided_slice %35 {offsets = [0, 0], sizes = [2, 32], strides = [1, 1]} : vector<2x128xf32> to vector<2x32xf32>
    %38 = vector.extract_strided_slice %35 {offsets = [0, 32], sizes = [2, 32], strides = [1, 1]} : vector<2x128xf32> to vector<2x32xf32>
    %39 = vector.extract_strided_slice %36 {offsets = [0, 64], sizes = [2, 32], strides = [1, 1]} : vector<2x128xf32> to vector<2x32xf32>
    %40 = vector.extract_strided_slice %35 {offsets = [0, 96], sizes = [2, 32], strides = [1, 1]} : vector<2x128xf32> to vector<2x32xf32>
    %41 = arith.mulf %38, %6 : vector<2x32xf32>
    %42 = arith.mulf %37, %39 : vector<2x32xf32>
    %43 = arith.addf %41, %42 : vector<2x32xf32>
    %44 = math.tanh %43 : vector<2x32xf32>
    %45 = arith.mulf %40, %44 : vector<2x32xf32>
    %c2 = arith.constant 2 : index
    %c0_13 = arith.constant 0 : index
    %46 = vector.load %arg1[%c2, %c0_13] : memref<16x32xf32, #tpu.memory_space<vmem>>, vector<2x32xf32>
    %47 = tpu.concatenate %46, %26 in 1 : vector<2x32xf32>, vector<2x32xf32> -> vector<2x64xf32>
    %cst_14 = arith.constant dense<0.000000e+00> : vector<2x128xf32>
    %48 = tpu.matmul %47, %0, %cst_14 {dimension_numbers = #tpu.dot_dimension_numbers<[1], [0], [0], [1], [0, 0, 1, 1], [], []>} : vector<2x64xf32>, vector<64x128xf32>, vector<2x128xf32> -> vector<2x128xf32>
    %49 = vector.broadcast %2 : vector<1x128xf32> to vector<2x128xf32>
    %50 = arith.addf %48, %49 : vector<2x128xf32>
    %51 = arith.negf %50 : vector<2x128xf32>
    %52 = math.exp %51 : vector<2x128xf32>
    %cst_15 = arith.constant 1.000000e+00 : f32
    %53 = vector.broadcast %cst_15 : f32 to vector<2x128xf32>
    %54 = arith.addf %53, %52 : vector<2x128xf32>
    %55 = arith.divf %53, %54 : vector<2x128xf32>
    %56 = math.tanh %50 : vector<2x128xf32>
    %57 = vector.extract_strided_slice %55 {offsets = [0, 0], sizes = [2, 32], strides = [1, 1]} : vector<2x128xf32> to vector<2x32xf32>
    %58 = vector.extract_strided_slice %55 {offsets = [0, 32], sizes = [2, 32], strides = [1, 1]} : vector<2x128xf32> to vector<2x32xf32>
    %59 = vector.extract_strided_slice %56 {offsets = [0, 64], sizes = [2, 32], strides = [1, 1]} : vector<2x128xf32> to vector<2x32xf32>
    %60 = vector.extract_strided_slice %55 {offsets = [0, 96], sizes = [2, 32], strides = [1, 1]} : vector<2x128xf32> to vector<2x32xf32>
    %61 = arith.mulf %58, %24 : vector<2x32xf32>
    %62 = arith.mulf %57, %59 : vector<2x32xf32>
    %63 = arith.addf %61, %62 : vector<2x32xf32>
    %64 = math.tanh %63 : vector<2x32xf32>
    %65 = arith.mulf %60, %64 : vector<2x32xf32>
    %66 = tpu.concatenate %65, %45 in 1 : vector<2x32xf32>, vector<2x32xf32> -> vector<2x64xf32>
    %cst_16 = arith.constant dense<0.000000e+00> : vector<2x128xf32>
    %67 = tpu.matmul %66, %4, %cst_16 {dimension_numbers = #tpu.dot_dimension_numbers<[1], [0], [0], [1], [0, 0, 1, 1], [], []>} : vector<2x64xf32>, vector<64x128xf32>, vector<2x128xf32> -> vector<2x128xf32>
    %68 = vector.broadcast %5 : vector<1x128xf32> to vector<2x128xf32>
    %69 = arith.addf %67, %68 : vector<2x128xf32>
    %70 = arith.negf %69 : vector<2x128xf32>
    %71 = math.exp %70 : vector<2x128xf32>
    %cst_17 = arith.constant 1.000000e+00 : f32
    %72 = vector.broadcast %cst_17 : f32 to vector<2x128xf32>
    %73 = arith.addf %72, %71 : vector<2x128xf32>
    %74 = arith.divf %72, %73 : vector<2x128xf32>
    %75 = math.tanh %69 : vector<2x128xf32>
    %76 = vector.extract_strided_slice %74 {offsets = [0, 0], sizes = [2, 32], strides = [1, 1]} : vector<2x128xf32> to vector<2x32xf32>
    %77 = vector.extract_strided_slice %74 {offsets = [0, 32], sizes = [2, 32], strides = [1, 1]} : vector<2x128xf32> to vector<2x32xf32>
    %78 = vector.extract_strided_slice %75 {offsets = [0, 64], sizes = [2, 32], strides = [1, 1]} : vector<2x128xf32> to vector<2x32xf32>
    %79 = vector.extract_strided_slice %74 {offsets = [0, 96], sizes = [2, 32], strides = [1, 1]} : vector<2x128xf32> to vector<2x32xf32>
    %80 = arith.mulf %77, %43 : vector<2x32xf32>
    %81 = arith.mulf %76, %78 : vector<2x32xf32>
    %82 = arith.addf %80, %81 : vector<2x32xf32>
    %83 = math.tanh %82 : vector<2x32xf32>
    %84 = arith.mulf %79, %83 : vector<2x32xf32>
    %c4 = arith.constant 4 : index
    %c0_18 = arith.constant 0 : index
    %85 = vector.load %arg1[%c4, %c0_18] : memref<16x32xf32, #tpu.memory_space<vmem>>, vector<2x32xf32>
    %86 = tpu.concatenate %85, %65 in 1 : vector<2x32xf32>, vector<2x32xf32> -> vector<2x64xf32>
    %cst_19 = arith.constant dense<0.000000e+00> : vector<2x128xf32>
    %87 = tpu.matmul %86, %0, %cst_19 {dimension_numbers = #tpu.dot_dimension_numbers<[1], [0], [0], [1], [0, 0, 1, 1], [], []>} : vector<2x64xf32>, vector<64x128xf32>, vector<2x128xf32> -> vector<2x128xf32>
    %88 = vector.broadcast %2 : vector<1x128xf32> to vector<2x128xf32>
    %89 = arith.addf %87, %88 : vector<2x128xf32>
    %90 = arith.negf %89 : vector<2x128xf32>
    %91 = math.exp %90 : vector<2x128xf32>
    %cst_20 = arith.constant 1.000000e+00 : f32
    %92 = vector.broadcast %cst_20 : f32 to vector<2x128xf32>
    %93 = arith.addf %92, %91 : vector<2x128xf32>
    %94 = arith.divf %92, %93 : vector<2x128xf32>
    %95 = math.tanh %89 : vector<2x128xf32>
    %96 = vector.extract_strided_slice %94 {offsets = [0, 0], sizes = [2, 32], strides = [1, 1]} : vector<2x128xf32> to vector<2x32xf32>
    %97 = vector.extract_strided_slice %94 {offsets = [0, 32], sizes = [2, 32], strides = [1, 1]} : vector<2x128xf32> to vector<2x32xf32>
    %98 = vector.extract_strided_slice %95 {offsets = [0, 64], sizes = [2, 32], strides = [1, 1]} : vector<2x128xf32> to vector<2x32xf32>
    %99 = vector.extract_strided_slice %94 {offsets = [0, 96], sizes = [2, 32], strides = [1, 1]} : vector<2x128xf32> to vector<2x32xf32>
    %100 = arith.mulf %97, %63 : vector<2x32xf32>
    %101 = arith.mulf %96, %98 : vector<2x32xf32>
    %102 = arith.addf %100, %101 : vector<2x32xf32>
    %103 = math.tanh %102 : vector<2x32xf32>
    %104 = arith.mulf %99, %103 : vector<2x32xf32>
    %105 = tpu.concatenate %104, %84 in 1 : vector<2x32xf32>, vector<2x32xf32> -> vector<2x64xf32>
    %cst_21 = arith.constant dense<0.000000e+00> : vector<2x128xf32>
    %106 = tpu.matmul %105, %4, %cst_21 {dimension_numbers = #tpu.dot_dimension_numbers<[1], [0], [0], [1], [0, 0, 1, 1], [], []>} : vector<2x64xf32>, vector<64x128xf32>, vector<2x128xf32> -> vector<2x128xf32>
    %107 = vector.broadcast %5 : vector<1x128xf32> to vector<2x128xf32>
    %108 = arith.addf %106, %107 : vector<2x128xf32>
    %109 = arith.negf %108 : vector<2x128xf32>
    %110 = math.exp %109 : vector<2x128xf32>
    %cst_22 = arith.constant 1.000000e+00 : f32
    %111 = vector.broadcast %cst_22 : f32 to vector<2x128xf32>
    %112 = arith.addf %111, %110 : vector<2x128xf32>
    %113 = arith.divf %111, %112 : vector<2x128xf32>
    %114 = math.tanh %108 : vector<2x128xf32>
    %115 = vector.extract_strided_slice %113 {offsets = [0, 0], sizes = [2, 32], strides = [1, 1]} : vector<2x128xf32> to vector<2x32xf32>
    %116 = vector.extract_strided_slice %113 {offsets = [0, 32], sizes = [2, 32], strides = [1, 1]} : vector<2x128xf32> to vector<2x32xf32>
    %117 = vector.extract_strided_slice %114 {offsets = [0, 64], sizes = [2, 32], strides = [1, 1]} : vector<2x128xf32> to vector<2x32xf32>
    %118 = vector.extract_strided_slice %113 {offsets = [0, 96], sizes = [2, 32], strides = [1, 1]} : vector<2x128xf32> to vector<2x32xf32>
    %119 = arith.mulf %116, %82 : vector<2x32xf32>
    %120 = arith.mulf %115, %117 : vector<2x32xf32>
    %121 = arith.addf %119, %120 : vector<2x32xf32>
    %122 = math.tanh %121 : vector<2x32xf32>
    %123 = arith.mulf %118, %122 : vector<2x32xf32>
    %c6 = arith.constant 6 : index
    %c0_23 = arith.constant 0 : index
    %124 = vector.load %arg1[%c6, %c0_23] : memref<16x32xf32, #tpu.memory_space<vmem>>, vector<2x32xf32>
    %125 = tpu.concatenate %124, %104 in 1 : vector<2x32xf32>, vector<2x32xf32> -> vector<2x64xf32>
    %cst_24 = arith.constant dense<0.000000e+00> : vector<2x128xf32>
    %126 = tpu.matmul %125, %0, %cst_24 {dimension_numbers = #tpu.dot_dimension_numbers<[1], [0], [0], [1], [0, 0, 1, 1], [], []>} : vector<2x64xf32>, vector<64x128xf32>, vector<2x128xf32> -> vector<2x128xf32>
    %127 = vector.broadcast %2 : vector<1x128xf32> to vector<2x128xf32>
    %128 = arith.addf %126, %127 : vector<2x128xf32>
    %129 = arith.negf %128 : vector<2x128xf32>
    %130 = math.exp %129 : vector<2x128xf32>
    %cst_25 = arith.constant 1.000000e+00 : f32
    %131 = vector.broadcast %cst_25 : f32 to vector<2x128xf32>
    %132 = arith.addf %131, %130 : vector<2x128xf32>
    %133 = arith.divf %131, %132 : vector<2x128xf32>
    %134 = math.tanh %128 : vector<2x128xf32>
    %135 = vector.extract_strided_slice %133 {offsets = [0, 0], sizes = [2, 32], strides = [1, 1]} : vector<2x128xf32> to vector<2x32xf32>
    %136 = vector.extract_strided_slice %133 {offsets = [0, 32], sizes = [2, 32], strides = [1, 1]} : vector<2x128xf32> to vector<2x32xf32>
    %137 = vector.extract_strided_slice %134 {offsets = [0, 64], sizes = [2, 32], strides = [1, 1]} : vector<2x128xf32> to vector<2x32xf32>
    %138 = vector.extract_strided_slice %133 {offsets = [0, 96], sizes = [2, 32], strides = [1, 1]} : vector<2x128xf32> to vector<2x32xf32>
    %139 = arith.mulf %136, %102 : vector<2x32xf32>
    %140 = arith.mulf %135, %137 : vector<2x32xf32>
    %141 = arith.addf %139, %140 : vector<2x32xf32>
    %142 = math.tanh %141 : vector<2x32xf32>
    %143 = arith.mulf %138, %142 : vector<2x32xf32>
    %144 = tpu.concatenate %143, %123 in 1 : vector<2x32xf32>, vector<2x32xf32> -> vector<2x64xf32>
    %cst_26 = arith.constant dense<0.000000e+00> : vector<2x128xf32>
    %145 = tpu.matmul %144, %4, %cst_26 {dimension_numbers = #tpu.dot_dimension_numbers<[1], [0], [0], [1], [0, 0, 1, 1], [], []>} : vector<2x64xf32>, vector<64x128xf32>, vector<2x128xf32> -> vector<2x128xf32>
    %146 = vector.broadcast %5 : vector<1x128xf32> to vector<2x128xf32>
    %147 = arith.addf %145, %146 : vector<2x128xf32>
    %148 = arith.negf %147 : vector<2x128xf32>
    %149 = math.exp %148 : vector<2x128xf32>
    %cst_27 = arith.constant 1.000000e+00 : f32
    %150 = vector.broadcast %cst_27 : f32 to vector<2x128xf32>
    %151 = arith.addf %150, %149 : vector<2x128xf32>
    %152 = arith.divf %150, %151 : vector<2x128xf32>
    %153 = math.tanh %147 : vector<2x128xf32>
    %154 = vector.extract_strided_slice %152 {offsets = [0, 0], sizes = [2, 32], strides = [1, 1]} : vector<2x128xf32> to vector<2x32xf32>
    %155 = vector.extract_strided_slice %152 {offsets = [0, 32], sizes = [2, 32], strides = [1, 1]} : vector<2x128xf32> to vector<2x32xf32>
    %156 = vector.extract_strided_slice %153 {offsets = [0, 64], sizes = [2, 32], strides = [1, 1]} : vector<2x128xf32> to vector<2x32xf32>
    %157 = vector.extract_strided_slice %152 {offsets = [0, 96], sizes = [2, 32], strides = [1, 1]} : vector<2x128xf32> to vector<2x32xf32>
    %158 = arith.mulf %155, %121 : vector<2x32xf32>
    %159 = arith.mulf %154, %156 : vector<2x32xf32>
    %160 = arith.addf %158, %159 : vector<2x32xf32>
    %161 = math.tanh %160 : vector<2x32xf32>
    %162 = arith.mulf %157, %161 : vector<2x32xf32>
    %c8 = arith.constant 8 : index
    %c0_28 = arith.constant 0 : index
    %163 = vector.load %arg1[%c8, %c0_28] : memref<16x32xf32, #tpu.memory_space<vmem>>, vector<2x32xf32>
    %164 = tpu.concatenate %163, %143 in 1 : vector<2x32xf32>, vector<2x32xf32> -> vector<2x64xf32>
    %cst_29 = arith.constant dense<0.000000e+00> : vector<2x128xf32>
    %165 = tpu.matmul %164, %0, %cst_29 {dimension_numbers = #tpu.dot_dimension_numbers<[1], [0], [0], [1], [0, 0, 1, 1], [], []>} : vector<2x64xf32>, vector<64x128xf32>, vector<2x128xf32> -> vector<2x128xf32>
    %166 = vector.broadcast %2 : vector<1x128xf32> to vector<2x128xf32>
    %167 = arith.addf %165, %166 : vector<2x128xf32>
    %168 = arith.negf %167 : vector<2x128xf32>
    %169 = math.exp %168 : vector<2x128xf32>
    %cst_30 = arith.constant 1.000000e+00 : f32
    %170 = vector.broadcast %cst_30 : f32 to vector<2x128xf32>
    %171 = arith.addf %170, %169 : vector<2x128xf32>
    %172 = arith.divf %170, %171 : vector<2x128xf32>
    %173 = math.tanh %167 : vector<2x128xf32>
    %174 = vector.extract_strided_slice %172 {offsets = [0, 0], sizes = [2, 32], strides = [1, 1]} : vector<2x128xf32> to vector<2x32xf32>
    %175 = vector.extract_strided_slice %172 {offsets = [0, 32], sizes = [2, 32], strides = [1, 1]} : vector<2x128xf32> to vector<2x32xf32>
    %176 = vector.extract_strided_slice %173 {offsets = [0, 64], sizes = [2, 32], strides = [1, 1]} : vector<2x128xf32> to vector<2x32xf32>
    %177 = vector.extract_strided_slice %172 {offsets = [0, 96], sizes = [2, 32], strides = [1, 1]} : vector<2x128xf32> to vector<2x32xf32>
    %178 = arith.mulf %175, %141 : vector<2x32xf32>
    %179 = arith.mulf %174, %176 : vector<2x32xf32>
    %180 = arith.addf %178, %179 : vector<2x32xf32>
    %181 = math.tanh %180 : vector<2x32xf32>
    %182 = arith.mulf %177, %181 : vector<2x32xf32>
    %183 = tpu.concatenate %182, %162 in 1 : vector<2x32xf32>, vector<2x32xf32> -> vector<2x64xf32>
    %cst_31 = arith.constant dense<0.000000e+00> : vector<2x128xf32>
    %184 = tpu.matmul %183, %4, %cst_31 {dimension_numbers = #tpu.dot_dimension_numbers<[1], [0], [0], [1], [0, 0, 1, 1], [], []>} : vector<2x64xf32>, vector<64x128xf32>, vector<2x128xf32> -> vector<2x128xf32>
    %185 = vector.broadcast %5 : vector<1x128xf32> to vector<2x128xf32>
    %186 = arith.addf %184, %185 : vector<2x128xf32>
    %187 = arith.negf %186 : vector<2x128xf32>
    %188 = math.exp %187 : vector<2x128xf32>
    %cst_32 = arith.constant 1.000000e+00 : f32
    %189 = vector.broadcast %cst_32 : f32 to vector<2x128xf32>
    %190 = arith.addf %189, %188 : vector<2x128xf32>
    %191 = arith.divf %189, %190 : vector<2x128xf32>
    %192 = math.tanh %186 : vector<2x128xf32>
    %193 = vector.extract_strided_slice %191 {offsets = [0, 0], sizes = [2, 32], strides = [1, 1]} : vector<2x128xf32> to vector<2x32xf32>
    %194 = vector.extract_strided_slice %191 {offsets = [0, 32], sizes = [2, 32], strides = [1, 1]} : vector<2x128xf32> to vector<2x32xf32>
    %195 = vector.extract_strided_slice %192 {offsets = [0, 64], sizes = [2, 32], strides = [1, 1]} : vector<2x128xf32> to vector<2x32xf32>
    %196 = vector.extract_strided_slice %191 {offsets = [0, 96], sizes = [2, 32], strides = [1, 1]} : vector<2x128xf32> to vector<2x32xf32>
    %197 = arith.mulf %194, %160 : vector<2x32xf32>
    %198 = arith.mulf %193, %195 : vector<2x32xf32>
    %199 = arith.addf %197, %198 : vector<2x32xf32>
    %200 = math.tanh %199 : vector<2x32xf32>
    %201 = arith.mulf %196, %200 : vector<2x32xf32>
    %c10 = arith.constant 10 : index
    %c0_33 = arith.constant 0 : index
    %202 = vector.load %arg1[%c10, %c0_33] : memref<16x32xf32, #tpu.memory_space<vmem>>, vector<2x32xf32>
    %203 = tpu.concatenate %202, %182 in 1 : vector<2x32xf32>, vector<2x32xf32> -> vector<2x64xf32>
    %cst_34 = arith.constant dense<0.000000e+00> : vector<2x128xf32>
    %204 = tpu.matmul %203, %0, %cst_34 {dimension_numbers = #tpu.dot_dimension_numbers<[1], [0], [0], [1], [0, 0, 1, 1], [], []>} : vector<2x64xf32>, vector<64x128xf32>, vector<2x128xf32> -> vector<2x128xf32>
    %205 = vector.broadcast %2 : vector<1x128xf32> to vector<2x128xf32>
    %206 = arith.addf %204, %205 : vector<2x128xf32>
    %207 = arith.negf %206 : vector<2x128xf32>
    %208 = math.exp %207 : vector<2x128xf32>
    %cst_35 = arith.constant 1.000000e+00 : f32
    %209 = vector.broadcast %cst_35 : f32 to vector<2x128xf32>
    %210 = arith.addf %209, %208 : vector<2x128xf32>
    %211 = arith.divf %209, %210 : vector<2x128xf32>
    %212 = math.tanh %206 : vector<2x128xf32>
    %213 = vector.extract_strided_slice %211 {offsets = [0, 0], sizes = [2, 32], strides = [1, 1]} : vector<2x128xf32> to vector<2x32xf32>
    %214 = vector.extract_strided_slice %211 {offsets = [0, 32], sizes = [2, 32], strides = [1, 1]} : vector<2x128xf32> to vector<2x32xf32>
    %215 = vector.extract_strided_slice %212 {offsets = [0, 64], sizes = [2, 32], strides = [1, 1]} : vector<2x128xf32> to vector<2x32xf32>
    %216 = vector.extract_strided_slice %211 {offsets = [0, 96], sizes = [2, 32], strides = [1, 1]} : vector<2x128xf32> to vector<2x32xf32>
    %217 = arith.mulf %214, %180 : vector<2x32xf32>
    %218 = arith.mulf %213, %215 : vector<2x32xf32>
    %219 = arith.addf %217, %218 : vector<2x32xf32>
    %220 = math.tanh %219 : vector<2x32xf32>
    %221 = arith.mulf %216, %220 : vector<2x32xf32>
    %222 = tpu.concatenate %221, %201 in 1 : vector<2x32xf32>, vector<2x32xf32> -> vector<2x64xf32>
    %cst_36 = arith.constant dense<0.000000e+00> : vector<2x128xf32>
    %223 = tpu.matmul %222, %4, %cst_36 {dimension_numbers = #tpu.dot_dimension_numbers<[1], [0], [0], [1], [0, 0, 1, 1], [], []>} : vector<2x64xf32>, vector<64x128xf32>, vector<2x128xf32> -> vector<2x128xf32>
    %224 = vector.broadcast %5 : vector<1x128xf32> to vector<2x128xf32>
    %225 = arith.addf %223, %224 : vector<2x128xf32>
    %226 = arith.negf %225 : vector<2x128xf32>
    %227 = math.exp %226 : vector<2x128xf32>
    %cst_37 = arith.constant 1.000000e+00 : f32
    %228 = vector.broadcast %cst_37 : f32 to vector<2x128xf32>
    %229 = arith.addf %228, %227 : vector<2x128xf32>
    %230 = arith.divf %228, %229 : vector<2x128xf32>
    %231 = math.tanh %225 : vector<2x128xf32>
    %232 = vector.extract_strided_slice %230 {offsets = [0, 0], sizes = [2, 32], strides = [1, 1]} : vector<2x128xf32> to vector<2x32xf32>
    %233 = vector.extract_strided_slice %230 {offsets = [0, 32], sizes = [2, 32], strides = [1, 1]} : vector<2x128xf32> to vector<2x32xf32>
    %234 = vector.extract_strided_slice %231 {offsets = [0, 64], sizes = [2, 32], strides = [1, 1]} : vector<2x128xf32> to vector<2x32xf32>
    %235 = vector.extract_strided_slice %230 {offsets = [0, 96], sizes = [2, 32], strides = [1, 1]} : vector<2x128xf32> to vector<2x32xf32>
    %236 = arith.mulf %233, %199 : vector<2x32xf32>
    %237 = arith.mulf %232, %234 : vector<2x32xf32>
    %238 = arith.addf %236, %237 : vector<2x32xf32>
    %239 = math.tanh %238 : vector<2x32xf32>
    %240 = arith.mulf %235, %239 : vector<2x32xf32>
    %c12 = arith.constant 12 : index
    %c0_38 = arith.constant 0 : index
    %241 = vector.load %arg1[%c12, %c0_38] : memref<16x32xf32, #tpu.memory_space<vmem>>, vector<2x32xf32>
    %242 = tpu.concatenate %241, %221 in 1 : vector<2x32xf32>, vector<2x32xf32> -> vector<2x64xf32>
    %cst_39 = arith.constant dense<0.000000e+00> : vector<2x128xf32>
    %243 = tpu.matmul %242, %0, %cst_39 {dimension_numbers = #tpu.dot_dimension_numbers<[1], [0], [0], [1], [0, 0, 1, 1], [], []>} : vector<2x64xf32>, vector<64x128xf32>, vector<2x128xf32> -> vector<2x128xf32>
    %244 = vector.broadcast %2 : vector<1x128xf32> to vector<2x128xf32>
    %245 = arith.addf %243, %244 : vector<2x128xf32>
    %246 = arith.negf %245 : vector<2x128xf32>
    %247 = math.exp %246 : vector<2x128xf32>
    %cst_40 = arith.constant 1.000000e+00 : f32
    %248 = vector.broadcast %cst_40 : f32 to vector<2x128xf32>
    %249 = arith.addf %248, %247 : vector<2x128xf32>
    %250 = arith.divf %248, %249 : vector<2x128xf32>
    %251 = math.tanh %245 : vector<2x128xf32>
    %252 = vector.extract_strided_slice %250 {offsets = [0, 0], sizes = [2, 32], strides = [1, 1]} : vector<2x128xf32> to vector<2x32xf32>
    %253 = vector.extract_strided_slice %250 {offsets = [0, 32], sizes = [2, 32], strides = [1, 1]} : vector<2x128xf32> to vector<2x32xf32>
    %254 = vector.extract_strided_slice %251 {offsets = [0, 64], sizes = [2, 32], strides = [1, 1]} : vector<2x128xf32> to vector<2x32xf32>
    %255 = vector.extract_strided_slice %250 {offsets = [0, 96], sizes = [2, 32], strides = [1, 1]} : vector<2x128xf32> to vector<2x32xf32>
    %256 = arith.mulf %253, %219 : vector<2x32xf32>
    %257 = arith.mulf %252, %254 : vector<2x32xf32>
    %258 = arith.addf %256, %257 : vector<2x32xf32>
    %259 = math.tanh %258 : vector<2x32xf32>
    %260 = arith.mulf %255, %259 : vector<2x32xf32>
    %261 = tpu.concatenate %260, %240 in 1 : vector<2x32xf32>, vector<2x32xf32> -> vector<2x64xf32>
    %cst_41 = arith.constant dense<0.000000e+00> : vector<2x128xf32>
    %262 = tpu.matmul %261, %4, %cst_41 {dimension_numbers = #tpu.dot_dimension_numbers<[1], [0], [0], [1], [0, 0, 1, 1], [], []>} : vector<2x64xf32>, vector<64x128xf32>, vector<2x128xf32> -> vector<2x128xf32>
    %263 = vector.broadcast %5 : vector<1x128xf32> to vector<2x128xf32>
    %264 = arith.addf %262, %263 : vector<2x128xf32>
    %265 = arith.negf %264 : vector<2x128xf32>
    %266 = math.exp %265 : vector<2x128xf32>
    %cst_42 = arith.constant 1.000000e+00 : f32
    %267 = vector.broadcast %cst_42 : f32 to vector<2x128xf32>
    %268 = arith.addf %267, %266 : vector<2x128xf32>
    %269 = arith.divf %267, %268 : vector<2x128xf32>
    %270 = math.tanh %264 : vector<2x128xf32>
    %271 = vector.extract_strided_slice %269 {offsets = [0, 0], sizes = [2, 32], strides = [1, 1]} : vector<2x128xf32> to vector<2x32xf32>
    %272 = vector.extract_strided_slice %269 {offsets = [0, 32], sizes = [2, 32], strides = [1, 1]} : vector<2x128xf32> to vector<2x32xf32>
    %273 = vector.extract_strided_slice %270 {offsets = [0, 64], sizes = [2, 32], strides = [1, 1]} : vector<2x128xf32> to vector<2x32xf32>
    %274 = vector.extract_strided_slice %269 {offsets = [0, 96], sizes = [2, 32], strides = [1, 1]} : vector<2x128xf32> to vector<2x32xf32>
    %275 = arith.mulf %272, %238 : vector<2x32xf32>
    %276 = arith.mulf %271, %273 : vector<2x32xf32>
    %277 = arith.addf %275, %276 : vector<2x32xf32>
    %278 = math.tanh %277 : vector<2x32xf32>
    %279 = arith.mulf %274, %278 : vector<2x32xf32>
    %c14 = arith.constant 14 : index
    %c0_43 = arith.constant 0 : index
    %280 = vector.load %arg1[%c14, %c0_43] : memref<16x32xf32, #tpu.memory_space<vmem>>, vector<2x32xf32>
    %281 = tpu.concatenate %280, %260 in 1 : vector<2x32xf32>, vector<2x32xf32> -> vector<2x64xf32>
    %cst_44 = arith.constant dense<0.000000e+00> : vector<2x128xf32>
    %282 = tpu.matmul %281, %0, %cst_44 {dimension_numbers = #tpu.dot_dimension_numbers<[1], [0], [0], [1], [0, 0, 1, 1], [], []>} : vector<2x64xf32>, vector<64x128xf32>, vector<2x128xf32> -> vector<2x128xf32>
    %283 = vector.broadcast %2 : vector<1x128xf32> to vector<2x128xf32>
    %284 = arith.addf %282, %283 : vector<2x128xf32>
    %285 = arith.negf %284 : vector<2x128xf32>
    %286 = math.exp %285 : vector<2x128xf32>
    %cst_45 = arith.constant 1.000000e+00 : f32
    %287 = vector.broadcast %cst_45 : f32 to vector<2x128xf32>
    %288 = arith.addf %287, %286 : vector<2x128xf32>
    %289 = arith.divf %287, %288 : vector<2x128xf32>
    %290 = math.tanh %284 : vector<2x128xf32>
    %291 = vector.extract_strided_slice %289 {offsets = [0, 0], sizes = [2, 32], strides = [1, 1]} : vector<2x128xf32> to vector<2x32xf32>
    %292 = vector.extract_strided_slice %289 {offsets = [0, 32], sizes = [2, 32], strides = [1, 1]} : vector<2x128xf32> to vector<2x32xf32>
    %293 = vector.extract_strided_slice %290 {offsets = [0, 64], sizes = [2, 32], strides = [1, 1]} : vector<2x128xf32> to vector<2x32xf32>
    %294 = vector.extract_strided_slice %289 {offsets = [0, 96], sizes = [2, 32], strides = [1, 1]} : vector<2x128xf32> to vector<2x32xf32>
    %295 = arith.mulf %292, %258 : vector<2x32xf32>
    %296 = arith.mulf %291, %293 : vector<2x32xf32>
    %297 = arith.addf %295, %296 : vector<2x32xf32>
    %298 = math.tanh %297 : vector<2x32xf32>
    %299 = arith.mulf %294, %298 : vector<2x32xf32>
    %300 = tpu.concatenate %299, %279 in 1 : vector<2x32xf32>, vector<2x32xf32> -> vector<2x64xf32>
    %cst_46 = arith.constant dense<0.000000e+00> : vector<2x128xf32>
    %301 = tpu.matmul %300, %4, %cst_46 {dimension_numbers = #tpu.dot_dimension_numbers<[1], [0], [0], [1], [0, 0, 1, 1], [], []>} : vector<2x64xf32>, vector<64x128xf32>, vector<2x128xf32> -> vector<2x128xf32>
    %302 = vector.broadcast %5 : vector<1x128xf32> to vector<2x128xf32>
    %303 = arith.addf %301, %302 : vector<2x128xf32>
    %304 = arith.negf %303 : vector<2x128xf32>
    %305 = math.exp %304 : vector<2x128xf32>
    %cst_47 = arith.constant 1.000000e+00 : f32
    %306 = vector.broadcast %cst_47 : f32 to vector<2x128xf32>
    %307 = arith.addf %306, %305 : vector<2x128xf32>
    %308 = arith.divf %306, %307 : vector<2x128xf32>
    %309 = math.tanh %303 : vector<2x128xf32>
    %310 = vector.extract_strided_slice %308 {offsets = [0, 0], sizes = [2, 32], strides = [1, 1]} : vector<2x128xf32> to vector<2x32xf32>
    %311 = vector.extract_strided_slice %308 {offsets = [0, 32], sizes = [2, 32], strides = [1, 1]} : vector<2x128xf32> to vector<2x32xf32>
    %312 = vector.extract_strided_slice %309 {offsets = [0, 64], sizes = [2, 32], strides = [1, 1]} : vector<2x128xf32> to vector<2x32xf32>
    %313 = vector.extract_strided_slice %308 {offsets = [0, 96], sizes = [2, 32], strides = [1, 1]} : vector<2x128xf32> to vector<2x32xf32>
    %314 = arith.mulf %311, %277 : vector<2x32xf32>
    %315 = arith.mulf %310, %312 : vector<2x32xf32>
    %316 = arith.addf %314, %315 : vector<2x32xf32>
    %317 = math.tanh %316 : vector<2x32xf32>
    %318 = arith.mulf %313, %317 : vector<2x32xf32>
    %cst_48 = arith.constant dense<0.000000e+00> : vector<2x128xf32>
    %319 = tpu.matmul %299, %1, %cst_48 {dimension_numbers = #tpu.dot_dimension_numbers<[1], [0], [0], [1], [0, 0, 1, 1], [], []>} : vector<2x32xf32>, vector<32x128xf32>, vector<2x128xf32> -> vector<2x128xf32>
    %320 = vector.broadcast %2 : vector<1x128xf32> to vector<2x128xf32>
    %321 = arith.addf %319, %320 : vector<2x128xf32>
    %322 = arith.negf %321 : vector<2x128xf32>
    %323 = math.exp %322 : vector<2x128xf32>
    %cst_49 = arith.constant 1.000000e+00 : f32
    %324 = vector.broadcast %cst_49 : f32 to vector<2x128xf32>
    %325 = arith.addf %324, %323 : vector<2x128xf32>
    %326 = arith.divf %324, %325 : vector<2x128xf32>
    %327 = math.tanh %321 : vector<2x128xf32>
    %328 = vector.extract_strided_slice %326 {offsets = [0, 0], sizes = [2, 32], strides = [1, 1]} : vector<2x128xf32> to vector<2x32xf32>
    %329 = vector.extract_strided_slice %326 {offsets = [0, 32], sizes = [2, 32], strides = [1, 1]} : vector<2x128xf32> to vector<2x32xf32>
    %330 = vector.extract_strided_slice %327 {offsets = [0, 64], sizes = [2, 32], strides = [1, 1]} : vector<2x128xf32> to vector<2x32xf32>
    %331 = vector.extract_strided_slice %326 {offsets = [0, 96], sizes = [2, 32], strides = [1, 1]} : vector<2x128xf32> to vector<2x32xf32>
    %332 = arith.mulf %329, %297 : vector<2x32xf32>
    %333 = arith.mulf %328, %330 : vector<2x32xf32>
    %334 = arith.addf %332, %333 : vector<2x32xf32>
    %335 = math.tanh %334 : vector<2x32xf32>
    %336 = arith.mulf %331, %335 : vector<2x32xf32>
    %c0_50 = arith.constant 0 : index
    %c0_51 = arith.constant 0 : index
    %337 = vector.load %arg2[%c0_50, %c0_51] : memref<16x32xf32, #tpu.memory_space<vmem>>, vector<2x32xf32>
    %338 = tpu.concatenate %337, %336, %318 in 1 : vector<2x32xf32>, vector<2x32xf32>, vector<2x32xf32> -> vector<2x96xf32>
    %cst_52 = arith.constant dense<0.000000e+00> : vector<2x128xf32>
    %339 = tpu.matmul %338, %3, %cst_52 {dimension_numbers = #tpu.dot_dimension_numbers<[1], [0], [0], [1], [0, 0, 1, 1], [], []>} : vector<2x96xf32>, vector<96x128xf32>, vector<2x128xf32> -> vector<2x128xf32>
    %340 = vector.broadcast %5 : vector<1x128xf32> to vector<2x128xf32>
    %341 = arith.addf %339, %340 : vector<2x128xf32>
    %342 = arith.negf %341 : vector<2x128xf32>
    %343 = math.exp %342 : vector<2x128xf32>
    %cst_53 = arith.constant 1.000000e+00 : f32
    %344 = vector.broadcast %cst_53 : f32 to vector<2x128xf32>
    %345 = arith.addf %344, %343 : vector<2x128xf32>
    %346 = arith.divf %344, %345 : vector<2x128xf32>
    %347 = math.tanh %341 : vector<2x128xf32>
    %348 = vector.extract_strided_slice %346 {offsets = [0, 0], sizes = [2, 32], strides = [1, 1]} : vector<2x128xf32> to vector<2x32xf32>
    %349 = vector.extract_strided_slice %346 {offsets = [0, 32], sizes = [2, 32], strides = [1, 1]} : vector<2x128xf32> to vector<2x32xf32>
    %350 = vector.extract_strided_slice %347 {offsets = [0, 64], sizes = [2, 32], strides = [1, 1]} : vector<2x128xf32> to vector<2x32xf32>
    %351 = vector.extract_strided_slice %346 {offsets = [0, 96], sizes = [2, 32], strides = [1, 1]} : vector<2x128xf32> to vector<2x32xf32>
    %352 = arith.mulf %349, %316 : vector<2x32xf32>
    %353 = arith.mulf %348, %350 : vector<2x32xf32>
    %354 = arith.addf %352, %353 : vector<2x32xf32>
    %355 = math.tanh %354 : vector<2x32xf32>
    %356 = arith.mulf %351, %355 : vector<2x32xf32>
    %cst_54 = arith.constant dense<0.000000e+00> : vector<2x128xf32>
    %357 = tpu.matmul %336, %1, %cst_54 {dimension_numbers = #tpu.dot_dimension_numbers<[1], [0], [0], [1], [0, 0, 1, 1], [], []>} : vector<2x32xf32>, vector<32x128xf32>, vector<2x128xf32> -> vector<2x128xf32>
    %358 = vector.broadcast %2 : vector<1x128xf32> to vector<2x128xf32>
    %359 = arith.addf %357, %358 : vector<2x128xf32>
    %360 = arith.negf %359 : vector<2x128xf32>
    %361 = math.exp %360 : vector<2x128xf32>
    %cst_55 = arith.constant 1.000000e+00 : f32
    %362 = vector.broadcast %cst_55 : f32 to vector<2x128xf32>
    %363 = arith.addf %362, %361 : vector<2x128xf32>
    %364 = arith.divf %362, %363 : vector<2x128xf32>
    %365 = math.tanh %359 : vector<2x128xf32>
    %366 = vector.extract_strided_slice %364 {offsets = [0, 0], sizes = [2, 32], strides = [1, 1]} : vector<2x128xf32> to vector<2x32xf32>
    %367 = vector.extract_strided_slice %364 {offsets = [0, 32], sizes = [2, 32], strides = [1, 1]} : vector<2x128xf32> to vector<2x32xf32>
    %368 = vector.extract_strided_slice %365 {offsets = [0, 64], sizes = [2, 32], strides = [1, 1]} : vector<2x128xf32> to vector<2x32xf32>
    %369 = vector.extract_strided_slice %364 {offsets = [0, 96], sizes = [2, 32], strides = [1, 1]} : vector<2x128xf32> to vector<2x32xf32>
    %370 = arith.mulf %367, %334 : vector<2x32xf32>
    %371 = arith.mulf %366, %368 : vector<2x32xf32>
    %372 = arith.addf %370, %371 : vector<2x32xf32>
    %373 = math.tanh %372 : vector<2x32xf32>
    %374 = arith.mulf %369, %373 : vector<2x32xf32>
    %c2_56 = arith.constant 2 : index
    %c0_57 = arith.constant 0 : index
    %375 = vector.load %arg2[%c2_56, %c0_57] : memref<16x32xf32, #tpu.memory_space<vmem>>, vector<2x32xf32>
    %376 = tpu.concatenate %375, %374, %356 in 1 : vector<2x32xf32>, vector<2x32xf32>, vector<2x32xf32> -> vector<2x96xf32>
    %cst_58 = arith.constant dense<0.000000e+00> : vector<2x128xf32>
    %377 = tpu.matmul %376, %3, %cst_58 {dimension_numbers = #tpu.dot_dimension_numbers<[1], [0], [0], [1], [0, 0, 1, 1], [], []>} : vector<2x96xf32>, vector<96x128xf32>, vector<2x128xf32> -> vector<2x128xf32>
    %378 = vector.broadcast %5 : vector<1x128xf32> to vector<2x128xf32>
    %379 = arith.addf %377, %378 : vector<2x128xf32>
    %380 = arith.negf %379 : vector<2x128xf32>
    %381 = math.exp %380 : vector<2x128xf32>
    %cst_59 = arith.constant 1.000000e+00 : f32
    %382 = vector.broadcast %cst_59 : f32 to vector<2x128xf32>
    %383 = arith.addf %382, %381 : vector<2x128xf32>
    %384 = arith.divf %382, %383 : vector<2x128xf32>
    %385 = math.tanh %379 : vector<2x128xf32>
    %386 = vector.extract_strided_slice %384 {offsets = [0, 0], sizes = [2, 32], strides = [1, 1]} : vector<2x128xf32> to vector<2x32xf32>
    %387 = vector.extract_strided_slice %384 {offsets = [0, 32], sizes = [2, 32], strides = [1, 1]} : vector<2x128xf32> to vector<2x32xf32>
    %388 = vector.extract_strided_slice %385 {offsets = [0, 64], sizes = [2, 32], strides = [1, 1]} : vector<2x128xf32> to vector<2x32xf32>
    %389 = vector.extract_strided_slice %384 {offsets = [0, 96], sizes = [2, 32], strides = [1, 1]} : vector<2x128xf32> to vector<2x32xf32>
    %390 = arith.mulf %387, %354 : vector<2x32xf32>
    %391 = arith.mulf %386, %388 : vector<2x32xf32>
    %392 = arith.addf %390, %391 : vector<2x32xf32>
    %393 = math.tanh %392 : vector<2x32xf32>
    %394 = arith.mulf %389, %393 : vector<2x32xf32>
    %cst_60 = arith.constant dense<0.000000e+00> : vector<2x128xf32>
    %395 = tpu.matmul %374, %1, %cst_60 {dimension_numbers = #tpu.dot_dimension_numbers<[1], [0], [0], [1], [0, 0, 1, 1], [], []>} : vector<2x32xf32>, vector<32x128xf32>, vector<2x128xf32> -> vector<2x128xf32>
    %396 = vector.broadcast %2 : vector<1x128xf32> to vector<2x128xf32>
    %397 = arith.addf %395, %396 : vector<2x128xf32>
    %398 = arith.negf %397 : vector<2x128xf32>
    %399 = math.exp %398 : vector<2x128xf32>
    %cst_61 = arith.constant 1.000000e+00 : f32
    %400 = vector.broadcast %cst_61 : f32 to vector<2x128xf32>
    %401 = arith.addf %400, %399 : vector<2x128xf32>
    %402 = arith.divf %400, %401 : vector<2x128xf32>
    %403 = math.tanh %397 : vector<2x128xf32>
    %404 = vector.extract_strided_slice %402 {offsets = [0, 0], sizes = [2, 32], strides = [1, 1]} : vector<2x128xf32> to vector<2x32xf32>
    %405 = vector.extract_strided_slice %402 {offsets = [0, 32], sizes = [2, 32], strides = [1, 1]} : vector<2x128xf32> to vector<2x32xf32>
    %406 = vector.extract_strided_slice %403 {offsets = [0, 64], sizes = [2, 32], strides = [1, 1]} : vector<2x128xf32> to vector<2x32xf32>
    %407 = vector.extract_strided_slice %402 {offsets = [0, 96], sizes = [2, 32], strides = [1, 1]} : vector<2x128xf32> to vector<2x32xf32>
    %408 = arith.mulf %405, %372 : vector<2x32xf32>
    %409 = arith.mulf %404, %406 : vector<2x32xf32>
    %410 = arith.addf %408, %409 : vector<2x32xf32>
    %411 = math.tanh %410 : vector<2x32xf32>
    %412 = arith.mulf %407, %411 : vector<2x32xf32>
    %c4_62 = arith.constant 4 : index
    %c0_63 = arith.constant 0 : index
    %413 = vector.load %arg2[%c4_62, %c0_63] : memref<16x32xf32, #tpu.memory_space<vmem>>, vector<2x32xf32>
    %414 = tpu.concatenate %413, %412, %394 in 1 : vector<2x32xf32>, vector<2x32xf32>, vector<2x32xf32> -> vector<2x96xf32>
    %cst_64 = arith.constant dense<0.000000e+00> : vector<2x128xf32>
    %415 = tpu.matmul %414, %3, %cst_64 {dimension_numbers = #tpu.dot_dimension_numbers<[1], [0], [0], [1], [0, 0, 1, 1], [], []>} : vector<2x96xf32>, vector<96x128xf32>, vector<2x128xf32> -> vector<2x128xf32>
    %416 = vector.broadcast %5 : vector<1x128xf32> to vector<2x128xf32>
    %417 = arith.addf %415, %416 : vector<2x128xf32>
    %418 = arith.negf %417 : vector<2x128xf32>
    %419 = math.exp %418 : vector<2x128xf32>
    %cst_65 = arith.constant 1.000000e+00 : f32
    %420 = vector.broadcast %cst_65 : f32 to vector<2x128xf32>
    %421 = arith.addf %420, %419 : vector<2x128xf32>
    %422 = arith.divf %420, %421 : vector<2x128xf32>
    %423 = math.tanh %417 : vector<2x128xf32>
    %424 = vector.extract_strided_slice %422 {offsets = [0, 0], sizes = [2, 32], strides = [1, 1]} : vector<2x128xf32> to vector<2x32xf32>
    %425 = vector.extract_strided_slice %422 {offsets = [0, 32], sizes = [2, 32], strides = [1, 1]} : vector<2x128xf32> to vector<2x32xf32>
    %426 = vector.extract_strided_slice %423 {offsets = [0, 64], sizes = [2, 32], strides = [1, 1]} : vector<2x128xf32> to vector<2x32xf32>
    %427 = vector.extract_strided_slice %422 {offsets = [0, 96], sizes = [2, 32], strides = [1, 1]} : vector<2x128xf32> to vector<2x32xf32>
    %428 = arith.mulf %425, %392 : vector<2x32xf32>
    %429 = arith.mulf %424, %426 : vector<2x32xf32>
    %430 = arith.addf %428, %429 : vector<2x32xf32>
    %431 = math.tanh %430 : vector<2x32xf32>
    %432 = arith.mulf %427, %431 : vector<2x32xf32>
    %cst_66 = arith.constant dense<0.000000e+00> : vector<2x128xf32>
    %433 = tpu.matmul %412, %1, %cst_66 {dimension_numbers = #tpu.dot_dimension_numbers<[1], [0], [0], [1], [0, 0, 1, 1], [], []>} : vector<2x32xf32>, vector<32x128xf32>, vector<2x128xf32> -> vector<2x128xf32>
    %434 = vector.broadcast %2 : vector<1x128xf32> to vector<2x128xf32>
    %435 = arith.addf %433, %434 : vector<2x128xf32>
    %436 = arith.negf %435 : vector<2x128xf32>
    %437 = math.exp %436 : vector<2x128xf32>
    %cst_67 = arith.constant 1.000000e+00 : f32
    %438 = vector.broadcast %cst_67 : f32 to vector<2x128xf32>
    %439 = arith.addf %438, %437 : vector<2x128xf32>
    %440 = arith.divf %438, %439 : vector<2x128xf32>
    %441 = math.tanh %435 : vector<2x128xf32>
    %442 = vector.extract_strided_slice %440 {offsets = [0, 0], sizes = [2, 32], strides = [1, 1]} : vector<2x128xf32> to vector<2x32xf32>
    %443 = vector.extract_strided_slice %440 {offsets = [0, 32], sizes = [2, 32], strides = [1, 1]} : vector<2x128xf32> to vector<2x32xf32>
    %444 = vector.extract_strided_slice %441 {offsets = [0, 64], sizes = [2, 32], strides = [1, 1]} : vector<2x128xf32> to vector<2x32xf32>
    %445 = vector.extract_strided_slice %440 {offsets = [0, 96], sizes = [2, 32], strides = [1, 1]} : vector<2x128xf32> to vector<2x32xf32>
    %446 = arith.mulf %443, %410 : vector<2x32xf32>
    %447 = arith.mulf %442, %444 : vector<2x32xf32>
    %448 = arith.addf %446, %447 : vector<2x32xf32>
    %449 = math.tanh %448 : vector<2x32xf32>
    %450 = arith.mulf %445, %449 : vector<2x32xf32>
    %c6_68 = arith.constant 6 : index
    %c0_69 = arith.constant 0 : index
    %451 = vector.load %arg2[%c6_68, %c0_69] : memref<16x32xf32, #tpu.memory_space<vmem>>, vector<2x32xf32>
    %452 = tpu.concatenate %451, %450, %432 in 1 : vector<2x32xf32>, vector<2x32xf32>, vector<2x32xf32> -> vector<2x96xf32>
    %cst_70 = arith.constant dense<0.000000e+00> : vector<2x128xf32>
    %453 = tpu.matmul %452, %3, %cst_70 {dimension_numbers = #tpu.dot_dimension_numbers<[1], [0], [0], [1], [0, 0, 1, 1], [], []>} : vector<2x96xf32>, vector<96x128xf32>, vector<2x128xf32> -> vector<2x128xf32>
    %454 = vector.broadcast %5 : vector<1x128xf32> to vector<2x128xf32>
    %455 = arith.addf %453, %454 : vector<2x128xf32>
    %456 = arith.negf %455 : vector<2x128xf32>
    %457 = math.exp %456 : vector<2x128xf32>
    %cst_71 = arith.constant 1.000000e+00 : f32
    %458 = vector.broadcast %cst_71 : f32 to vector<2x128xf32>
    %459 = arith.addf %458, %457 : vector<2x128xf32>
    %460 = arith.divf %458, %459 : vector<2x128xf32>
    %461 = math.tanh %455 : vector<2x128xf32>
    %462 = vector.extract_strided_slice %460 {offsets = [0, 0], sizes = [2, 32], strides = [1, 1]} : vector<2x128xf32> to vector<2x32xf32>
    %463 = vector.extract_strided_slice %460 {offsets = [0, 32], sizes = [2, 32], strides = [1, 1]} : vector<2x128xf32> to vector<2x32xf32>
    %464 = vector.extract_strided_slice %461 {offsets = [0, 64], sizes = [2, 32], strides = [1, 1]} : vector<2x128xf32> to vector<2x32xf32>
    %465 = vector.extract_strided_slice %460 {offsets = [0, 96], sizes = [2, 32], strides = [1, 1]} : vector<2x128xf32> to vector<2x32xf32>
    %466 = arith.mulf %463, %430 : vector<2x32xf32>
    %467 = arith.mulf %462, %464 : vector<2x32xf32>
    %468 = arith.addf %466, %467 : vector<2x32xf32>
    %469 = math.tanh %468 : vector<2x32xf32>
    %470 = arith.mulf %465, %469 : vector<2x32xf32>
    %cst_72 = arith.constant dense<0.000000e+00> : vector<2x128xf32>
    %471 = tpu.matmul %450, %1, %cst_72 {dimension_numbers = #tpu.dot_dimension_numbers<[1], [0], [0], [1], [0, 0, 1, 1], [], []>} : vector<2x32xf32>, vector<32x128xf32>, vector<2x128xf32> -> vector<2x128xf32>
    %472 = vector.broadcast %2 : vector<1x128xf32> to vector<2x128xf32>
    %473 = arith.addf %471, %472 : vector<2x128xf32>
    %474 = arith.negf %473 : vector<2x128xf32>
    %475 = math.exp %474 : vector<2x128xf32>
    %cst_73 = arith.constant 1.000000e+00 : f32
    %476 = vector.broadcast %cst_73 : f32 to vector<2x128xf32>
    %477 = arith.addf %476, %475 : vector<2x128xf32>
    %478 = arith.divf %476, %477 : vector<2x128xf32>
    %479 = math.tanh %473 : vector<2x128xf32>
    %480 = vector.extract_strided_slice %478 {offsets = [0, 0], sizes = [2, 32], strides = [1, 1]} : vector<2x128xf32> to vector<2x32xf32>
    %481 = vector.extract_strided_slice %478 {offsets = [0, 32], sizes = [2, 32], strides = [1, 1]} : vector<2x128xf32> to vector<2x32xf32>
    %482 = vector.extract_strided_slice %479 {offsets = [0, 64], sizes = [2, 32], strides = [1, 1]} : vector<2x128xf32> to vector<2x32xf32>
    %483 = vector.extract_strided_slice %478 {offsets = [0, 96], sizes = [2, 32], strides = [1, 1]} : vector<2x128xf32> to vector<2x32xf32>
    %484 = arith.mulf %481, %448 : vector<2x32xf32>
    %485 = arith.mulf %480, %482 : vector<2x32xf32>
    %486 = arith.addf %484, %485 : vector<2x32xf32>
    %487 = math.tanh %486 : vector<2x32xf32>
    %488 = arith.mulf %483, %487 : vector<2x32xf32>
    %c8_74 = arith.constant 8 : index
    %c0_75 = arith.constant 0 : index
    %489 = vector.load %arg2[%c8_74, %c0_75] : memref<16x32xf32, #tpu.memory_space<vmem>>, vector<2x32xf32>
    %490 = tpu.concatenate %489, %488, %470 in 1 : vector<2x32xf32>, vector<2x32xf32>, vector<2x32xf32> -> vector<2x96xf32>
    %cst_76 = arith.constant dense<0.000000e+00> : vector<2x128xf32>
    %491 = tpu.matmul %490, %3, %cst_76 {dimension_numbers = #tpu.dot_dimension_numbers<[1], [0], [0], [1], [0, 0, 1, 1], [], []>} : vector<2x96xf32>, vector<96x128xf32>, vector<2x128xf32> -> vector<2x128xf32>
    %492 = vector.broadcast %5 : vector<1x128xf32> to vector<2x128xf32>
    %493 = arith.addf %491, %492 : vector<2x128xf32>
    %494 = arith.negf %493 : vector<2x128xf32>
    %495 = math.exp %494 : vector<2x128xf32>
    %cst_77 = arith.constant 1.000000e+00 : f32
    %496 = vector.broadcast %cst_77 : f32 to vector<2x128xf32>
    %497 = arith.addf %496, %495 : vector<2x128xf32>
    %498 = arith.divf %496, %497 : vector<2x128xf32>
    %499 = math.tanh %493 : vector<2x128xf32>
    %500 = vector.extract_strided_slice %498 {offsets = [0, 0], sizes = [2, 32], strides = [1, 1]} : vector<2x128xf32> to vector<2x32xf32>
    %501 = vector.extract_strided_slice %498 {offsets = [0, 32], sizes = [2, 32], strides = [1, 1]} : vector<2x128xf32> to vector<2x32xf32>
    %502 = vector.extract_strided_slice %499 {offsets = [0, 64], sizes = [2, 32], strides = [1, 1]} : vector<2x128xf32> to vector<2x32xf32>
    %503 = vector.extract_strided_slice %498 {offsets = [0, 96], sizes = [2, 32], strides = [1, 1]} : vector<2x128xf32> to vector<2x32xf32>
    %504 = arith.mulf %501, %468 : vector<2x32xf32>
    %505 = arith.mulf %500, %502 : vector<2x32xf32>
    %506 = arith.addf %504, %505 : vector<2x32xf32>
    %507 = math.tanh %506 : vector<2x32xf32>
    %508 = arith.mulf %503, %507 : vector<2x32xf32>
    %cst_78 = arith.constant dense<0.000000e+00> : vector<2x128xf32>
    %509 = tpu.matmul %488, %1, %cst_78 {dimension_numbers = #tpu.dot_dimension_numbers<[1], [0], [0], [1], [0, 0, 1, 1], [], []>} : vector<2x32xf32>, vector<32x128xf32>, vector<2x128xf32> -> vector<2x128xf32>
    %510 = vector.broadcast %2 : vector<1x128xf32> to vector<2x128xf32>
    %511 = arith.addf %509, %510 : vector<2x128xf32>
    %512 = arith.negf %511 : vector<2x128xf32>
    %513 = math.exp %512 : vector<2x128xf32>
    %cst_79 = arith.constant 1.000000e+00 : f32
    %514 = vector.broadcast %cst_79 : f32 to vector<2x128xf32>
    %515 = arith.addf %514, %513 : vector<2x128xf32>
    %516 = arith.divf %514, %515 : vector<2x128xf32>
    %517 = math.tanh %511 : vector<2x128xf32>
    %518 = vector.extract_strided_slice %516 {offsets = [0, 0], sizes = [2, 32], strides = [1, 1]} : vector<2x128xf32> to vector<2x32xf32>
    %519 = vector.extract_strided_slice %516 {offsets = [0, 32], sizes = [2, 32], strides = [1, 1]} : vector<2x128xf32> to vector<2x32xf32>
    %520 = vector.extract_strided_slice %517 {offsets = [0, 64], sizes = [2, 32], strides = [1, 1]} : vector<2x128xf32> to vector<2x32xf32>
    %521 = vector.extract_strided_slice %516 {offsets = [0, 96], sizes = [2, 32], strides = [1, 1]} : vector<2x128xf32> to vector<2x32xf32>
    %522 = arith.mulf %519, %486 : vector<2x32xf32>
    %523 = arith.mulf %518, %520 : vector<2x32xf32>
    %524 = arith.addf %522, %523 : vector<2x32xf32>
    %525 = math.tanh %524 : vector<2x32xf32>
    %526 = arith.mulf %521, %525 : vector<2x32xf32>
    %c10_80 = arith.constant 10 : index
    %c0_81 = arith.constant 0 : index
    %527 = vector.load %arg2[%c10_80, %c0_81] : memref<16x32xf32, #tpu.memory_space<vmem>>, vector<2x32xf32>
    %528 = tpu.concatenate %527, %526, %508 in 1 : vector<2x32xf32>, vector<2x32xf32>, vector<2x32xf32> -> vector<2x96xf32>
    %cst_82 = arith.constant dense<0.000000e+00> : vector<2x128xf32>
    %529 = tpu.matmul %528, %3, %cst_82 {dimension_numbers = #tpu.dot_dimension_numbers<[1], [0], [0], [1], [0, 0, 1, 1], [], []>} : vector<2x96xf32>, vector<96x128xf32>, vector<2x128xf32> -> vector<2x128xf32>
    %530 = vector.broadcast %5 : vector<1x128xf32> to vector<2x128xf32>
    %531 = arith.addf %529, %530 : vector<2x128xf32>
    %532 = arith.negf %531 : vector<2x128xf32>
    %533 = math.exp %532 : vector<2x128xf32>
    %cst_83 = arith.constant 1.000000e+00 : f32
    %534 = vector.broadcast %cst_83 : f32 to vector<2x128xf32>
    %535 = arith.addf %534, %533 : vector<2x128xf32>
    %536 = arith.divf %534, %535 : vector<2x128xf32>
    %537 = math.tanh %531 : vector<2x128xf32>
    %538 = vector.extract_strided_slice %536 {offsets = [0, 0], sizes = [2, 32], strides = [1, 1]} : vector<2x128xf32> to vector<2x32xf32>
    %539 = vector.extract_strided_slice %536 {offsets = [0, 32], sizes = [2, 32], strides = [1, 1]} : vector<2x128xf32> to vector<2x32xf32>
    %540 = vector.extract_strided_slice %537 {offsets = [0, 64], sizes = [2, 32], strides = [1, 1]} : vector<2x128xf32> to vector<2x32xf32>
    %541 = vector.extract_strided_slice %536 {offsets = [0, 96], sizes = [2, 32], strides = [1, 1]} : vector<2x128xf32> to vector<2x32xf32>
    %542 = arith.mulf %539, %506 : vector<2x32xf32>
    %543 = arith.mulf %538, %540 : vector<2x32xf32>
    %544 = arith.addf %542, %543 : vector<2x32xf32>
    %545 = math.tanh %544 : vector<2x32xf32>
    %546 = arith.mulf %541, %545 : vector<2x32xf32>
    %cst_84 = arith.constant dense<0.000000e+00> : vector<2x128xf32>
    %547 = tpu.matmul %526, %1, %cst_84 {dimension_numbers = #tpu.dot_dimension_numbers<[1], [0], [0], [1], [0, 0, 1, 1], [], []>} : vector<2x32xf32>, vector<32x128xf32>, vector<2x128xf32> -> vector<2x128xf32>
    %548 = vector.broadcast %2 : vector<1x128xf32> to vector<2x128xf32>
    %549 = arith.addf %547, %548 : vector<2x128xf32>
    %550 = arith.negf %549 : vector<2x128xf32>
    %551 = math.exp %550 : vector<2x128xf32>
    %cst_85 = arith.constant 1.000000e+00 : f32
    %552 = vector.broadcast %cst_85 : f32 to vector<2x128xf32>
    %553 = arith.addf %552, %551 : vector<2x128xf32>
    %554 = arith.divf %552, %553 : vector<2x128xf32>
    %555 = math.tanh %549 : vector<2x128xf32>
    %556 = vector.extract_strided_slice %554 {offsets = [0, 0], sizes = [2, 32], strides = [1, 1]} : vector<2x128xf32> to vector<2x32xf32>
    %557 = vector.extract_strided_slice %554 {offsets = [0, 32], sizes = [2, 32], strides = [1, 1]} : vector<2x128xf32> to vector<2x32xf32>
    %558 = vector.extract_strided_slice %555 {offsets = [0, 64], sizes = [2, 32], strides = [1, 1]} : vector<2x128xf32> to vector<2x32xf32>
    %559 = vector.extract_strided_slice %554 {offsets = [0, 96], sizes = [2, 32], strides = [1, 1]} : vector<2x128xf32> to vector<2x32xf32>
    %560 = arith.mulf %557, %524 : vector<2x32xf32>
    %561 = arith.mulf %556, %558 : vector<2x32xf32>
    %562 = arith.addf %560, %561 : vector<2x32xf32>
    %563 = math.tanh %562 : vector<2x32xf32>
    %564 = arith.mulf %559, %563 : vector<2x32xf32>
    %c12_86 = arith.constant 12 : index
    %c0_87 = arith.constant 0 : index
    %565 = vector.load %arg2[%c12_86, %c0_87] : memref<16x32xf32, #tpu.memory_space<vmem>>, vector<2x32xf32>
    %566 = tpu.concatenate %565, %564, %546 in 1 : vector<2x32xf32>, vector<2x32xf32>, vector<2x32xf32> -> vector<2x96xf32>
    %cst_88 = arith.constant dense<0.000000e+00> : vector<2x128xf32>
    %567 = tpu.matmul %566, %3, %cst_88 {dimension_numbers = #tpu.dot_dimension_numbers<[1], [0], [0], [1], [0, 0, 1, 1], [], []>} : vector<2x96xf32>, vector<96x128xf32>, vector<2x128xf32> -> vector<2x128xf32>
    %568 = vector.broadcast %5 : vector<1x128xf32> to vector<2x128xf32>
    %569 = arith.addf %567, %568 : vector<2x128xf32>
    %570 = arith.negf %569 : vector<2x128xf32>
    %571 = math.exp %570 : vector<2x128xf32>
    %cst_89 = arith.constant 1.000000e+00 : f32
    %572 = vector.broadcast %cst_89 : f32 to vector<2x128xf32>
    %573 = arith.addf %572, %571 : vector<2x128xf32>
    %574 = arith.divf %572, %573 : vector<2x128xf32>
    %575 = math.tanh %569 : vector<2x128xf32>
    %576 = vector.extract_strided_slice %574 {offsets = [0, 0], sizes = [2, 32], strides = [1, 1]} : vector<2x128xf32> to vector<2x32xf32>
    %577 = vector.extract_strided_slice %574 {offsets = [0, 32], sizes = [2, 32], strides = [1, 1]} : vector<2x128xf32> to vector<2x32xf32>
    %578 = vector.extract_strided_slice %575 {offsets = [0, 64], sizes = [2, 32], strides = [1, 1]} : vector<2x128xf32> to vector<2x32xf32>
    %579 = vector.extract_strided_slice %574 {offsets = [0, 96], sizes = [2, 32], strides = [1, 1]} : vector<2x128xf32> to vector<2x32xf32>
    %580 = arith.mulf %577, %544 : vector<2x32xf32>
    %581 = arith.mulf %576, %578 : vector<2x32xf32>
    %582 = arith.addf %580, %581 : vector<2x32xf32>
    %583 = math.tanh %582 : vector<2x32xf32>
    %584 = arith.mulf %579, %583 : vector<2x32xf32>
    %cst_90 = arith.constant dense<0.000000e+00> : vector<2x128xf32>
    %585 = tpu.matmul %564, %1, %cst_90 {dimension_numbers = #tpu.dot_dimension_numbers<[1], [0], [0], [1], [0, 0, 1, 1], [], []>} : vector<2x32xf32>, vector<32x128xf32>, vector<2x128xf32> -> vector<2x128xf32>
    %586 = vector.broadcast %2 : vector<1x128xf32> to vector<2x128xf32>
    %587 = arith.addf %585, %586 : vector<2x128xf32>
    %588 = arith.negf %587 : vector<2x128xf32>
    %589 = math.exp %588 : vector<2x128xf32>
    %cst_91 = arith.constant 1.000000e+00 : f32
    %590 = vector.broadcast %cst_91 : f32 to vector<2x128xf32>
    %591 = arith.addf %590, %589 : vector<2x128xf32>
    %592 = arith.divf %590, %591 : vector<2x128xf32>
    %593 = math.tanh %587 : vector<2x128xf32>
    %594 = vector.extract_strided_slice %592 {offsets = [0, 0], sizes = [2, 32], strides = [1, 1]} : vector<2x128xf32> to vector<2x32xf32>
    %595 = vector.extract_strided_slice %592 {offsets = [0, 32], sizes = [2, 32], strides = [1, 1]} : vector<2x128xf32> to vector<2x32xf32>
    %596 = vector.extract_strided_slice %593 {offsets = [0, 64], sizes = [2, 32], strides = [1, 1]} : vector<2x128xf32> to vector<2x32xf32>
    %597 = vector.extract_strided_slice %592 {offsets = [0, 96], sizes = [2, 32], strides = [1, 1]} : vector<2x128xf32> to vector<2x32xf32>
    %598 = arith.mulf %595, %562 : vector<2x32xf32>
    %599 = arith.mulf %594, %596 : vector<2x32xf32>
    %600 = arith.addf %598, %599 : vector<2x32xf32>
    %601 = math.tanh %600 : vector<2x32xf32>
    %602 = arith.mulf %597, %601 : vector<2x32xf32>
    %c14_92 = arith.constant 14 : index
    %c0_93 = arith.constant 0 : index
    %603 = vector.load %arg2[%c14_92, %c0_93] : memref<16x32xf32, #tpu.memory_space<vmem>>, vector<2x32xf32>
    %604 = tpu.concatenate %603, %602, %584 in 1 : vector<2x32xf32>, vector<2x32xf32>, vector<2x32xf32> -> vector<2x96xf32>
    %cst_94 = arith.constant dense<0.000000e+00> : vector<2x128xf32>
    %605 = tpu.matmul %604, %3, %cst_94 {dimension_numbers = #tpu.dot_dimension_numbers<[1], [0], [0], [1], [0, 0, 1, 1], [], []>} : vector<2x96xf32>, vector<96x128xf32>, vector<2x128xf32> -> vector<2x128xf32>
    %606 = vector.broadcast %5 : vector<1x128xf32> to vector<2x128xf32>
    %607 = arith.addf %605, %606 : vector<2x128xf32>
    %608 = arith.negf %607 : vector<2x128xf32>
    %609 = math.exp %608 : vector<2x128xf32>
    %cst_95 = arith.constant 1.000000e+00 : f32
    %610 = vector.broadcast %cst_95 : f32 to vector<2x128xf32>
    %611 = arith.addf %610, %609 : vector<2x128xf32>
    %612 = arith.divf %610, %611 : vector<2x128xf32>
    %613 = math.tanh %607 : vector<2x128xf32>
    %614 = vector.extract_strided_slice %612 {offsets = [0, 0], sizes = [2, 32], strides = [1, 1]} : vector<2x128xf32> to vector<2x32xf32>
    %615 = vector.extract_strided_slice %612 {offsets = [0, 32], sizes = [2, 32], strides = [1, 1]} : vector<2x128xf32> to vector<2x32xf32>
    %616 = vector.extract_strided_slice %613 {offsets = [0, 64], sizes = [2, 32], strides = [1, 1]} : vector<2x128xf32> to vector<2x32xf32>
    %617 = vector.extract_strided_slice %612 {offsets = [0, 96], sizes = [2, 32], strides = [1, 1]} : vector<2x128xf32> to vector<2x32xf32>
    %618 = arith.mulf %615, %582 : vector<2x32xf32>
    %619 = arith.mulf %614, %616 : vector<2x32xf32>
    %620 = arith.addf %618, %619 : vector<2x32xf32>
    %621 = math.tanh %620 : vector<2x32xf32>
    %622 = arith.mulf %617, %621 : vector<2x32xf32>
    %623 = tpu.concatenate %356, %394, %432, %470, %508, %546, %584, %622 in 0 : vector<2x32xf32>, vector<2x32xf32>, vector<2x32xf32>, vector<2x32xf32>, vector<2x32xf32>, vector<2x32xf32>, vector<2x32xf32>, vector<2x32xf32> -> vector<16x32xf32>
    %c0_96 = arith.constant 0 : index
    %c0_97 = arith.constant 0 : index
    %624 = vector.load %arg7[%c0_96, %c0_97] : memref<32x64xf32, #tpu.memory_space<vmem>>, vector<32x64xf32>
    %cst_98 = arith.constant dense<0.000000e+00> : vector<16x64xf32>
    %625 = tpu.matmul %623, %624, %cst_98 {dimension_numbers = #tpu.dot_dimension_numbers<[1], [0], [0], [1], [0, 0, 1, 1], [], []>} : vector<16x32xf32>, vector<32x64xf32>, vector<16x64xf32> -> vector<16x64xf32>
    %c0_99 = arith.constant 0 : index
    %c0_100 = arith.constant 0 : index
    %626 = vector.load %arg8[%c0_99, %c0_100] : memref<1x64xf32, #tpu.memory_space<vmem>>, vector<1x64xf32>
    %627 = vector.broadcast %626 : vector<1x64xf32> to vector<16x64xf32>
    %628 = arith.addf %625, %627 : vector<16x64xf32>
    %c0_101 = arith.constant 0 : index
    %c0_102 = arith.constant 0 : index
    %629 = vector.load %arg9[%c0_101, %c0_102] : memref<16x64xf32, #tpu.memory_space<vmem>>, vector<16x64xf32>
    tpu.vector_store %arg9[%c0_101, %c0_102], %628 {strides = array<i32>} : memref<16x64xf32, #tpu.memory_space<vmem>>, vector<16x64xf32>,
    %c0_103 = arith.constant 0 : index
    %c0_104 = arith.constant 0 : index
    %630 = vector.load %arg10[%c0_103, %c0_104] : memref<2x32xf32, #tpu.memory_space<vmem>>, vector<2x32xf32>
    tpu.vector_store %arg10[%c0_103, %c0_104], %602 {strides = array<i32>} : memref<2x32xf32, #tpu.memory_space<vmem>>, vector<2x32xf32>,
    %c0_105 = arith.constant 0 : index
    %c0_106 = arith.constant 0 : index
    %631 = vector.load %arg11[%c0_105, %c0_106] : memref<2x32xf32, #tpu.memory_space<vmem>>, vector<2x32xf32>
    tpu.vector_store %arg11[%c0_105, %c0_106], %600 {strides = array<i32>} : memref<2x32xf32, #tpu.memory_space<vmem>>, vector<2x32xf32>,
    %c0_107 = arith.constant 0 : index
    %c0_108 = arith.constant 0 : index
    %632 = vector.load %arg12[%c0_107, %c0_108] : memref<2x32xf32, #tpu.memory_space<vmem>>, vector<2x32xf32>
    tpu.vector_store %arg12[%c0_107, %c0_108], %622 {strides = array<i32>} : memref<2x32xf32, #tpu.memory_space<vmem>>, vector<2x32xf32>,
    %c0_109 = arith.constant 0 : index
    %c0_110 = arith.constant 0 : index
    %633 = vector.load %arg13[%c0_109, %c0_110] : memref<2x32xf32, #tpu.memory_space<vmem>>, vector<2x32xf32>
    tpu.vector_store %arg13[%c0_109, %c0_110], %620 {strides = array<i32>} : memref<2x32xf32, #tpu.memory_space<vmem>>, vector<2x32xf32>,
    return
  }
  func.func @transform_0(%arg0: i32) -> (i32, i32) {
    %c0_i32 = arith.constant 0 : i32
    %c0_i32_0 = arith.constant 0 : i32
    %c0_i32_1 = arith.constant 0 : i32
    return %c0_i32, %c0_i32_0 : i32, i32
  }
  func.func @transform_1(%arg0: i32) -> (i32, i32) {
    %c0_i32 = arith.constant 0 : i32
    %c0_i32_0 = arith.constant 0 : i32
    %c0_i32_1 = arith.constant 0 : i32
    return %c0_i32, %c0_i32_0 : i32, i32
  }
  func.func @transform_2(%arg0: i32) -> (i32, i32) {
    %c0_i32 = arith.constant 0 : i32
    %c0_i32_0 = arith.constant 0 : i32
    %c0_i32_1 = arith.constant 0 : i32
    return %c0_i32, %c0_i32_0 : i32, i32
  }
  func.func @transform_3(%arg0: i32) -> (i32, i32) {
    %c0_i32 = arith.constant 0 : i32
    %c0_i32_0 = arith.constant 0 : i32
    %c0_i32_1 = arith.constant 0 : i32
    return %c0_i32, %c0_i32_0 : i32, i32
  }
  func.func @transform_4(%arg0: i32) -> (i32, i32) {
    %c0_i32 = arith.constant 0 : i32
    %c0_i32_0 = arith.constant 0 : i32
    %c0_i32_1 = arith.constant 0 : i32
    return %c0_i32, %c0_i32_0 : i32, i32
  }
  func.func @transform_5(%arg0: i32) -> (i32, i32) {
    %c0_i32 = arith.constant 0 : i32
    %c0_i32_0 = arith.constant 0 : i32
    %c0_i32_1 = arith.constant 0 : i32
    return %c0_i32, %c0_i32_0 : i32, i32
  }
  func.func @transform_6(%arg0: i32) -> (i32, i32) {
    %c0_i32 = arith.constant 0 : i32
    %c0_i32_0 = arith.constant 0 : i32
    %c0_i32_1 = arith.constant 0 : i32
    return %c0_i32, %c0_i32_0 : i32, i32
  }
  func.func @transform_7(%arg0: i32) -> (i32, i32) {
    %c0_i32 = arith.constant 0 : i32
    %c0_i32_0 = arith.constant 0 : i32
    %c0_i32_1 = arith.constant 0 : i32
    return %c0_i32, %c0_i32_0 : i32, i32
  }
  func.func @transform_8(%arg0: i32) -> (i32, i32) {
    %c0_i32 = arith.constant 0 : i32
    %c0_i32_0 = arith.constant 0 : i32
    %c0_i32_1 = arith.constant 0 : i32
    return %c0_i32, %c0_i32_0 : i32, i32
  }
  func.func @transform_9(%arg0: i32) -> (i32, i32) {
    %c0_i32 = arith.constant 0 : i32
    %c0_i32_0 = arith.constant 0 : i32
    %c0_i32_1 = arith.constant 0 : i32
    return %c0_i32, %c0_i32_0 : i32, i32
  }
  func.func @transform_10(%arg0: i32) -> (i32, i32) {
    %c0_i32 = arith.constant 0 : i32
    %c0_i32_0 = arith.constant 0 : i32
    %c0_i32_1 = arith.constant 0 : i32
    return %c0_i32, %c0_i32_0 : i32, i32
  }
  func.func @transform_11(%arg0: i32) -> (i32, i32) {
    %c0_i32 = arith.constant 0 : i32
    %c0_i32_0 = arith.constant 0 : i32
    %c0_i32_1 = arith.constant 0 : i32
    return %c0_i32, %c0_i32_0 : i32, i32
  }
  func.func @transform_12(%arg0: i32) -> (i32, i32) {
    %c0_i32 = arith.constant 0 : i32
    %c0_i32_0 = arith.constant 0 : i32
    %c0_i32_1 = arith.constant 0 : i32
    return %c0_i32, %c0_i32_0 : i32, i32
  }
}

</mosaic_0001>

<llo_original>
// kernel: new_seq2seq_forward.1
$region0: #{new_seq2seq_forward.1}
  #allocation0 [shape = 'u32[]', space=smem, size = 0x4, offset = 0x4, fixed_abs, tag = 'smem constant byte address 0x4 - core index']
  #allocation1 [shape = 'u32[144,128]{1,0:T(1,128)}', space=vmem, size = 0x12000, scoped, tag = 'internal scratch']
  %s0 = inlined_call_operand.vmem [shape: f32[16,32], index: 0, kind: input, shape index: {}]
  %s1 = inlined_call_operand.vmem [shape: f32[16,32], index: 1, kind: input, shape index: {}]
  %s2 = inlined_call_operand.vmem [shape: f32[64,128], index: 2, kind: input, shape index: {}]
  %s3 = inlined_call_operand.vmem [shape: f32[1,128], index: 3, kind: input, shape index: {}]
  %s4 = inlined_call_operand.vmem [shape: f32[96,128], index: 4, kind: input, shape index: {}]
  %s5 = inlined_call_operand.vmem [shape: f32[1,128], index: 5, kind: input, shape index: {}]
  %s6 = inlined_call_operand.vmem [shape: f32[32,64], index: 6, kind: input, shape index: {}]
  %s7 = inlined_call_operand.vmem [shape: f32[1,64], index: 7, kind: input, shape index: {}]
  %s8 = inlined_call_operand.hbm [shape: f32[16,64], index: 8, kind: output, shape index: {0}]
  %s9 = inlined_call_operand.hbm [shape: f32[2,32], index: 9, kind: output, shape index: {1}]
  %s10 = inlined_call_operand.hbm [shape: f32[2,32], index: 10, kind: output, shape index: {2}]
  %s11 = inlined_call_operand.hbm [shape: f32[2,32], index: 11, kind: output, shape index: {3}]
  %s12 = inlined_call_operand.hbm [shape: f32[2,32], index: 12, kind: output, shape index: {4}]
  %13 = xla_tuple %s8, %s9, %s10, %s11, %s12
  %s14 = sld [smem:[#allocation0]]
  $region74: #{new_seq2seq_forward.1} parent=0
    _
  %s16 = ssub.s32 1, %s14
  %s17 = scalar_select 0, %s16, %s14
  $region1: #{new_seq2seq_forward.1} parent=0
    #allocation2 [shape = 'u8[8192]{0}', space=vmem, size = 0x2000, scoped, tag = 'output window, operand 0, single buffered']
    #allocation3 [shape = 's32[1]{0}', space=sflag, size = 0x4, scoped, tag = 'scoped memory for new_seq2seq_forward.1']
    #allocation4 [shape = 'u8[1024]{0}', space=vmem, size = 0x400, scoped, tag = 'output window, operand 1, single buffered']
    #allocation5 [shape = 's32[1]{0}', space=sflag, size = 0x4, scoped, tag = 'scoped memory for new_seq2seq_forward.1']
    #allocation6 [shape = 'u8[1024]{0}', space=vmem, size = 0x400, scoped, tag = 'output window, operand 2, single buffered']
    #allocation7 [shape = 'u8[1024]{0}', space=vmem, size = 0x400, scoped, tag = 'output window, operand 3, single buffered']
    #allocation8 [shape = 's32[1]{0}', space=sflag, size = 0x4, scoped, tag = 'scoped memory for new_seq2seq_forward.1']
    #allocation9 [shape = 'u8[1024]{0}', space=vmem, size = 0x400, scoped, tag = 'output window, operand 4, single buffered']
    %18 = vsyncpa [#allocation3], 0
    %19 = vsyncpa [#allocation5], 0
    %20 = vsyncpa [#allocation8], 0
    // Predicated region
    $region2: #{new_seq2seq_forward.1} parent=1 // pred_check
      _
    $region3: #{new_seq2seq_forward.1} parent=1 // pred_check_branch
      %22 = sbr.rel (0) target = $region5
    $region4: #{new_seq2seq_forward.1} parent=1 // pred_region
      _
    $region5: #{new_seq2seq_forward.1} parent=1 // pred_fallthru
      _
    // Predicated region
    $region6: #{new_seq2seq_forward.1} parent=1 // pred_check
      _
    $region7: #{new_seq2seq_forward.1} parent=1 // pred_check_branch
      %24 = sbr.rel (0) target = $region9
    $region8: #{new_seq2seq_forward.1} parent=1 // pred_region
      _
    $region9: #{new_seq2seq_forward.1} parent=1 // pred_fallthru
      _
    // Predicated region
    $region10: #{new_seq2seq_forward.1} parent=1 // pred_check
      _
    $region11: #{new_seq2seq_forward.1} parent=1 // pred_check_branch
      %26 = sbr.rel (0) target = $region13
    $region12: #{new_seq2seq_forward.1} parent=1 // pred_region
      _
    $region13: #{new_seq2seq_forward.1} parent=1 // pred_fallthru
      _
    // Predicated region
    $region14: #{new_seq2seq_forward.1} parent=1 // pred_check
      _
    $region15: #{new_seq2seq_forward.1} parent=1 // pred_check_branch
      %28 = sbr.rel (0) target = $region17
    $region16: #{new_seq2seq_forward.1} parent=1 // pred_region
      _
    $region17: #{new_seq2seq_forward.1} parent=1 // pred_fallthru
      _
    // Predicated region
    $region18: #{new_seq2seq_forward.1} parent=1 // pred_check
      _
    $region19: #{new_seq2seq_forward.1} parent=1 // pred_check_branch
      %30 = sbr.rel (0) target = $region21
    $region20: #{new_seq2seq_forward.1} parent=1 // pred_region
      _
    $region21: #{new_seq2seq_forward.1} parent=1 // pred_fallthru
      _
    // Predicated region
    $region22: #{new_seq2seq_forward.1} parent=1 // pred_check
      _
    $region23: #{new_seq2seq_forward.1} parent=1 // pred_check_branch
      %32 = sbr.rel (0) target = $region25
    $region24: #{new_seq2seq_forward.1} parent=1 // pred_region
      _
    $region25: #{new_seq2seq_forward.1} parent=1 // pred_fallthru
      _
    // Predicated region
    $region26: #{new_seq2seq_forward.1} parent=1 // pred_check
      _
    $region27: #{new_seq2seq_forward.1} parent=1 // pred_check_branch
      %34 = sbr.rel (0) target = $region29
    $region28: #{new_seq2seq_forward.1} parent=1 // pred_region
      _
    $region29: #{new_seq2seq_forward.1} parent=1 // pred_fallthru
      _
    // Predicated region
    $region30: #{new_seq2seq_forward.1} parent=1 // pred_check
      _
    $region31: #{new_seq2seq_forward.1} parent=1 // pred_check_branch
      %36 = sbr.rel (0) target = $region33
    $region32: #{new_seq2seq_forward.1} parent=1 // pred_region
      _
    $region33: #{new_seq2seq_forward.1} parent=1 // pred_fallthru
      _
    %v37 = vld [vmem:[%s2] sm:$0xff]
    %v38 = vld [vmem:[%s2 + $0x8] sm:$0xff]
    %v39 = vld [vmem:[%s2 + $0x10] sm:$0xff]
    %v40 = vld [vmem:[%s2 + $0x18] sm:$0xff]
    %v41 = vld [vmem:[%s2 + $0x20] sm:$0xff]
    %v42 = vld [vmem:[%s2 + $0x28] sm:$0xff]
    %v43 = vld [vmem:[%s2 + $0x30] sm:$0xff]
    %v44 = vld [vmem:[%s2 + $0x38] sm:$0xff]
    %v45 = vld [vmem:[%s3] sm:$0x1]
    %v46 = vld [vmem:[%s4] sm:$0xff]
    %v47 = vld [vmem:[%s4 + $0x8] sm:$0xff]
    %v48 = vld [vmem:[%s4 + $0x10] sm:$0xff]
    %v49 = vld [vmem:[%s4 + $0x18] sm:$0xff]
    %v50 = vld [vmem:[%s4 + $0x20] sm:$0xff]
    %v51 = vld [vmem:[%s4 + $0x28] sm:$0xff]
    %v52 = vld [vmem:[%s4 + $0x30] sm:$0xff]
    %v53 = vld [vmem:[%s4 + $0x38] sm:$0xff]
    %v54 = vld [vmem:[%s4 + $0x40] sm:$0xff]
    %v55 = vld [vmem:[%s4 + $0x48] sm:$0xff]
    %v56 = vld [vmem:[%s4 + $0x50] sm:$0xff]
    %v57 = vld [vmem:[%s4 + $0x58] sm:$0xff]
    %v58 = vld [vmem:[%s5] sm:$0x1]
    %v59 = vld [vmem:[%s0] sm:$0x3]
    %vm60 = vcmask 261120
    %v61 = vsel %vm60, %v59, 0.0
    %v63 = vlaneseq
    %v64 = vshrl.u32 %v63, 7
    %v65 = vsub.s32 0, %v64
    %v66 = vrot.slane %v45, %v65
    %vm68 = vcmask 523264
    %v70 = vsel %vm68, %v61, 0
    %72 = vmatprep.subr.mxu0 0.0
    %73 = vmatpush1.msra.mxu0 %v37
    %74 = vmatprep.subr.mxu0 0.0
    %75 = vmatpush1.msra.mxu0 %v38
    %76 = vmatprep.subr.mxu0 0.0
    %77 = vmatpush1.msra.mxu0 %v39
    %78 = vmatprep.subr.mxu0 0.0
    %79 = vmatpush1.msra.mxu0 %v40
    %80 = vmatprep.subr.mxu0 0.0
    %81 = vmatpush1.msra.mxu0 %v41
    %82 = vmatprep.subr.mxu0 0.0
    %83 = vmatpush1.msra.mxu0 %v42
    %84 = vmatprep.subr.mxu0 0.0
    %85 = vmatpush1.msra.mxu0 %v43
    %86 = vmatprep.subr.mxu0 0.0
    %87 = vmatpush1.msra.mxu0 %v44
    %88 = vmatprep.subr.mxu0 0.0
    %89 = vmatpush1.msra.mxu0 0.0
    %90 = vmatprep.subr.mxu0 0.0
    %91 = vmatpush1.msra.mxu0 0.0
    %92 = vmatprep.subr.mxu0 0.0
    %93 = vmatpush1.msra.mxu0 0.0
    %94 = vmatprep.subr.mxu0 0.0
    %95 = vmatpush1.msra.mxu0 0.0
    %96 = vmatprep.subr.mxu0 0.0
    %97 = vmatpush1.msra.mxu0 0.0
    %98 = vmatprep.subr.mxu0 0.0
    %99 = vmatpush1.msra.mxu0 0.0
    %100 = vmatprep.subr.mxu0 0.0
    %101 = vmatpush1.msra.mxu0 0.0
    %102 = vmatprep.subr.mxu0 0.0
    %103 = vmatpush1.msra.mxu0 0.0
    %104 = vmatprep.subr.mxu0 0.0
    %105 = vmatpush1.msra.mxu0 0.0
    %106 = vmatprep.subr.mxu0 0.0
    %107 = vmatpush1.msra.mxu0 0.0
    %108 = vmatprep.subr.mxu0 0.0
    %109 = vmatpush1.msra.mxu0 0.0
    %110 = vmatprep.subr.mxu0 0.0
    %111 = vmatpush1.msra.mxu0 0.0
    %112 = vmatprep.subr.mxu0 0.0
    %113 = vmatpush1.msra.mxu0 0.0
    %114 = vmatprep.subr.mxu0 0.0
    %115 = vmatpush1.msra.mxu0 0.0
    %116 = vmatprep.subr.mxu0 0.0
    %117 = vmatpush1.msra.mxu0 0.0
    %118 = vmatprep.subr.mxu0 0.0
    %119 = vmatpush1.msra.mxu0 0.0
    %120 = vmatprep.subr.mxu0 0.0
    %121 = vmatpush1.msra.mxu0 0.0
    %122 = vmatprep.subr.mxu0 0.0
    %123 = vmatpush1.msra.mxu0 0.0
    %124 = vmatprep.subr.mxu0 0.0
    %125 = vmatpush1.msra.mxu0 0.0
    %126 = vmatprep.subr.mxu0 0.0
    %127 = vmatpush1.msra.mxu0 0.0
    %128 = vmatprep.subr.mxu0 0.0
    %129 = vmatpush1.msra.mxu0 0.0
    %130 = vmatprep.subr.mxu0 0.0
    %131 = vmatpush1.msra.mxu0 0.0
    %132 = vmatprep.subr.mxu0 0.0
    %133 = vmatpush1.msra.mxu0 0.0
    %134 = vmatprep.subr.mxu0 0.0
    %135 = vmatpush1.msra.mxu0 0.0
    %136 = vmatprep.mubr.f32.mxu0 0.0
    %137 = vmatmul.mubr.f32.gmra.mrb[0].mxu0 %v70
    %v138 = vpop.f32.mrb[0].mxu0
    %v139 = vadd.f32 %v66, %v138
    %v140 = vpop.f32.mrb[0].mxu0
    %141 = vdwg.mxu0
    %v142 = vxor.u32 %v139, 2147483648
    %v143 = vmul.f32 %v142, 1.442695
    %v144 = vpow.pop %v143
    %v145 = vadd.f32 %v144, 1.0
    %v146 = vrcp.pop %v145
    %v147 = vmul.f32 1.0, %v146
    %v148 = vtanh.pop %v139
    %v149 = vmul.f32 %v147, 0.0
    %151 = vrot.lane.b32.xlu0 %v148, 64
    %v152 = vpop.permute.xlu0 %151
    %v154 = vmul.f32 %v147, %v152
    %156 = vrot.lane.b32.xlu0 %v154, 32
    %v157 = vpop.permute.xlu0 %156
    %v159 = vadd.f32 %v149, %v157
    %v160 = vtanh.pop %v159
    %162 = vrot.lane.b32.xlu0 %v160, 64
    %v163 = vpop.permute.xlu0 %162
    %v165 = vmul.f32 %v147, %v163
    %167 = vrot.lane.b32.xlu0 %v165, 32
    %v168 = vpop.permute.xlu0 %167
    %v170 = vsel %vm60, %v168, 0.0
    %v172 = vlaneseq
    %v173 = vshrl.u32 %v172, 7
    %v174 = vsub.s32 0, %v173
    %v175 = vrot.slane %v58, %v174
    %v178 = vsel %vm68, %v170, 0
    %180 = vmatprep.subr.mxu0 0.0
    %181 = vmatpush1.msra.mxu0 %v50
    %182 = vmatprep.subr.mxu0 0.0
    %183 = vmatpush1.msra.mxu0 %v51
    %184 = vmatprep.subr.mxu0 0.0
    %185 = vmatpush1.msra.mxu0 %v52
    %186 = vmatprep.subr.mxu0 0.0
    %187 = vmatpush1.msra.mxu0 %v53
    %188 = vmatprep.subr.mxu0 0.0
    %189 = vmatpush1.msra.mxu0 %v54
    %190 = vmatprep.subr.mxu0 0.0
    %191 = vmatpush1.msra.mxu0 %v55
    %192 = vmatprep.subr.mxu0 0.0
    %193 = vmatpush1.msra.mxu0 %v56
    %194 = vmatprep.subr.mxu0 0.0
    %195 = vmatpush1.msra.mxu0 %v57
    %196 = vmatprep.subr.mxu0 0.0
    %197 = vmatpush1.msra.mxu0 0.0
    %198 = vmatprep.subr.mxu0 0.0
    %199 = vmatpush1.msra.mxu0 0.0
    %200 = vmatprep.subr.mxu0 0.0
    %201 = vmatpush1.msra.mxu0 0.0
    %202 = vmatprep.subr.mxu0 0.0
    %203 = vmatpush1.msra.mxu0 0.0
    %204 = vmatprep.subr.mxu0 0.0
    %205 = vmatpush1.msra.mxu0 0.0
    %206 = vmatprep.subr.mxu0 0.0
    %207 = vmatpush1.msra.mxu0 0.0
    %208 = vmatprep.subr.mxu0 0.0
    %209 = vmatpush1.msra.mxu0 0.0
    %210 = vmatprep.subr.mxu0 0.0
    %211 = vmatpush1.msra.mxu0 0.0
    %212 = vmatprep.subr.mxu0 0.0
    %213 = vmatpush1.msra.mxu0 0.0
    %214 = vmatprep.subr.mxu0 0.0
    %215 = vmatpush1.msra.mxu0 0.0
    %216 = vmatprep.subr.mxu0 0.0
    %217 = vmatpush1.msra.mxu0 0.0
    %218 = vmatprep.subr.mxu0 0.0
    %219 = vmatpush1.msra.mxu0 0.0
    %220 = vmatprep.subr.mxu0 0.0
    %221 = vmatpush1.msra.mxu0 0.0
    %222 = vmatprep.subr.mxu0 0.0
    %223 = vmatpush1.msra.mxu0 0.0
    %224 = vmatprep.subr.mxu0 0.0
    %225 = vmatpush1.msra.mxu0 0.0
    %226 = vmatprep.subr.mxu0 0.0
    %227 = vmatpush1.msra.mxu0 0.0
    %228 = vmatprep.subr.mxu0 0.0
    %229 = vmatpush1.msra.mxu0 0.0
    %230 = vmatprep.subr.mxu0 0.0
    %231 = vmatpush1.msra.mxu0 0.0
    %232 = vmatprep.subr.mxu0 0.0
    %233 = vmatpush1.msra.mxu0 0.0
    %234 = vmatprep.subr.mxu0 0.0
    %235 = vmatpush1.msra.mxu0 0.0
    %236 = vmatprep.subr.mxu0 0.0
    %237 = vmatpush1.msra.mxu0 0.0
    %238 = vmatprep.subr.mxu0 0.0
    %239 = vmatpush1.msra.mxu0 0.0
    %240 = vmatprep.subr.mxu0 0.0
    %241 = vmatpush1.msra.mxu0 0.0
    %242 = vmatprep.subr.mxu0 0.0
    %243 = vmatpush1.msra.mxu0 0.0
    %244 = vmatprep.mubr.f32.mxu0 0.0
    %245 = vmatmul.mubr.f32.gmra.mrb[0].mxu0 %v178
    %v246 = vpop.f32.mrb[0].mxu0
    %v247 = vadd.f32 %v175, %v246
    %v248 = vpop.f32.mrb[0].mxu0
    %249 = vdwg.mxu0
    %v250 = vxor.u32 %v247, 2147483648
    %v251 = vmul.f32 %v250, 1.442695
    %v252 = vpow.pop %v251
    %v253 = vadd.f32 %v252, 1.0
    %v254 = vrcp.pop %v253
    %v255 = vmul.f32 1.0, %v254
    %v256 = vtanh.pop %v247
    %v257 = vmul.f32 %v255, 0.0
    %259 = vrot.lane.b32.xlu0 %v256, 64
    %v260 = vpop.permute.xlu0 %259
    %v262 = vmul.f32 %v255, %v260
    %264 = vrot.lane.b32.xlu0 %v262, 32
    %v265 = vpop.permute.xlu0 %264
    %v267 = vadd.f32 %v257, %v265
    %v268 = vtanh.pop %v267
    %270 = vrot.lane.b32.xlu0 %v268, 64
    %v271 = vpop.permute.xlu0 %270
    %v273 = vmul.f32 %v255, %v271
    %v274 = vld [vmem:[%s0 + $0x2] sm:$0x3]
    %275 = vrot.lane.b32.xlu0 %v165, 64
    %v276 = vpop.permute.xlu0 %275
    %v278 = vsel %vm60, %v274, %v276
    %v280 = vsel %vm68, %v278, 0
    %282 = vmatprep.subr.mxu0 0.0
    %283 = vmatpush1.msra.mxu0 %v37
    %284 = vmatprep.subr.mxu0 0.0
    %285 = vmatpush1.msra.mxu0 %v38
    %286 = vmatprep.subr.mxu0 0.0
    %287 = vmatpush1.msra.mxu0 %v39
    %288 = vmatprep.subr.mxu0 0.0
    %289 = vmatpush1.msra.mxu0 %v40
    %290 = vmatprep.subr.mxu0 0.0
    %291 = vmatpush1.msra.mxu0 %v41
    %292 = vmatprep.subr.mxu0 0.0
    %293 = vmatpush1.msra.mxu0 %v42
    %294 = vmatprep.subr.mxu0 0.0
    %295 = vmatpush1.msra.mxu0 %v43
    %296 = vmatprep.subr.mxu0 0.0
    %297 = vmatpush1.msra.mxu0 %v44
    %298 = vmatprep.subr.mxu0 0.0
    %299 = vmatpush1.msra.mxu0 0.0
    %300 = vmatprep.subr.mxu0 0.0
    %301 = vmatpush1.msra.mxu0 0.0
    %302 = vmatprep.subr.mxu0 0.0
    %303 = vmatpush1.msra.mxu0 0.0
    %304 = vmatprep.subr.mxu0 0.0
    %305 = vmatpush1.msra.mxu0 0.0
    %306 = vmatprep.subr.mxu0 0.0
    %307 = vmatpush1.msra.mxu0 0.0
    %308 = vmatprep.subr.mxu0 0.0
    %309 = vmatpush1.msra.mxu0 0.0
    %310 = vmatprep.subr.mxu0 0.0
    %311 = vmatpush1.msra.mxu0 0.0
    %312 = vmatprep.subr.mxu0 0.0
    %313 = vmatpush1.msra.mxu0 0.0
    %314 = vmatprep.subr.mxu0 0.0
    %315 = vmatpush1.msra.mxu0 0.0
    %316 = vmatprep.subr.mxu0 0.0
    %317 = vmatpush1.msra.mxu0 0.0
    %318 = vmatprep.subr.mxu0 0.0
    %319 = vmatpush1.msra.mxu0 0.0
    %320 = vmatprep.subr.mxu0 0.0
    %321 = vmatpush1.msra.mxu0 0.0
    %322 = vmatprep.subr.mxu0 0.0
    %323 = vmatpush1.msra.mxu0 0.0
    %324 = vmatprep.subr.mxu0 0.0
    %325 = vmatpush1.msra.mxu0 0.0
    %326 = vmatprep.subr.mxu0 0.0
    %327 = vmatpush1.msra.mxu0 0.0
    %328 = vmatprep.subr.mxu0 0.0
    %329 = vmatpush1.msra.mxu0 0.0
    %330 = vmatprep.subr.mxu0 0.0
    %331 = vmatpush1.msra.mxu0 0.0
    %332 = vmatprep.subr.mxu0 0.0
    %333 = vmatpush1.msra.mxu0 0.0
    %334 = vmatprep.subr.mxu0 0.0
    %335 = vmatpush1.msra.mxu0 0.0
    %336 = vmatprep.subr.mxu0 0.0
    %337 = vmatpush1.msra.mxu0 0.0
    %338 = vmatprep.subr.mxu0 0.0
    %339 = vmatpush1.msra.mxu0 0.0
    %340 = vmatprep.subr.mxu0 0.0
    %341 = vmatpush1.msra.mxu0 0.0
    %342 = vmatprep.subr.mxu0 0.0
    %343 = vmatpush1.msra.mxu0 0.0
    %344 = vmatprep.subr.mxu0 0.0
    %345 = vmatpush1.msra.mxu0 0.0
    %346 = vmatprep.mubr.f32.mxu0 0.0
    %347 = vmatmul.mubr.f32.gmra.mrb[0].mxu0 %v280
    %v348 = vpop.f32.mrb[0].mxu0
    %v349 = vadd.f32 %v66, %v348
    %v350 = vpop.f32.mrb[0].mxu0
    %351 = vdwg.mxu0
    %v352 = vxor.u32 %v349, 2147483648
    %v353 = vmul.f32 %v352, 1.442695
    %v354 = vpow.pop %v353
    %v355 = vadd.f32 %v354, 1.0
    %v356 = vrcp.pop %v355
    %v357 = vmul.f32 1.0, %v356
    %v358 = vtanh.pop %v349
    %v359 = vmul.f32 %v357, %v159
    %361 = vrot.lane.b32.xlu0 %v358, 64
    %v362 = vpop.permute.xlu0 %361
    %v364 = vmul.f32 %v357, %v362
    %366 = vrot.lane.b32.xlu0 %v364, 32
    %v367 = vpop.permute.xlu0 %366
    %v369 = vadd.f32 %v359, %v367
    %v370 = vtanh.pop %v369
    %372 = vrot.lane.b32.xlu0 %v370, 64
    %v373 = vpop.permute.xlu0 %372
    %v375 = vmul.f32 %v357, %v373
    %377 = vrot.lane.b32.xlu0 %v375, 32
    %v378 = vpop.permute.xlu0 %377
    %381 = vrot.lane.b32.xlu0 %v273, 64
    %v382 = vpop.permute.xlu0 %381
    %v384 = vsel %vm60, %v378, %v382
    %v386 = vsel %vm68, %v384, 0
    %388 = vmatprep.subr.mxu0 0.0
    %389 = vmatpush1.msra.mxu0 %v50
    %390 = vmatprep.subr.mxu0 0.0
    %391 = vmatpush1.msra.mxu0 %v51
    %392 = vmatprep.subr.mxu0 0.0
    %393 = vmatpush1.msra.mxu0 %v52
    %394 = vmatprep.subr.mxu0 0.0
    %395 = vmatpush1.msra.mxu0 %v53
    %396 = vmatprep.subr.mxu0 0.0
    %397 = vmatpush1.msra.mxu0 %v54
    %398 = vmatprep.subr.mxu0 0.0
    %399 = vmatpush1.msra.mxu0 %v55
    %400 = vmatprep.subr.mxu0 0.0
    %401 = vmatpush1.msra.mxu0 %v56
    %402 = vmatprep.subr.mxu0 0.0
    %403 = vmatpush1.msra.mxu0 %v57
    %404 = vmatprep.subr.mxu0 0.0
    %405 = vmatpush1.msra.mxu0 0.0
    %406 = vmatprep.subr.mxu0 0.0
    %407 = vmatpush1.msra.mxu0 0.0
    %408 = vmatprep.subr.mxu0 0.0
    %409 = vmatpush1.msra.mxu0 0.0
    %410 = vmatprep.subr.mxu0 0.0
    %411 = vmatpush1.msra.mxu0 0.0
    %412 = vmatprep.subr.mxu0 0.0
    %413 = vmatpush1.msra.mxu0 0.0
    %414 = vmatprep.subr.mxu0 0.0
    %415 = vmatpush1.msra.mxu0 0.0
    %416 = vmatprep.subr.mxu0 0.0
    %417 = vmatpush1.msra.mxu0 0.0
    %418 = vmatprep.subr.mxu0 0.0
    %419 = vmatpush1.msra.mxu0 0.0
    %420 = vmatprep.subr.mxu0 0.0
    %421 = vmatpush1.msra.mxu0 0.0
    %422 = vmatprep.subr.mxu0 0.0
    %423 = vmatpush1.msra.mxu0 0.0
    %424 = vmatprep.subr.mxu0 0.0
    %425 = vmatpush1.msra.mxu0 0.0
    %426 = vmatprep.subr.mxu0 0.0
    %427 = vmatpush1.msra.mxu0 0.0
    %428 = vmatprep.subr.mxu0 0.0
    %429 = vmatpush1.msra.mxu0 0.0
    %430 = vmatprep.subr.mxu0 0.0
    %431 = vmatpush1.msra.mxu0 0.0
    %432 = vmatprep.subr.mxu0 0.0
    %433 = vmatpush1.msra.mxu0 0.0
    %434 = vmatprep.subr.mxu0 0.0
    %435 = vmatpush1.msra.mxu0 0.0
    %436 = vmatprep.subr.mxu0 0.0
    %437 = vmatpush1.msra.mxu0 0.0
    %438 = vmatprep.subr.mxu0 0.0
    %439 = vmatpush1.msra.mxu0 0.0
    %440 = vmatprep.subr.mxu0 0.0
    %441 = vmatpush1.msra.mxu0 0.0
    %442 = vmatprep.subr.mxu0 0.0
    %443 = vmatpush1.msra.mxu0 0.0
    %444 = vmatprep.subr.mxu0 0.0
    %445 = vmatpush1.msra.mxu0 0.0
    %446 = vmatprep.subr.mxu0 0.0
    %447 = vmatpush1.msra.mxu0 0.0
    %448 = vmatprep.subr.mxu0 0.0
    %449 = vmatpush1.msra.mxu0 0.0
    %450 = vmatprep.subr.mxu0 0.0
    %451 = vmatpush1.msra.mxu0 0.0
    %452 = vmatprep.mubr.f32.mxu0 0.0
    %453 = vmatmul.mubr.f32.gmra.mrb[0].mxu0 %v386
    %v454 = vpop.f32.mrb[0].mxu0
    %v455 = vadd.f32 %v175, %v454
    %v456 = vpop.f32.mrb[0].mxu0
    %457 = vdwg.mxu0
    %v458 = vxor.u32 %v455, 2147483648
    %v459 = vmul.f32 %v458, 1.442695
    %v460 = vpow.pop %v459
    %v461 = vadd.f32 %v460, 1.0
    %v462 = vrcp.pop %v461
    %v463 = vmul.f32 1.0, %v462
    %v464 = vtanh.pop %v455
    %v465 = vmul.f32 %v463, %v267
    %467 = vrot.lane.b32.xlu0 %v464, 64
    %v468 = vpop.permute.xlu0 %467
    %v470 = vmul.f32 %v463, %v468
    %472 = vrot.lane.b32.xlu0 %v470, 32
    %v473 = vpop.permute.xlu0 %472
    %v475 = vadd.f32 %v465, %v473
    %v476 = vtanh.pop %v475
    %478 = vrot.lane.b32.xlu0 %v476, 64
    %v479 = vpop.permute.xlu0 %478
    %v481 = vmul.f32 %v463, %v479
    %v482 = vld [vmem:[%s0 + $0x4] sm:$0x3]
    %483 = vrot.lane.b32.xlu0 %v375, 64
    %v484 = vpop.permute.xlu0 %483
    %v486 = vsel %vm60, %v482, %v484
    %v488 = vsel %vm68, %v486, 0
    %490 = vmatprep.subr.mxu0 0.0
    %491 = vmatpush1.msra.mxu0 %v37
    %492 = vmatprep.subr.mxu0 0.0
    %493 = vmatpush1.msra.mxu0 %v38
    %494 = vmatprep.subr.mxu0 0.0
    %495 = vmatpush1.msra.mxu0 %v39
    %496 = vmatprep.subr.mxu0 0.0
    %497 = vmatpush1.msra.mxu0 %v40
    %498 = vmatprep.subr.mxu0 0.0
    %499 = vmatpush1.msra.mxu0 %v41
    %500 = vmatprep.subr.mxu0 0.0
    %501 = vmatpush1.msra.mxu0 %v42
    %502 = vmatprep.subr.mxu0 0.0
    %503 = vmatpush1.msra.mxu0 %v43
    %504 = vmatprep.subr.mxu0 0.0
    %505 = vmatpush1.msra.mxu0 %v44
    %506 = vmatprep.subr.mxu0 0.0
    %507 = vmatpush1.msra.mxu0 0.0
    %508 = vmatprep.subr.mxu0 0.0
    %509 = vmatpush1.msra.mxu0 0.0
    %510 = vmatprep.subr.mxu0 0.0
    %511 = vmatpush1.msra.mxu0 0.0
    %512 = vmatprep.subr.mxu0 0.0
    %513 = vmatpush1.msra.mxu0 0.0
    %514 = vmatprep.subr.mxu0 0.0
    %515 = vmatpush1.msra.mxu0 0.0
    %516 = vmatprep.subr.mxu0 0.0
    %517 = vmatpush1.msra.mxu0 0.0
    %518 = vmatprep.subr.mxu0 0.0
    %519 = vmatpush1.msra.mxu0 0.0
    %520 = vmatprep.subr.mxu0 0.0
    %521 = vmatpush1.msra.mxu0 0.0
    %522 = vmatprep.subr.mxu0 0.0
    %523 = vmatpush1.msra.mxu0 0.0
    %524 = vmatprep.subr.mxu0 0.0
    %525 = vmatpush1.msra.mxu0 0.0
    %526 = vmatprep.subr.mxu0 0.0
    %527 = vmatpush1.msra.mxu0 0.0
    %528 = vmatprep.subr.mxu0 0.0
    %529 = vmatpush1.msra.mxu0 0.0
    %530 = vmatprep.subr.mxu0 0.0
    %531 = vmatpush1.msra.mxu0 0.0
    %532 = vmatprep.subr.mxu0 0.0
    %533 = vmatpush1.msra.mxu0 0.0
    %534 = vmatprep.subr.mxu0 0.0
    %535 = vmatpush1.msra.mxu0 0.0
    %536 = vmatprep.subr.mxu0 0.0
    %537 = vmatpush1.msra.mxu0 0.0
    %538 = vmatprep.subr.mxu0 0.0
    %539 = vmatpush1.msra.mxu0 0.0
    %540 = vmatprep.subr.mxu0 0.0
    %541 = vmatpush1.msra.mxu0 0.0
    %542 = vmatprep.subr.mxu0 0.0
    %543 = vmatpush1.msra.mxu0 0.0
    %544 = vmatprep.subr.mxu0 0.0
    %545 = vmatpush1.msra.mxu0 0.0
    %546 = vmatprep.subr.mxu0 0.0
    %547 = vmatpush1.msra.mxu0 0.0
    %548 = vmatprep.subr.mxu0 0.0
    %549 = vmatpush1.msra.mxu0 0.0
    %550 = vmatprep.subr.mxu0 0.0
    %551 = vmatpush1.msra.mxu0 0.0
    %552 = vmatprep.subr.mxu0 0.0
    %553 = vmatpush1.msra.mxu0 0.0
    %554 = vmatprep.mubr.f32.mxu0 0.0
    %555 = vmatmul.mubr.f32.gmra.mrb[0].mxu0 %v488
    %v556 = vpop.f32.mrb[0].mxu0
    %v557 = vadd.f32 %v66, %v556
    %v558 = vpop.f32.mrb[0].mxu0
    %559 = vdwg.mxu0
    %v560 = vxor.u32 %v557, 2147483648
    %v561 = vmul.f32 %v560, 1.442695
    %v562 = vpow.pop %v561
    %v563 = vadd.f32 %v562, 1.0
    %v564 = vrcp.pop %v563
    %v565 = vmul.f32 1.0, %v564
    %v566 = vtanh.pop %v557
    %v567 = vmul.f32 %v565, %v369
    %569 = vrot.lane.b32.xlu0 %v566, 64
    %v570 = vpop.permute.xlu0 %569
    %v572 = vmul.f32 %v565, %v570
    %574 = vrot.lane.b32.xlu0 %v572, 32
    %v575 = vpop.permute.xlu0 %574
    %v577 = vadd.f32 %v567, %v575
    %v578 = vtanh.pop %v577
    %580 = vrot.lane.b32.xlu0 %v578, 64
    %v581 = vpop.permute.xlu0 %580
    %v583 = vmul.f32 %v565, %v581
    %585 = vrot.lane.b32.xlu0 %v583, 32
    %v586 = vpop.permute.xlu0 %585
    %589 = vrot.lane.b32.xlu0 %v481, 64
    %v590 = vpop.permute.xlu0 %589
    %v592 = vsel %vm60, %v586, %v590
    %v594 = vsel %vm68, %v592, 0
    %596 = vmatprep.subr.mxu0 0.0
    %597 = vmatpush1.msra.mxu0 %v50
    %598 = vmatprep.subr.mxu0 0.0
    %599 = vmatpush1.msra.mxu0 %v51
    %600 = vmatprep.subr.mxu0 0.0
    %601 = vmatpush1.msra.mxu0 %v52
    %602 = vmatprep.subr.mxu0 0.0
    %603 = vmatpush1.msra.mxu0 %v53
    %604 = vmatprep.subr.mxu0 0.0
    %605 = vmatpush1.msra.mxu0 %v54
    %606 = vmatprep.subr.mxu0 0.0
    %607 = vmatpush1.msra.mxu0 %v55
    %608 = vmatprep.subr.mxu0 0.0
    %609 = vmatpush1.msra.mxu0 %v56
    %610 = vmatprep.subr.mxu0 0.0
    %611 = vmatpush1.msra.mxu0 %v57
    %612 = vmatprep.subr.mxu0 0.0
    %613 = vmatpush1.msra.mxu0 0.0
    %614 = vmatprep.subr.mxu0 0.0
    %615 = vmatpush1.msra.mxu0 0.0
    %616 = vmatprep.subr.mxu0 0.0
    %617 = vmatpush1.msra.mxu0 0.0
    %618 = vmatprep.subr.mxu0 0.0
    %619 = vmatpush1.msra.mxu0 0.0
    %620 = vmatprep.subr.mxu0 0.0
    %621 = vmatpush1.msra.mxu0 0.0
    %622 = vmatprep.subr.mxu0 0.0
    %623 = vmatpush1.msra.mxu0 0.0
    %624 = vmatprep.subr.mxu0 0.0
    %625 = vmatpush1.msra.mxu0 0.0
    %626 = vmatprep.subr.mxu0 0.0
    %627 = vmatpush1.msra.mxu0 0.0
    %628 = vmatprep.subr.mxu0 0.0
    %629 = vmatpush1.msra.mxu0 0.0
    %630 = vmatprep.subr.mxu0 0.0
    %631 = vmatpush1.msra.mxu0 0.0
    %632 = vmatprep.subr.mxu0 0.0
    %633 = vmatpush1.msra.mxu0 0.0
    %634 = vmatprep.subr.mxu0 0.0
    %635 = vmatpush1.msra.mxu0 0.0
    %636 = vmatprep.subr.mxu0 0.0
    %637 = vmatpush1.msra.mxu0 0.0
    %638 = vmatprep.subr.mxu0 0.0
    %639 = vmatpush1.msra.mxu0 0.0
    %640 = vmatprep.subr.mxu0 0.0
    %641 = vmatpush1.msra.mxu0 0.0
    %642 = vmatprep.subr.mxu0 0.0
    %643 = vmatpush1.msra.mxu0 0.0
    %644 = vmatprep.subr.mxu0 0.0
    %645 = vmatpush1.msra.mxu0 0.0
    %646 = vmatprep.subr.mxu0 0.0
    %647 = vmatpush1.msra.mxu0 0.0
    %648 = vmatprep.subr.mxu0 0.0
    %649 = vmatpush1.msra.mxu0 0.0
    %650 = vmatprep.subr.mxu0 0.0
    %651 = vmatpush1.msra.mxu0 0.0
    %652 = vmatprep.subr.mxu0 0.0
    %653 = vmatpush1.msra.mxu0 0.0
    %654 = vmatprep.subr.mxu0 0.0
    %655 = vmatpush1.msra.mxu0 0.0
    %656 = vmatprep.subr.mxu0 0.0
    %657 = vmatpush1.msra.mxu0 0.0
    %658 = vmatprep.subr.mxu0 0.0
    %659 = vmatpush1.msra.mxu0 0.0
    %660 = vmatprep.mubr.f32.mxu0 0.0
    %661 = vmatmul.mubr.f32.gmra.mrb[0].mxu0 %v594
    %v662 = vpop.f32.mrb[0].mxu0
    %v663 = vadd.f32 %v175, %v662
    %v664 = vpop.f32.mrb[0].mxu0
    %665 = vdwg.mxu0
    %v666 = vxor.u32 %v663, 2147483648
    %v667 = vmul.f32 %v666, 1.442695
    %v668 = vpow.pop %v667
    %v669 = vadd.f32 %v668, 1.0
    %v670 = vrcp.pop %v669
    %v671 = vmul.f32 1.0, %v670
    %v672 = vtanh.pop %v663
    %v673 = vmul.f32 %v671, %v475
    %675 = vrot.lane.b32.xlu0 %v672, 64
    %v676 = vpop.permute.xlu0 %675
    %v678 = vmul.f32 %v671, %v676
    %680 = vrot.lane.b32.xlu0 %v678, 32
    %v681 = vpop.permute.xlu0 %680
    %v683 = vadd.f32 %v673, %v681
    %v684 = vtanh.pop %v683
    %686 = vrot.lane.b32.xlu0 %v684, 64
    %v687 = vpop.permute.xlu0 %686
    %v689 = vmul.f32 %v671, %v687
    %v690 = vld [vmem:[%s0 + $0x6] sm:$0x3]
    %691 = vrot.lane.b32.xlu0 %v583, 64
    %v692 = vpop.permute.xlu0 %691
    %v694 = vsel %vm60, %v690, %v692
    %v696 = vsel %vm68, %v694, 0
    %698 = vmatprep.subr.mxu0 0.0
    %699 = vmatpush1.msra.mxu0 %v37
    %700 = vmatprep.subr.mxu0 0.0
    %701 = vmatpush1.msra.mxu0 %v38
    %702 = vmatprep.subr.mxu0 0.0
    %703 = vmatpush1.msra.mxu0 %v39
    %704 = vmatprep.subr.mxu0 0.0
    %705 = vmatpush1.msra.mxu0 %v40
    %706 = vmatprep.subr.mxu0 0.0
    %707 = vmatpush1.msra.mxu0 %v41
    %708 = vmatprep.subr.mxu0 0.0
    %709 = vmatpush1.msra.mxu0 %v42
    %710 = vmatprep.subr.mxu0 0.0
    %711 = vmatpush1.msra.mxu0 %v43
    %712 = vmatprep.subr.mxu0 0.0
    %713 = vmatpush1.msra.mxu0 %v44
    %714 = vmatprep.subr.mxu0 0.0
    %715 = vmatpush1.msra.mxu0 0.0
    %716 = vmatprep.subr.mxu0 0.0
    %717 = vmatpush1.msra.mxu0 0.0
    %718 = vmatprep.subr.mxu0 0.0
    %719 = vmatpush1.msra.mxu0 0.0
    %720 = vmatprep.subr.mxu0 0.0
    %721 = vmatpush1.msra.mxu0 0.0
    %722 = vmatprep.subr.mxu0 0.0
    %723 = vmatpush1.msra.mxu0 0.0
    %724 = vmatprep.subr.mxu0 0.0
    %725 = vmatpush1.msra.mxu0 0.0
    %726 = vmatprep.subr.mxu0 0.0
    %727 = vmatpush1.msra.mxu0 0.0
    %728 = vmatprep.subr.mxu0 0.0
    %729 = vmatpush1.msra.mxu0 0.0
    %730 = vmatprep.subr.mxu0 0.0
    %731 = vmatpush1.msra.mxu0 0.0
    %732 = vmatprep.subr.mxu0 0.0
    %733 = vmatpush1.msra.mxu0 0.0
    %734 = vmatprep.subr.mxu0 0.0
    %735 = vmatpush1.msra.mxu0 0.0
    %736 = vmatprep.subr.mxu0 0.0
    %737 = vmatpush1.msra.mxu0 0.0
    %738 = vmatprep.subr.mxu0 0.0
    %739 = vmatpush1.msra.mxu0 0.0
    %740 = vmatprep.subr.mxu0 0.0
    %741 = vmatpush1.msra.mxu0 0.0
    %742 = vmatprep.subr.mxu0 0.0
    %743 = vmatpush1.msra.mxu0 0.0
    %744 = vmatprep.subr.mxu0 0.0
    %745 = vmatpush1.msra.mxu0 0.0
    %746 = vmatprep.subr.mxu0 0.0
    %747 = vmatpush1.msra.mxu0 0.0
    %748 = vmatprep.subr.mxu0 0.0
    %749 = vmatpush1.msra.mxu0 0.0
    %750 = vmatprep.subr.mxu0 0.0
    %751 = vmatpush1.msra.mxu0 0.0
    %752 = vmatprep.subr.mxu0 0.0
    %753 = vmatpush1.msra.mxu0 0.0
    %754 = vmatprep.subr.mxu0 0.0
    %755 = vmatpush1.msra.mxu0 0.0
    %756 = vmatprep.subr.mxu0 0.0
    %757 = vmatpush1.msra.mxu0 0.0
    %758 = vmatprep.subr.mxu0 0.0
    %759 = vmatpush1.msra.mxu0 0.0
    %760 = vmatprep.subr.mxu0 0.0
    %761 = vmatpush1.msra.mxu0 0.0
    %762 = vmatprep.mubr.f32.mxu0 0.0
    %763 = vmatmul.mubr.f32.gmra.mrb[0].mxu0 %v696
    %v764 = vpop.f32.mrb[0].mxu0
    %v765 = vadd.f32 %v66, %v764
    %v766 = vpop.f32.mrb[0].mxu0
    %767 = vdwg.mxu0
    %v768 = vxor.u32 %v765, 2147483648
    %v769 = vmul.f32 %v768, 1.442695
    %v770 = vpow.pop %v769
    %v771 = vadd.f32 %v770, 1.0
    %v772 = vrcp.pop %v771
    %v773 = vmul.f32 1.0, %v772
    %v774 = vtanh.pop %v765
    %v775 = vmul.f32 %v773, %v577
    %777 = vrot.lane.b32.xlu0 %v774, 64
    %v778 = vpop.permute.xlu0 %777
    %v780 = vmul.f32 %v773, %v778
    %782 = vrot.lane.b32.xlu0 %v780, 32
    %v783 = vpop.permute.xlu0 %782
    %v785 = vadd.f32 %v775, %v783
    %v786 = vtanh.pop %v785
    %788 = vrot.lane.b32.xlu0 %v786, 64
    %v789 = vpop.permute.xlu0 %788
    %v791 = vmul.f32 %v773, %v789
    %793 = vrot.lane.b32.xlu0 %v791, 32
    %v794 = vpop.permute.xlu0 %793
    %797 = vrot.lane.b32.xlu0 %v689, 64
    %v798 = vpop.permute.xlu0 %797
    %v800 = vsel %vm60, %v794, %v798
    %v802 = vsel %vm68, %v800, 0
    %804 = vmatprep.subr.mxu0 0.0
    %805 = vmatpush1.msra.mxu0 %v50
    %806 = vmatprep.subr.mxu0 0.0
    %807 = vmatpush1.msra.mxu0 %v51
    %808 = vmatprep.subr.mxu0 0.0
    %809 = vmatpush1.msra.mxu0 %v52
    %810 = vmatprep.subr.mxu0 0.0
    %811 = vmatpush1.msra.mxu0 %v53
    %812 = vmatprep.subr.mxu0 0.0
    %813 = vmatpush1.msra.mxu0 %v54
    %814 = vmatprep.subr.mxu0 0.0
    %815 = vmatpush1.msra.mxu0 %v55
    %816 = vmatprep.subr.mxu0 0.0
    %817 = vmatpush1.msra.mxu0 %v56
    %818 = vmatprep.subr.mxu0 0.0
    %819 = vmatpush1.msra.mxu0 %v57
    %820 = vmatprep.subr.mxu0 0.0
    %821 = vmatpush1.msra.mxu0 0.0
    %822 = vmatprep.subr.mxu0 0.0
    %823 = vmatpush1.msra.mxu0 0.0
    %824 = vmatprep.subr.mxu0 0.0
    %825 = vmatpush1.msra.mxu0 0.0
    %826 = vmatprep.subr.mxu0 0.0
    %827 = vmatpush1.msra.mxu0 0.0
    %828 = vmatprep.subr.mxu0 0.0
    %829 = vmatpush1.msra.mxu0 0.0
    %830 = vmatprep.subr.mxu0 0.0
    %831 = vmatpush1.msra.mxu0 0.0
    %832 = vmatprep.subr.mxu0 0.0
    %833 = vmatpush1.msra.mxu0 0.0
    %834 = vmatprep.subr.mxu0 0.0
    %835 = vmatpush1.msra.mxu0 0.0
    %836 = vmatprep.subr.mxu0 0.0
    %837 = vmatpush1.msra.mxu0 0.0
    %838 = vmatprep.subr.mxu0 0.0
    %839 = vmatpush1.msra.mxu0 0.0
    %840 = vmatprep.subr.mxu0 0.0
    %841 = vmatpush1.msra.mxu0 0.0
    %842 = vmatprep.subr.mxu0 0.0
    %843 = vmatpush1.msra.mxu0 0.0
    %844 = vmatprep.subr.mxu0 0.0
    %845 = vmatpush1.msra.mxu0 0.0
    %846 = vmatprep.subr.mxu0 0.0
    %847 = vmatpush1.msra.mxu0 0.0
    %848 = vmatprep.subr.mxu0 0.0
    %849 = vmatpush1.msra.mxu0 0.0
    %850 = vmatprep.subr.mxu0 0.0
    %851 = vmatpush1.msra.mxu0 0.0
    %852 = vmatprep.subr.mxu0 0.0
    %853 = vmatpush1.msra.mxu0 0.0
    %854 = vmatprep.subr.mxu0 0.0
    %855 = vmatpush1.msra.mxu0 0.0
    %856 = vmatprep.subr.mxu0 0.0
    %857 = vmatpush1.msra.mxu0 0.0
    %858 = vmatprep.subr.mxu0 0.0
    %859 = vmatpush1.msra.mxu0 0.0
    %860 = vmatprep.subr.mxu0 0.0
    %861 = vmatpush1.msra.mxu0 0.0
    %862 = vmatprep.subr.mxu0 0.0
    %863 = vmatpush1.msra.mxu0 0.0
    %864 = vmatprep.subr.mxu0 0.0
    %865 = vmatpush1.msra.mxu0 0.0
    %866 = vmatprep.subr.mxu0 0.0
    %867 = vmatpush1.msra.mxu0 0.0
    %868 = vmatprep.mubr.f32.mxu0 0.0
    %869 = vmatmul.mubr.f32.gmra.mrb[0].mxu0 %v802
    %v870 = vpop.f32.mrb[0].mxu0
    %v871 = vadd.f32 %v175, %v870
    %v872 = vpop.f32.mrb[0].mxu0
    %873 = vdwg.mxu0
    %v874 = vxor.u32 %v871, 2147483648
    %v875 = vmul.f32 %v874, 1.442695
    %v876 = vpow.pop %v875
    %v877 = vadd.f32 %v876, 1.0
    %v878 = vrcp.pop %v877
    %v879 = vmul.f32 1.0, %v878
    %v880 = vtanh.pop %v871
    %v881 = vmul.f32 %v879, %v683
    %883 = vrot.lane.b32.xlu0 %v880, 64
    %v884 = vpop.permute.xlu0 %883
    %v886 = vmul.f32 %v879, %v884
    %888 = vrot.lane.b32.xlu0 %v886, 32
    %v889 = vpop.permute.xlu0 %888
    %v891 = vadd.f32 %v881, %v889
    %v892 = vtanh.pop %v891
    %894 = vrot.lane.b32.xlu0 %v892, 64
    %v895 = vpop.permute.xlu0 %894
    %v897 = vmul.f32 %v879, %v895
    %v898 = vld [vmem:[%s0 + $0x8] sm:$0x3]
    %899 = vrot.lane.b32.xlu0 %v791, 64
    %v900 = vpop.permute.xlu0 %899
    %v902 = vsel %vm60, %v898, %v900
    %v904 = vsel %vm68, %v902, 0
    %906 = vmatprep.subr.mxu0 0.0
    %907 = vmatpush1.msra.mxu0 %v37
    %908 = vmatprep.subr.mxu0 0.0
    %909 = vmatpush1.msra.mxu0 %v38
    %910 = vmatprep.subr.mxu0 0.0
    %911 = vmatpush1.msra.mxu0 %v39
    %912 = vmatprep.subr.mxu0 0.0
    %913 = vmatpush1.msra.mxu0 %v40
    %914 = vmatprep.subr.mxu0 0.0
    %915 = vmatpush1.msra.mxu0 %v41
    %916 = vmatprep.subr.mxu0 0.0
    %917 = vmatpush1.msra.mxu0 %v42
    %918 = vmatprep.subr.mxu0 0.0
    %919 = vmatpush1.msra.mxu0 %v43
    %920 = vmatprep.subr.mxu0 0.0
    %921 = vmatpush1.msra.mxu0 %v44
    %922 = vmatprep.subr.mxu0 0.0
    %923 = vmatpush1.msra.mxu0 0.0
    %924 = vmatprep.subr.mxu0 0.0
    %925 = vmatpush1.msra.mxu0 0.0
    %926 = vmatprep.subr.mxu0 0.0
    %927 = vmatpush1.msra.mxu0 0.0
    %928 = vmatprep.subr.mxu0 0.0
    %929 = vmatpush1.msra.mxu0 0.0
    %930 = vmatprep.subr.mxu0 0.0
    %931 = vmatpush1.msra.mxu0 0.0
    %932 = vmatprep.subr.mxu0 0.0
    %933 = vmatpush1.msra.mxu0 0.0
    %934 = vmatprep.subr.mxu0 0.0
    %935 = vmatpush1.msra.mxu0 0.0
    %936 = vmatprep.subr.mxu0 0.0
    %937 = vmatpush1.msra.mxu0 0.0
    %938 = vmatprep.subr.mxu0 0.0
    %939 = vmatpush1.msra.mxu0 0.0
    %940 = vmatprep.subr.mxu0 0.0
    %941 = vmatpush1.msra.mxu0 0.0
    %942 = vmatprep.subr.mxu0 0.0
    %943 = vmatpush1.msra.mxu0 0.0
    %944 = vmatprep.subr.mxu0 0.0
    %945 = vmatpush1.msra.mxu0 0.0
    %946 = vmatprep.subr.mxu0 0.0
    %947 = vmatpush1.msra.mxu0 0.0
    %948 = vmatprep.subr.mxu0 0.0
    %949 = vmatpush1.msra.mxu0 0.0
    %950 = vmatprep.subr.mxu0 0.0
    %951 = vmatpush1.msra.mxu0 0.0
    %952 = vmatprep.subr.mxu0 0.0
    %953 = vmatpush1.msra.mxu0 0.0
    %954 = vmatprep.subr.mxu0 0.0
    %955 = vmatpush1.msra.mxu0 0.0
    %956 = vmatprep.subr.mxu0 0.0
    %957 = vmatpush1.msra.mxu0 0.0
    %958 = vmatprep.subr.mxu0 0.0
    %959 = vmatpush1.msra.mxu0 0.0
    %960 = vmatprep.subr.mxu0 0.0
    %961 = vmatpush1.msra.mxu0 0.0
    %962 = vmatprep.subr.mxu0 0.0
    %963 = vmatpush1.msra.mxu0 0.0
    %964 = vmatprep.subr.mxu0 0.0
    %965 = vmatpush1.msra.mxu0 0.0
    %966 = vmatprep.subr.mxu0 0.0
    %967 = vmatpush1.msra.mxu0 0.0
    %968 = vmatprep.subr.mxu0 0.0
    %969 = vmatpush1.msra.mxu0 0.0
    %970 = vmatprep.mubr.f32.mxu0 0.0
    %971 = vmatmul.mubr.f32.gmra.mrb[0].mxu0 %v904
    %v972 = vpop.f32.mrb[0].mxu0
    %v973 = vadd.f32 %v66, %v972
    %v974 = vpop.f32.mrb[0].mxu0
    %975 = vdwg.mxu0
    %v976 = vxor.u32 %v973, 2147483648
    %v977 = vmul.f32 %v976, 1.442695
    %v978 = vpow.pop %v977
    %v979 = vadd.f32 %v978, 1.0
    %v980 = vrcp.pop %v979
    %v981 = vmul.f32 1.0, %v980
    %v982 = vtanh.pop %v973
    %v983 = vmul.f32 %v981, %v785
    %985 = vrot.lane.b32.xlu0 %v982, 64
    %v986 = vpop.permute.xlu0 %985
    %v988 = vmul.f32 %v981, %v986
    %990 = vrot.lane.b32.xlu0 %v988, 32
    %v991 = vpop.permute.xlu0 %990
    %v993 = vadd.f32 %v983, %v991
    %v994 = vtanh.pop %v993
    %996 = vrot.lane.b32.xlu0 %v994, 64
    %v997 = vpop.permute.xlu0 %996
    %v999 = vmul.f32 %v981, %v997
    %1001 = vrot.lane.b32.xlu0 %v999, 32
    %v1002 = vpop.permute.xlu0 %1001
    %1005 = vrot.lane.b32.xlu0 %v897, 64
    %v1006 = vpop.permute.xlu0 %1005
    %v1008 = vsel %vm60, %v1002, %v1006
    %v1010 = vsel %vm68, %v1008, 0
    %1012 = vmatprep.subr.mxu0 0.0
    %1013 = vmatpush1.msra.mxu0 %v50
    %1014 = vmatprep.subr.mxu0 0.0
    %1015 = vmatpush1.msra.mxu0 %v51
    %1016 = vmatprep.subr.mxu0 0.0
    %1017 = vmatpush1.msra.mxu0 %v52
    %1018 = vmatprep.subr.mxu0 0.0
    %1019 = vmatpush1.msra.mxu0 %v53
    %1020 = vmatprep.subr.mxu0 0.0
    %1021 = vmatpush1.msra.mxu0 %v54
    %1022 = vmatprep.subr.mxu0 0.0
    %1023 = vmatpush1.msra.mxu0 %v55
    %1024 = vmatprep.subr.mxu0 0.0
    %1025 = vmatpush1.msra.mxu0 %v56
    %1026 = vmatprep.subr.mxu0 0.0
    %1027 = vmatpush1.msra.mxu0 %v57
    %1028 = vmatprep.subr.mxu0 0.0
    %1029 = vmatpush1.msra.mxu0 0.0
    %1030 = vmatprep.subr.mxu0 0.0
    %1031 = vmatpush1.msra.mxu0 0.0
    %1032 = vmatprep.subr.mxu0 0.0
    %1033 = vmatpush1.msra.mxu0 0.0
    %1034 = vmatprep.subr.mxu0 0.0
    %1035 = vmatpush1.msra.mxu0 0.0
    %1036 = vmatprep.subr.mxu0 0.0
    %1037 = vmatpush1.msra.mxu0 0.0
    %1038 = vmatprep.subr.mxu0 0.0
    %1039 = vmatpush1.msra.mxu0 0.0
    %1040 = vmatprep.subr.mxu0 0.0
    %1041 = vmatpush1.msra.mxu0 0.0
    %1042 = vmatprep.subr.mxu0 0.0
    %1043 = vmatpush1.msra.mxu0 0.0
    %1044 = vmatprep.subr.mxu0 0.0
    %1045 = vmatpush1.msra.mxu0 0.0
    %1046 = vmatprep.subr.mxu0 0.0
    %1047 = vmatpush1.msra.mxu0 0.0
    %1048 = vmatprep.subr.mxu0 0.0
    %1049 = vmatpush1.msra.mxu0 0.0
    %1050 = vmatprep.subr.mxu0 0.0
    %1051 = vmatpush1.msra.mxu0 0.0
    %1052 = vmatprep.subr.mxu0 0.0
    %1053 = vmatpush1.msra.mxu0 0.0
    %1054 = vmatprep.subr.mxu0 0.0
    %1055 = vmatpush1.msra.mxu0 0.0
    %1056 = vmatprep.subr.mxu0 0.0
    %1057 = vmatpush1.msra.mxu0 0.0
    %1058 = vmatprep.subr.mxu0 0.0
    %1059 = vmatpush1.msra.mxu0 0.0
    %1060 = vmatprep.subr.mxu0 0.0
    %1061 = vmatpush1.msra.mxu0 0.0
    %1062 = vmatprep.subr.mxu0 0.0
    %1063 = vmatpush1.msra.mxu0 0.0
    %1064 = vmatprep.subr.mxu0 0.0
    %1065 = vmatpush1.msra.mxu0 0.0
    %1066 = vmatprep.subr.mxu0 0.0
    %1067 = vmatpush1.msra.mxu0 0.0
    %1068 = vmatprep.subr.mxu0 0.0
    %1069 = vmatpush1.msra.mxu0 0.0
    %1070 = vmatprep.subr.mxu0 0.0
    %1071 = vmatpush1.msra.mxu0 0.0
    %1072 = vmatprep.subr.mxu0 0.0
    %1073 = vmatpush1.msra.mxu0 0.0
    %1074 = vmatprep.subr.mxu0 0.0
    %1075 = vmatpush1.msra.mxu0 0.0
    %1076 = vmatprep.mubr.f32.mxu0 0.0
    %1077 = vmatmul.mubr.f32.gmra.mrb[0].mxu0 %v1010
    %v1078 = vpop.f32.mrb[0].mxu0
    %v1079 = vadd.f32 %v175, %v1078
    %v1080 = vpop.f32.mrb[0].mxu0
    %1081 = vdwg.mxu0
    %v1082 = vxor.u32 %v1079, 2147483648
    %v1083 = vmul.f32 %v1082, 1.442695
    %v1084 = vpow.pop %v1083
    %v1085 = vadd.f32 %v1084, 1.0
    %v1086 = vrcp.pop %v1085
    %v1087 = vmul.f32 1.0, %v1086
    %v1088 = vtanh.pop %v1079
    %v1089 = vmul.f32 %v1087, %v891
    %1091 = vrot.lane.b32.xlu0 %v1088, 64
    %v1092 = vpop.permute.xlu0 %1091
    %v1094 = vmul.f32 %v1087, %v1092
    %1096 = vrot.lane.b32.xlu0 %v1094, 32
    %v1097 = vpop.permute.xlu0 %1096
    %v1099 = vadd.f32 %v1089, %v1097
    %v1100 = vtanh.pop %v1099
    %1102 = vrot.lane.b32.xlu0 %v1100, 64
    %v1103 = vpop.permute.xlu0 %1102
    %v1105 = vmul.f32 %v1087, %v1103
    %v1106 = vld [vmem:[%s0 + $0xa] sm:$0x3]
    %1107 = vrot.lane.b32.xlu0 %v999, 64
    %v1108 = vpop.permute.xlu0 %1107
    %v1110 = vsel %vm60, %v1106, %v1108
    %v1112 = vsel %vm68, %v1110, 0
    %1114 = vmatprep.subr.mxu0 0.0
    %1115 = vmatpush1.msra.mxu0 %v37
    %1116 = vmatprep.subr.mxu0 0.0
    %1117 = vmatpush1.msra.mxu0 %v38
    %1118 = vmatprep.subr.mxu0 0.0
    %1119 = vmatpush1.msra.mxu0 %v39
    %1120 = vmatprep.subr.mxu0 0.0
    %1121 = vmatpush1.msra.mxu0 %v40
    %1122 = vmatprep.subr.mxu0 0.0
    %1123 = vmatpush1.msra.mxu0 %v41
    %1124 = vmatprep.subr.mxu0 0.0
    %1125 = vmatpush1.msra.mxu0 %v42
    %1126 = vmatprep.subr.mxu0 0.0
    %1127 = vmatpush1.msra.mxu0 %v43
    %1128 = vmatprep.subr.mxu0 0.0
    %1129 = vmatpush1.msra.mxu0 %v44
    %1130 = vmatprep.subr.mxu0 0.0
    %1131 = vmatpush1.msra.mxu0 0.0
    %1132 = vmatprep.subr.mxu0 0.0
    %1133 = vmatpush1.msra.mxu0 0.0
    %1134 = vmatprep.subr.mxu0 0.0
    %1135 = vmatpush1.msra.mxu0 0.0
    %1136 = vmatprep.subr.mxu0 0.0
    %1137 = vmatpush1.msra.mxu0 0.0
    %1138 = vmatprep.subr.mxu0 0.0
    %1139 = vmatpush1.msra.mxu0 0.0
    %1140 = vmatprep.subr.mxu0 0.0
    %1141 = vmatpush1.msra.mxu0 0.0
    %1142 = vmatprep.subr.mxu0 0.0
    %1143 = vmatpush1.msra.mxu0 0.0
    %1144 = vmatprep.subr.mxu0 0.0
    %1145 = vmatpush1.msra.mxu0 0.0
    %1146 = vmatprep.subr.mxu0 0.0
    %1147 = vmatpush1.msra.mxu0 0.0
    %1148 = vmatprep.subr.mxu0 0.0
    %1149 = vmatpush1.msra.mxu0 0.0
    %1150 = vmatprep.subr.mxu0 0.0
    %1151 = vmatpush1.msra.mxu0 0.0
    %1152 = vmatprep.subr.mxu0 0.0
    %1153 = vmatpush1.msra.mxu0 0.0
    %1154 = vmatprep.subr.mxu0 0.0
    %1155 = vmatpush1.msra.mxu0 0.0
    %1156 = vmatprep.subr.mxu0 0.0
    %1157 = vmatpush1.msra.mxu0 0.0
    %1158 = vmatprep.subr.mxu0 0.0
    %1159 = vmatpush1.msra.mxu0 0.0
    %1160 = vmatprep.subr.mxu0 0.0
    %1161 = vmatpush1.msra.mxu0 0.0
    %1162 = vmatprep.subr.mxu0 0.0
    %1163 = vmatpush1.msra.mxu0 0.0
    %1164 = vmatprep.subr.mxu0 0.0
    %1165 = vmatpush1.msra.mxu0 0.0
    %1166 = vmatprep.subr.mxu0 0.0
    %1167 = vmatpush1.msra.mxu0 0.0
    %1168 = vmatprep.subr.mxu0 0.0
    %1169 = vmatpush1.msra.mxu0 0.0
    %1170 = vmatprep.subr.mxu0 0.0
    %1171 = vmatpush1.msra.mxu0 0.0
    %1172 = vmatprep.subr.mxu0 0.0
    %1173 = vmatpush1.msra.mxu0 0.0
    %1174 = vmatprep.subr.mxu0 0.0
    %1175 = vmatpush1.msra.mxu0 0.0
    %1176 = vmatprep.subr.mxu0 0.0
    %1177 = vmatpush1.msra.mxu0 0.0
    %1178 = vmatprep.mubr.f32.mxu0 0.0
    %1179 = vmatmul.mubr.f32.gmra.mrb[0].mxu0 %v1112
    %v1180 = vpop.f32.mrb[0].mxu0
    %v1181 = vadd.f32 %v66, %v1180
    %v1182 = vpop.f32.mrb[0].mxu0
    %1183 = vdwg.mxu0
    %v1184 = vxor.u32 %v1181, 2147483648
    %v1185 = vmul.f32 %v1184, 1.442695
    %v1186 = vpow.pop %v1185
    %v1187 = vadd.f32 %v1186, 1.0
    %v1188 = vrcp.pop %v1187
    %v1189 = vmul.f32 1.0, %v1188
    %v1190 = vtanh.pop %v1181
    %v1191 = vmul.f32 %v1189, %v993
    %1193 = vrot.lane.b32.xlu0 %v1190, 64
    %v1194 = vpop.permute.xlu0 %1193
    %v1196 = vmul.f32 %v1189, %v1194
    %1198 = vrot.lane.b32.xlu0 %v1196, 32
    %v1199 = vpop.permute.xlu0 %1198
    %v1201 = vadd.f32 %v1191, %v1199
    %v1202 = vtanh.pop %v1201
    %1204 = vrot.lane.b32.xlu0 %v1202, 64
    %v1205 = vpop.permute.xlu0 %1204
    %v1207 = vmul.f32 %v1189, %v1205
    %1209 = vrot.lane.b32.xlu0 %v1207, 32
    %v1210 = vpop.permute.xlu0 %1209
    %1213 = vrot.lane.b32.xlu0 %v1105, 64
    %v1214 = vpop.permute.xlu0 %1213
    %v1216 = vsel %vm60, %v1210, %v1214
    %v1218 = vsel %vm68, %v1216, 0
    %1220 = vmatprep.subr.mxu0 0.0
    %1221 = vmatpush1.msra.mxu0 %v50
    %1222 = vmatprep.subr.mxu0 0.0
    %1223 = vmatpush1.msra.mxu0 %v51
    %1224 = vmatprep.subr.mxu0 0.0
    %1225 = vmatpush1.msra.mxu0 %v52
    %1226 = vmatprep.subr.mxu0 0.0
    %1227 = vmatpush1.msra.mxu0 %v53
    %1228 = vmatprep.subr.mxu0 0.0
    %1229 = vmatpush1.msra.mxu0 %v54
    %1230 = vmatprep.subr.mxu0 0.0
    %1231 = vmatpush1.msra.mxu0 %v55
    %1232 = vmatprep.subr.mxu0 0.0
    %1233 = vmatpush1.msra.mxu0 %v56
    %1234 = vmatprep.subr.mxu0 0.0
    %1235 = vmatpush1.msra.mxu0 %v57
    %1236 = vmatprep.subr.mxu0 0.0
    %1237 = vmatpush1.msra.mxu0 0.0
    %1238 = vmatprep.subr.mxu0 0.0
    %1239 = vmatpush1.msra.mxu0 0.0
    %1240 = vmatprep.subr.mxu0 0.0
    %1241 = vmatpush1.msra.mxu0 0.0
    %1242 = vmatprep.subr.mxu0 0.0
    %1243 = vmatpush1.msra.mxu0 0.0
    %1244 = vmatprep.subr.mxu0 0.0
    %1245 = vmatpush1.msra.mxu0 0.0
    %1246 = vmatprep.subr.mxu0 0.0
    %1247 = vmatpush1.msra.mxu0 0.0
    %1248 = vmatprep.subr.mxu0 0.0
    %1249 = vmatpush1.msra.mxu0 0.0
    %1250 = vmatprep.subr.mxu0 0.0
    %1251 = vmatpush1.msra.mxu0 0.0
    %1252 = vmatprep.subr.mxu0 0.0
    %1253 = vmatpush1.msra.mxu0 0.0
    %1254 = vmatprep.subr.mxu0 0.0
    %1255 = vmatpush1.msra.mxu0 0.0
    %1256 = vmatprep.subr.mxu0 0.0
    %1257 = vmatpush1.msra.mxu0 0.0
    %1258 = vmatprep.subr.mxu0 0.0
    %1259 = vmatpush1.msra.mxu0 0.0
    %1260 = vmatprep.subr.mxu0 0.0
    %1261 = vmatpush1.msra.mxu0 0.0
    %1262 = vmatprep.subr.mxu0 0.0
    %1263 = vmatpush1.msra.mxu0 0.0
    %1264 = vmatprep.subr.mxu0 0.0
    %1265 = vmatpush1.msra.mxu0 0.0
    %1266 = vmatprep.subr.mxu0 0.0
    %1267 = vmatpush1.msra.mxu0 0.0
    %1268 = vmatprep.subr.mxu0 0.0
    %1269 = vmatpush1.msra.mxu0 0.0
    %1270 = vmatprep.subr.mxu0 0.0
    %1271 = vmatpush1.msra.mxu0 0.0
    %1272 = vmatprep.subr.mxu0 0.0
    %1273 = vmatpush1.msra.mxu0 0.0
    %1274 = vmatprep.subr.mxu0 0.0
    %1275 = vmatpush1.msra.mxu0 0.0
    %1276 = vmatprep.subr.mxu0 0.0
    %1277 = vmatpush1.msra.mxu0 0.0
    %1278 = vmatprep.subr.mxu0 0.0
    %1279 = vmatpush1.msra.mxu0 0.0
    %1280 = vmatprep.subr.mxu0 0.0
    %1281 = vmatpush1.msra.mxu0 0.0
    %1282 = vmatprep.subr.mxu0 0.0
    %1283 = vmatpush1.msra.mxu0 0.0
    %1284 = vmatprep.mubr.f32.mxu0 0.0
    %1285 = vmatmul.mubr.f32.gmra.mrb[0].mxu0 %v1218
    %v1286 = vpop.f32.mrb[0].mxu0
    %v1287 = vadd.f32 %v175, %v1286
    %v1288 = vpop.f32.mrb[0].mxu0
    %1289 = vdwg.mxu0
    %v1290 = vxor.u32 %v1287, 2147483648
    %v1291 = vmul.f32 %v1290, 1.442695
    %v1292 = vpow.pop %v1291
    %v1293 = vadd.f32 %v1292, 1.0
    %v1294 = vrcp.pop %v1293
    %v1295 = vmul.f32 1.0, %v1294
    %v1296 = vtanh.pop %v1287
    %v1297 = vmul.f32 %v1295, %v1099
    %1299 = vrot.lane.b32.xlu0 %v1296, 64
    %v1300 = vpop.permute.xlu0 %1299
    %v1302 = vmul.f32 %v1295, %v1300
    %1304 = vrot.lane.b32.xlu0 %v1302, 32
    %v1305 = vpop.permute.xlu0 %1304
    %v1307 = vadd.f32 %v1297, %v1305
    %v1308 = vtanh.pop %v1307
    %1310 = vrot.lane.b32.xlu0 %v1308, 64
    %v1311 = vpop.permute.xlu0 %1310
    %v1313 = vmul.f32 %v1295, %v1311
    %v1314 = vld [vmem:[%s0 + $0xc] sm:$0x3]
    %1315 = vrot.lane.b32.xlu0 %v1207, 64
    %v1316 = vpop.permute.xlu0 %1315
    %v1318 = vsel %vm60, %v1314, %v1316
    %v1320 = vsel %vm68, %v1318, 0
    %1322 = vmatprep.subr.mxu0 0.0
    %1323 = vmatpush1.msra.mxu0 %v37
    %1324 = vmatprep.subr.mxu0 0.0
    %1325 = vmatpush1.msra.mxu0 %v38
    %1326 = vmatprep.subr.mxu0 0.0
    %1327 = vmatpush1.msra.mxu0 %v39
    %1328 = vmatprep.subr.mxu0 0.0
    %1329 = vmatpush1.msra.mxu0 %v40
    %1330 = vmatprep.subr.mxu0 0.0
    %1331 = vmatpush1.msra.mxu0 %v41
    %1332 = vmatprep.subr.mxu0 0.0
    %1333 = vmatpush1.msra.mxu0 %v42
    %1334 = vmatprep.subr.mxu0 0.0
    %1335 = vmatpush1.msra.mxu0 %v43
    %1336 = vmatprep.subr.mxu0 0.0
    %1337 = vmatpush1.msra.mxu0 %v44
    %1338 = vmatprep.subr.mxu0 0.0
    %1339 = vmatpush1.msra.mxu0 0.0
    %1340 = vmatprep.subr.mxu0 0.0
    %1341 = vmatpush1.msra.mxu0 0.0
    %1342 = vmatprep.subr.mxu0 0.0
    %1343 = vmatpush1.msra.mxu0 0.0
    %1344 = vmatprep.subr.mxu0 0.0
    %1345 = vmatpush1.msra.mxu0 0.0
    %1346 = vmatprep.subr.mxu0 0.0
    %1347 = vmatpush1.msra.mxu0 0.0
    %1348 = vmatprep.subr.mxu0 0.0
    %1349 = vmatpush1.msra.mxu0 0.0
    %1350 = vmatprep.subr.mxu0 0.0
    %1351 = vmatpush1.msra.mxu0 0.0
    %1352 = vmatprep.subr.mxu0 0.0
    %1353 = vmatpush1.msra.mxu0 0.0
    %1354 = vmatprep.subr.mxu0 0.0
    %1355 = vmatpush1.msra.mxu0 0.0
    %1356 = vmatprep.subr.mxu0 0.0
    %1357 = vmatpush1.msra.mxu0 0.0
    %1358 = vmatprep.subr.mxu0 0.0
    %1359 = vmatpush1.msra.mxu0 0.0
    %1360 = vmatprep.subr.mxu0 0.0
    %1361 = vmatpush1.msra.mxu0 0.0
    %1362 = vmatprep.subr.mxu0 0.0
    %1363 = vmatpush1.msra.mxu0 0.0
    %1364 = vmatprep.subr.mxu0 0.0
    %1365 = vmatpush1.msra.mxu0 0.0
    %1366 = vmatprep.subr.mxu0 0.0
    %1367 = vmatpush1.msra.mxu0 0.0
    %1368 = vmatprep.subr.mxu0 0.0
    %1369 = vmatpush1.msra.mxu0 0.0
    %1370 = vmatprep.subr.mxu0 0.0
    %1371 = vmatpush1.msra.mxu0 0.0
    %1372 = vmatprep.subr.mxu0 0.0
    %1373 = vmatpush1.msra.mxu0 0.0
    %1374 = vmatprep.subr.mxu0 0.0
    %1375 = vmatpush1.msra.mxu0 0.0
    %1376 = vmatprep.subr.mxu0 0.0
    %1377 = vmatpush1.msra.mxu0 0.0
    %1378 = vmatprep.subr.mxu0 0.0
    %1379 = vmatpush1.msra.mxu0 0.0
    %1380 = vmatprep.subr.mxu0 0.0
    %1381 = vmatpush1.msra.mxu0 0.0
    %1382 = vmatprep.subr.mxu0 0.0
    %1383 = vmatpush1.msra.mxu0 0.0
    %1384 = vmatprep.subr.mxu0 0.0
    %1385 = vmatpush1.msra.mxu0 0.0
    %1386 = vmatprep.mubr.f32.mxu0 0.0
    %1387 = vmatmul.mubr.f32.gmra.mrb[0].mxu0 %v1320
    %v1388 = vpop.f32.mrb[0].mxu0
    %v1389 = vadd.f32 %v66, %v1388
    %v1390 = vpop.f32.mrb[0].mxu0
    %1391 = vdwg.mxu0
    %v1392 = vxor.u32 %v1389, 2147483648
    %v1393 = vmul.f32 %v1392, 1.442695
    %v1394 = vpow.pop %v1393
    %v1395 = vadd.f32 %v1394, 1.0
    %v1396 = vrcp.pop %v1395
    %v1397 = vmul.f32 1.0, %v1396
    %v1398 = vtanh.pop %v1389
    %v1399 = vmul.f32 %v1397, %v1201
    %1401 = vrot.lane.b32.xlu0 %v1398, 64
    %v1402 = vpop.permute.xlu0 %1401
    %v1404 = vmul.f32 %v1397, %v1402
    %1406 = vrot.lane.b32.xlu0 %v1404, 32
    %v1407 = vpop.permute.xlu0 %1406
    %v1409 = vadd.f32 %v1399, %v1407
    %v1410 = vtanh.pop %v1409
    %1412 = vrot.lane.b32.xlu0 %v1410, 64
    %v1413 = vpop.permute.xlu0 %1412
    %v1415 = vmul.f32 %v1397, %v1413
    %1417 = vrot.lane.b32.xlu0 %v1415, 32
    %v1418 = vpop.permute.xlu0 %1417
    %1421 = vrot.lane.b32.xlu0 %v1313, 64
    %v1422 = vpop.permute.xlu0 %1421
    %v1424 = vsel %vm60, %v1418, %v1422
    %v1426 = vsel %vm68, %v1424, 0
    %1428 = vmatprep.subr.mxu0 0.0
    %1429 = vmatpush1.msra.mxu0 %v50
    %1430 = vmatprep.subr.mxu0 0.0
    %1431 = vmatpush1.msra.mxu0 %v51
    %1432 = vmatprep.subr.mxu0 0.0
    %1433 = vmatpush1.msra.mxu0 %v52
    %1434 = vmatprep.subr.mxu0 0.0
    %1435 = vmatpush1.msra.mxu0 %v53
    %1436 = vmatprep.subr.mxu0 0.0
    %1437 = vmatpush1.msra.mxu0 %v54
    %1438 = vmatprep.subr.mxu0 0.0
    %1439 = vmatpush1.msra.mxu0 %v55
    %1440 = vmatprep.subr.mxu0 0.0
    %1441 = vmatpush1.msra.mxu0 %v56
    %1442 = vmatprep.subr.mxu0 0.0
    %1443 = vmatpush1.msra.mxu0 %v57
    %1444 = vmatprep.subr.mxu0 0.0
    %1445 = vmatpush1.msra.mxu0 0.0
    %1446 = vmatprep.subr.mxu0 0.0
    %1447 = vmatpush1.msra.mxu0 0.0
    %1448 = vmatprep.subr.mxu0 0.0
    %1449 = vmatpush1.msra.mxu0 0.0
    %1450 = vmatprep.subr.mxu0 0.0
    %1451 = vmatpush1.msra.mxu0 0.0
    %1452 = vmatprep.subr.mxu0 0.0
    %1453 = vmatpush1.msra.mxu0 0.0
    %1454 = vmatprep.subr.mxu0 0.0
    %1455 = vmatpush1.msra.mxu0 0.0
    %1456 = vmatprep.subr.mxu0 0.0
    %1457 = vmatpush1.msra.mxu0 0.0
    %1458 = vmatprep.subr.mxu0 0.0
    %1459 = vmatpush1.msra.mxu0 0.0
    %1460 = vmatprep.subr.mxu0 0.0
    %1461 = vmatpush1.msra.mxu0 0.0
    %1462 = vmatprep.subr.mxu0 0.0
    %1463 = vmatpush1.msra.mxu0 0.0
    %1464 = vmatprep.subr.mxu0 0.0
    %1465 = vmatpush1.msra.mxu0 0.0
    %1466 = vmatprep.subr.mxu0 0.0
    %1467 = vmatpush1.msra.mxu0 0.0
    %1468 = vmatprep.subr.mxu0 0.0
    %1469 = vmatpush1.msra.mxu0 0.0
    %1470 = vmatprep.subr.mxu0 0.0
    %1471 = vmatpush1.msra.mxu0 0.0
    %1472 = vmatprep.subr.mxu0 0.0
    %1473 = vmatpush1.msra.mxu0 0.0
    %1474 = vmatprep.subr.mxu0 0.0
    %1475 = vmatpush1.msra.mxu0 0.0
    %1476 = vmatprep.subr.mxu0 0.0
    %1477 = vmatpush1.msra.mxu0 0.0
    %1478 = vmatprep.subr.mxu0 0.0
    %1479 = vmatpush1.msra.mxu0 0.0
    %1480 = vmatprep.subr.mxu0 0.0
    %1481 = vmatpush1.msra.mxu0 0.0
    %1482 = vmatprep.subr.mxu0 0.0
    %1483 = vmatpush1.msra.mxu0 0.0
    %1484 = vmatprep.subr.mxu0 0.0
    %1485 = vmatpush1.msra.mxu0 0.0
    %1486 = vmatprep.subr.mxu0 0.0
    %1487 = vmatpush1.msra.mxu0 0.0
    %1488 = vmatprep.subr.mxu0 0.0
    %1489 = vmatpush1.msra.mxu0 0.0
    %1490 = vmatprep.subr.mxu0 0.0
    %1491 = vmatpush1.msra.mxu0 0.0
    %1492 = vmatprep.mubr.f32.mxu0 0.0
    %1493 = vmatmul.mubr.f32.gmra.mrb[0].mxu0 %v1426
    %v1494 = vpop.f32.mrb[0].mxu0
    %v1495 = vadd.f32 %v175, %v1494
    %v1496 = vpop.f32.mrb[0].mxu0
    %1497 = vdwg.mxu0
    %v1498 = vxor.u32 %v1495, 2147483648
    %v1499 = vmul.f32 %v1498, 1.442695
    %v1500 = vpow.pop %v1499
    %v1501 = vadd.f32 %v1500, 1.0
    %v1502 = vrcp.pop %v1501
    %v1503 = vmul.f32 1.0, %v1502
    %v1504 = vtanh.pop %v1495
    %v1505 = vmul.f32 %v1503, %v1307
    %1507 = vrot.lane.b32.xlu0 %v1504, 64
    %v1508 = vpop.permute.xlu0 %1507
    %v1510 = vmul.f32 %v1503, %v1508
    %1512 = vrot.lane.b32.xlu0 %v1510, 32
    %v1513 = vpop.permute.xlu0 %1512
    %v1515 = vadd.f32 %v1505, %v1513
    %v1516 = vtanh.pop %v1515
    %1518 = vrot.lane.b32.xlu0 %v1516, 64
    %v1519 = vpop.permute.xlu0 %1518
    %v1521 = vmul.f32 %v1503, %v1519
    %v1522 = vld [vmem:[%s0 + $0xe] sm:$0x3]
    %1523 = vrot.lane.b32.xlu0 %v1415, 64
    %v1524 = vpop.permute.xlu0 %1523
    %v1526 = vsel %vm60, %v1522, %v1524
    %v1528 = vsel %vm68, %v1526, 0
    %1530 = vmatprep.subr.mxu0 0.0
    %1531 = vmatpush1.msra.mxu0 %v37
    %1532 = vmatprep.subr.mxu0 0.0
    %1533 = vmatpush1.msra.mxu0 %v38
    %1534 = vmatprep.subr.mxu0 0.0
    %1535 = vmatpush1.msra.mxu0 %v39
    %1536 = vmatprep.subr.mxu0 0.0
    %1537 = vmatpush1.msra.mxu0 %v40
    %1538 = vmatprep.subr.mxu0 0.0
    %1539 = vmatpush1.msra.mxu0 %v41
    %1540 = vmatprep.subr.mxu0 0.0
    %1541 = vmatpush1.msra.mxu0 %v42
    %1542 = vmatprep.subr.mxu0 0.0
    %1543 = vmatpush1.msra.mxu0 %v43
    %1544 = vmatprep.subr.mxu0 0.0
    %1545 = vmatpush1.msra.mxu0 %v44
    %1546 = vmatprep.subr.mxu0 0.0
    %1547 = vmatpush1.msra.mxu0 0.0
    %1548 = vmatprep.subr.mxu0 0.0
    %1549 = vmatpush1.msra.mxu0 0.0
    %1550 = vmatprep.subr.mxu0 0.0
    %1551 = vmatpush1.msra.mxu0 0.0
    %1552 = vmatprep.subr.mxu0 0.0
    %1553 = vmatpush1.msra.mxu0 0.0
    %1554 = vmatprep.subr.mxu0 0.0
    %1555 = vmatpush1.msra.mxu0 0.0
    %1556 = vmatprep.subr.mxu0 0.0
    %1557 = vmatpush1.msra.mxu0 0.0
    %1558 = vmatprep.subr.mxu0 0.0
    %1559 = vmatpush1.msra.mxu0 0.0
    %1560 = vmatprep.subr.mxu0 0.0
    %1561 = vmatpush1.msra.mxu0 0.0
    %1562 = vmatprep.subr.mxu0 0.0
    %1563 = vmatpush1.msra.mxu0 0.0
    %1564 = vmatprep.subr.mxu0 0.0
    %1565 = vmatpush1.msra.mxu0 0.0
    %1566 = vmatprep.subr.mxu0 0.0
    %1567 = vmatpush1.msra.mxu0 0.0
    %1568 = vmatprep.subr.mxu0 0.0
    %1569 = vmatpush1.msra.mxu0 0.0
    %1570 = vmatprep.subr.mxu0 0.0
    %1571 = vmatpush1.msra.mxu0 0.0
    %1572 = vmatprep.subr.mxu0 0.0
    %1573 = vmatpush1.msra.mxu0 0.0
    %1574 = vmatprep.subr.mxu0 0.0
    %1575 = vmatpush1.msra.mxu0 0.0
    %1576 = vmatprep.subr.mxu0 0.0
    %1577 = vmatpush1.msra.mxu0 0.0
    %1578 = vmatprep.subr.mxu0 0.0
    %1579 = vmatpush1.msra.mxu0 0.0
    %1580 = vmatprep.subr.mxu0 0.0
    %1581 = vmatpush1.msra.mxu0 0.0
    %1582 = vmatprep.subr.mxu0 0.0
    %1583 = vmatpush1.msra.mxu0 0.0
    %1584 = vmatprep.subr.mxu0 0.0
    %1585 = vmatpush1.msra.mxu0 0.0
    %1586 = vmatprep.subr.mxu0 0.0
    %1587 = vmatpush1.msra.mxu0 0.0
    %1588 = vmatprep.subr.mxu0 0.0
    %1589 = vmatpush1.msra.mxu0 0.0
    %1590 = vmatprep.subr.mxu0 0.0
    %1591 = vmatpush1.msra.mxu0 0.0
    %1592 = vmatprep.subr.mxu0 0.0
    %1593 = vmatpush1.msra.mxu0 0.0
    %1594 = vmatprep.mubr.f32.mxu0 0.0
    %1595 = vmatmul.mubr.f32.gmra.mrb[0].mxu0 %v1528
    %v1596 = vpop.f32.mrb[0].mxu0
    %v1597 = vadd.f32 %v66, %v1596
    %v1598 = vpop.f32.mrb[0].mxu0
    %1599 = vdwg.mxu0
    %v1600 = vxor.u32 %v1597, 2147483648
    %v1601 = vmul.f32 %v1600, 1.442695
    %v1602 = vpow.pop %v1601
    %v1603 = vadd.f32 %v1602, 1.0
    %v1604 = vrcp.pop %v1603
    %v1605 = vmul.f32 1.0, %v1604
    %v1606 = vtanh.pop %v1597
    %v1607 = vmul.f32 %v1605, %v1409
    %1609 = vrot.lane.b32.xlu0 %v1606, 64
    %v1610 = vpop.permute.xlu0 %1609
    %v1612 = vmul.f32 %v1605, %v1610
    %1614 = vrot.lane.b32.xlu0 %v1612, 32
    %v1615 = vpop.permute.xlu0 %1614
    %v1617 = vadd.f32 %v1607, %v1615
    %v1618 = vtanh.pop %v1617
    %1620 = vrot.lane.b32.xlu0 %v1618, 64
    %v1621 = vpop.permute.xlu0 %1620
    %v1623 = vmul.f32 %v1605, %v1621
    %1625 = vrot.lane.b32.xlu0 %v1623, 32
    %v1626 = vpop.permute.xlu0 %1625
    %1629 = vrot.lane.b32.xlu0 %v1521, 64
    %v1630 = vpop.permute.xlu0 %1629
    %v1632 = vsel %vm60, %v1626, %v1630
    %v1634 = vsel %vm68, %v1632, 0
    %1636 = vmatprep.subr.mxu0 0.0
    %1637 = vmatpush1.msra.mxu0 %v50
    %1638 = vmatprep.subr.mxu0 0.0
    %1639 = vmatpush1.msra.mxu0 %v51
    %1640 = vmatprep.subr.mxu0 0.0
    %1641 = vmatpush1.msra.mxu0 %v52
    %1642 = vmatprep.subr.mxu0 0.0
    %1643 = vmatpush1.msra.mxu0 %v53
    %1644 = vmatprep.subr.mxu0 0.0
    %1645 = vmatpush1.msra.mxu0 %v54
    %1646 = vmatprep.subr.mxu0 0.0
    %1647 = vmatpush1.msra.mxu0 %v55
    %1648 = vmatprep.subr.mxu0 0.0
    %1649 = vmatpush1.msra.mxu0 %v56
    %1650 = vmatprep.subr.mxu0 0.0
    %1651 = vmatpush1.msra.mxu0 %v57
    %1652 = vmatprep.subr.mxu0 0.0
    %1653 = vmatpush1.msra.mxu0 0.0
    %1654 = vmatprep.subr.mxu0 0.0
    %1655 = vmatpush1.msra.mxu0 0.0
    %1656 = vmatprep.subr.mxu0 0.0
    %1657 = vmatpush1.msra.mxu0 0.0
    %1658 = vmatprep.subr.mxu0 0.0
    %1659 = vmatpush1.msra.mxu0 0.0
    %1660 = vmatprep.subr.mxu0 0.0
    %1661 = vmatpush1.msra.mxu0 0.0
    %1662 = vmatprep.subr.mxu0 0.0
    %1663 = vmatpush1.msra.mxu0 0.0
    %1664 = vmatprep.subr.mxu0 0.0
    %1665 = vmatpush1.msra.mxu0 0.0
    %1666 = vmatprep.subr.mxu0 0.0
    %1667 = vmatpush1.msra.mxu0 0.0
    %1668 = vmatprep.subr.mxu0 0.0
    %1669 = vmatpush1.msra.mxu0 0.0
    %1670 = vmatprep.subr.mxu0 0.0
    %1671 = vmatpush1.msra.mxu0 0.0
    %1672 = vmatprep.subr.mxu0 0.0
    %1673 = vmatpush1.msra.mxu0 0.0
    %1674 = vmatprep.subr.mxu0 0.0
    %1675 = vmatpush1.msra.mxu0 0.0
    %1676 = vmatprep.subr.mxu0 0.0
    %1677 = vmatpush1.msra.mxu0 0.0
    %1678 = vmatprep.subr.mxu0 0.0
    %1679 = vmatpush1.msra.mxu0 0.0
    %1680 = vmatprep.subr.mxu0 0.0
    %1681 = vmatpush1.msra.mxu0 0.0
    %1682 = vmatprep.subr.mxu0 0.0
    %1683 = vmatpush1.msra.mxu0 0.0
    %1684 = vmatprep.subr.mxu0 0.0
    %1685 = vmatpush1.msra.mxu0 0.0
    %1686 = vmatprep.subr.mxu0 0.0
    %1687 = vmatpush1.msra.mxu0 0.0
    %1688 = vmatprep.subr.mxu0 0.0
    %1689 = vmatpush1.msra.mxu0 0.0
    %1690 = vmatprep.subr.mxu0 0.0
    %1691 = vmatpush1.msra.mxu0 0.0
    %1692 = vmatprep.subr.mxu0 0.0
    %1693 = vmatpush1.msra.mxu0 0.0
    %1694 = vmatprep.subr.mxu0 0.0
    %1695 = vmatpush1.msra.mxu0 0.0
    %1696 = vmatprep.subr.mxu0 0.0
    %1697 = vmatpush1.msra.mxu0 0.0
    %1698 = vmatprep.subr.mxu0 0.0
    %1699 = vmatpush1.msra.mxu0 0.0
    %1700 = vmatprep.mubr.f32.mxu0 0.0
    %1701 = vmatmul.mubr.f32.gmra.mrb[0].mxu0 %v1634
    %v1702 = vpop.f32.mrb[0].mxu0
    %v1703 = vadd.f32 %v175, %v1702
    %v1704 = vpop.f32.mrb[0].mxu0
    %1705 = vdwg.mxu0
    %v1706 = vxor.u32 %v1703, 2147483648
    %v1707 = vmul.f32 %v1706, 1.442695
    %v1708 = vpow.pop %v1707
    %v1709 = vadd.f32 %v1708, 1.0
    %v1710 = vrcp.pop %v1709
    %v1711 = vmul.f32 1.0, %v1710
    %v1712 = vtanh.pop %v1703
    %v1713 = vmul.f32 %v1711, %v1515
    %1715 = vrot.lane.b32.xlu0 %v1712, 64
    %v1716 = vpop.permute.xlu0 %1715
    %v1718 = vmul.f32 %v1711, %v1716
    %1720 = vrot.lane.b32.xlu0 %v1718, 32
    %v1721 = vpop.permute.xlu0 %1720
    %v1723 = vadd.f32 %v1713, %v1721
    %v1724 = vtanh.pop %v1723
    %1726 = vrot.lane.b32.xlu0 %v1724, 64
    %v1727 = vpop.permute.xlu0 %1726
    %v1729 = vmul.f32 %v1711, %v1727
    %v1730 = vsel %vm60, %v1626, 0
    %1732 = vmatprep.subr.mxu0 0.0
    %1733 = vmatpush1.msra.mxu0 %v41
    %1734 = vmatprep.subr.mxu0 0.0
    %1735 = vmatpush1.msra.mxu0 %v42
    %1736 = vmatprep.subr.mxu0 0.0
    %1737 = vmatpush1.msra.mxu0 %v43
    %1738 = vmatprep.subr.mxu0 0.0
    %1739 = vmatpush1.msra.mxu0 %v44
    %1740 = vmatprep.subr.mxu0 0.0
    %1741 = vmatpush1.msra.mxu0 0.0
    %1742 = vmatprep.subr.mxu0 0.0
    %1743 = vmatpush1.msra.mxu0 0.0
    %1744 = vmatprep.subr.mxu0 0.0
    %1745 = vmatpush1.msra.mxu0 0.0
    %1746 = vmatprep.subr.mxu0 0.0
    %1747 = vmatpush1.msra.mxu0 0.0
    %1748 = vmatprep.subr.mxu0 0.0
    %1749 = vmatpush1.msra.mxu0 0.0
    %1750 = vmatprep.subr.mxu0 0.0
    %1751 = vmatpush1.msra.mxu0 0.0
    %1752 = vmatprep.subr.mxu0 0.0
    %1753 = vmatpush1.msra.mxu0 0.0
    %1754 = vmatprep.subr.mxu0 0.0
    %1755 = vmatpush1.msra.mxu0 0.0
    %1756 = vmatprep.subr.mxu0 0.0
    %1757 = vmatpush1.msra.mxu0 0.0
    %1758 = vmatprep.subr.mxu0 0.0
    %1759 = vmatpush1.msra.mxu0 0.0
    %1760 = vmatprep.subr.mxu0 0.0
    %1761 = vmatpush1.msra.mxu0 0.0
    %1762 = vmatprep.subr.mxu0 0.0
    %1763 = vmatpush1.msra.mxu0 0.0
    %1764 = vmatprep.subr.mxu0 0.0
    %1765 = vmatpush1.msra.mxu0 0.0
    %1766 = vmatprep.subr.mxu0 0.0
    %1767 = vmatpush1.msra.mxu0 0.0
    %1768 = vmatprep.subr.mxu0 0.0
    %1769 = vmatpush1.msra.mxu0 0.0
    %1770 = vmatprep.subr.mxu0 0.0
    %1771 = vmatpush1.msra.mxu0 0.0
    %1772 = vmatprep.subr.mxu0 0.0
    %1773 = vmatpush1.msra.mxu0 0.0
    %1774 = vmatprep.subr.mxu0 0.0
    %1775 = vmatpush1.msra.mxu0 0.0
    %1776 = vmatprep.subr.mxu0 0.0
    %1777 = vmatpush1.msra.mxu0 0.0
    %1778 = vmatprep.subr.mxu0 0.0
    %1779 = vmatpush1.msra.mxu0 0.0
    %1780 = vmatprep.subr.mxu0 0.0
    %1781 = vmatpush1.msra.mxu0 0.0
    %1782 = vmatprep.subr.mxu0 0.0
    %1783 = vmatpush1.msra.mxu0 0.0
    %1784 = vmatprep.subr.mxu0 0.0
    %1785 = vmatpush1.msra.mxu0 0.0
    %1786 = vmatprep.subr.mxu0 0.0
    %1787 = vmatpush1.msra.mxu0 0.0
    %1788 = vmatprep.subr.mxu0 0.0
    %1789 = vmatpush1.msra.mxu0 0.0
    %1790 = vmatprep.subr.mxu0 0.0
    %1791 = vmatpush1.msra.mxu0 0.0
    %1792 = vmatprep.subr.mxu0 0.0
    %1793 = vmatpush1.msra.mxu0 0.0
    %1794 = vmatprep.subr.mxu0 0.0
    %1795 = vmatpush1.msra.mxu0 0.0
    %1796 = vmatprep.mubr.f32.mxu0 0.0
    %1797 = vmatmul.mubr.f32.gmra.mrb[0].mxu0 %v1730
    %v1798 = vpop.f32.mrb[0].mxu0
    %v1799 = vadd.f32 %v66, %v1798
    %v1800 = vpop.f32.mrb[0].mxu0
    %1801 = vdwg.mxu0
    %v1802 = vxor.u32 %v1799, 2147483648
    %v1803 = vmul.f32 %v1802, 1.442695
    %v1804 = vpow.pop %v1803
    %v1805 = vadd.f32 %v1804, 1.0
    %v1806 = vrcp.pop %v1805
    %v1807 = vmul.f32 1.0, %v1806
    %v1808 = vtanh.pop %v1799
    %v1809 = vmul.f32 %v1807, %v1617
    %1811 = vrot.lane.b32.xlu0 %v1808, 64
    %v1812 = vpop.permute.xlu0 %1811
    %v1814 = vmul.f32 %v1807, %v1812
    %1816 = vrot.lane.b32.xlu0 %v1814, 32
    %v1817 = vpop.permute.xlu0 %1816
    %v1819 = vadd.f32 %v1809, %v1817
    %v1820 = vtanh.pop %v1819
    %1822 = vrot.lane.b32.xlu0 %v1820, 64
    %v1823 = vpop.permute.xlu0 %1822
    %v1825 = vmul.f32 %v1807, %v1823
    %v1826 = vld [vmem:[%s1] sm:$0x3]
    %1828 = vrot.lane.b32.xlu0 %v1825, 64
    %v1829 = vpop.permute.xlu0 %1828
    %1832 = vrot.lane.b32.xlu0 %v1729, 96
    %v1833 = vpop.permute.xlu0 %1832
    %v1835 = vsel %vm60, %v1826, %v1829
    %v1836 = vsel %vm68, %v1835, %v1833
    %vm1837 = vcmask 785408
    %v1839 = vsel %vm1837, %v1836, 0
    %1841 = vmatprep.subr.mxu0 0.0
    %1842 = vmatpush1.msra.mxu0 %v46
    %1843 = vmatprep.subr.mxu0 0.0
    %1844 = vmatpush1.msra.mxu0 %v47
    %1845 = vmatprep.subr.mxu0 0.0
    %1846 = vmatpush1.msra.mxu0 %v48
    %1847 = vmatprep.subr.mxu0 0.0
    %1848 = vmatpush1.msra.mxu0 %v49
    %1849 = vmatprep.subr.mxu0 0.0
    %1850 = vmatpush1.msra.mxu0 %v50
    %1851 = vmatprep.subr.mxu0 0.0
    %1852 = vmatpush1.msra.mxu0 %v51
    %1853 = vmatprep.subr.mxu0 0.0
    %1854 = vmatpush1.msra.mxu0 %v52
    %1855 = vmatprep.subr.mxu0 0.0
    %1856 = vmatpush1.msra.mxu0 %v53
    %1857 = vmatprep.subr.mxu0 0.0
    %1858 = vmatpush1.msra.mxu0 %v54
    %1859 = vmatprep.subr.mxu0 0.0
    %1860 = vmatpush1.msra.mxu0 %v55
    %1861 = vmatprep.subr.mxu0 0.0
    %1862 = vmatpush1.msra.mxu0 %v56
    %1863 = vmatprep.subr.mxu0 0.0
    %1864 = vmatpush1.msra.mxu0 %v57
    %1865 = vmatprep.subr.mxu0 0.0
    %1866 = vmatpush1.msra.mxu0 0.0
    %1867 = vmatprep.subr.mxu0 0.0
    %1868 = vmatpush1.msra.mxu0 0.0
    %1869 = vmatprep.subr.mxu0 0.0
    %1870 = vmatpush1.msra.mxu0 0.0
    %1871 = vmatprep.subr.mxu0 0.0
    %1872 = vmatpush1.msra.mxu0 0.0
    %1873 = vmatprep.subr.mxu0 0.0
    %1874 = vmatpush1.msra.mxu0 0.0
    %1875 = vmatprep.subr.mxu0 0.0
    %1876 = vmatpush1.msra.mxu0 0.0
    %1877 = vmatprep.subr.mxu0 0.0
    %1878 = vmatpush1.msra.mxu0 0.0
    %1879 = vmatprep.subr.mxu0 0.0
    %1880 = vmatpush1.msra.mxu0 0.0
    %1881 = vmatprep.subr.mxu0 0.0
    %1882 = vmatpush1.msra.mxu0 0.0
    %1883 = vmatprep.subr.mxu0 0.0
    %1884 = vmatpush1.msra.mxu0 0.0
    %1885 = vmatprep.subr.mxu0 0.0
    %1886 = vmatpush1.msra.mxu0 0.0
    %1887 = vmatprep.subr.mxu0 0.0
    %1888 = vmatpush1.msra.mxu0 0.0
    %1889 = vmatprep.subr.mxu0 0.0
    %1890 = vmatpush1.msra.mxu0 0.0
    %1891 = vmatprep.subr.mxu0 0.0
    %1892 = vmatpush1.msra.mxu0 0.0
    %1893 = vmatprep.subr.mxu0 0.0
    %1894 = vmatpush1.msra.mxu0 0.0
    %1895 = vmatprep.subr.mxu0 0.0
    %1896 = vmatpush1.msra.mxu0 0.0
    %1897 = vmatprep.subr.mxu0 0.0
    %1898 = vmatpush1.msra.mxu0 0.0
    %1899 = vmatprep.subr.mxu0 0.0
    %1900 = vmatpush1.msra.mxu0 0.0
    %1901 = vmatprep.subr.mxu0 0.0
    %1902 = vmatpush1.msra.mxu0 0.0
    %1903 = vmatprep.subr.mxu0 0.0
    %1904 = vmatpush1.msra.mxu0 0.0
    %1905 = vmatprep.mubr.f32.mxu0 0.0
    %1906 = vmatmul.mubr.f32.gmra.mrb[0].mxu0 %v1839
    %v1907 = vpop.f32.mrb[0].mxu0
    %v1908 = vadd.f32 %v175, %v1907
    %v1909 = vpop.f32.mrb[0].mxu0
    %1910 = vdwg.mxu0
    %v1911 = vxor.u32 %v1908, 2147483648
    %v1912 = vmul.f32 %v1911, 1.442695
    %v1913 = vpow.pop %v1912
    %v1914 = vadd.f32 %v1913, 1.0
    %v1915 = vrcp.pop %v1914
    %v1916 = vmul.f32 1.0, %v1915
    %v1917 = vtanh.pop %v1908
    %v1918 = vmul.f32 %v1916, %v1723
    %1920 = vrot.lane.b32.xlu0 %v1917, 64
    %v1921 = vpop.permute.xlu0 %1920
    %v1923 = vmul.f32 %v1916, %v1921
    %1925 = vrot.lane.b32.xlu0 %v1923, 32
    %v1926 = vpop.permute.xlu0 %1925
    %v1928 = vadd.f32 %v1918, %v1926
    %v1929 = vtanh.pop %v1928
    %1931 = vrot.lane.b32.xlu0 %v1929, 64
    %v1932 = vpop.permute.xlu0 %1931
    %v1934 = vmul.f32 %v1916, %v1932
    %1935 = vrot.lane.b32.xlu0 %v1825, 32
    %v1936 = vpop.permute.xlu0 %1935
    %v1937 = vsel %vm60, %v1936, 0
    %1939 = vmatprep.subr.mxu0 0.0
    %1940 = vmatpush1.msra.mxu0 %v41
    %1941 = vmatprep.subr.mxu0 0.0
    %1942 = vmatpush1.msra.mxu0 %v42
    %1943 = vmatprep.subr.mxu0 0.0
    %1944 = vmatpush1.msra.mxu0 %v43
    %1945 = vmatprep.subr.mxu0 0.0
    %1946 = vmatpush1.msra.mxu0 %v44
    %1947 = vmatprep.subr.mxu0 0.0
    %1948 = vmatpush1.msra.mxu0 0.0
    %1949 = vmatprep.subr.mxu0 0.0
    %1950 = vmatpush1.msra.mxu0 0.0
    %1951 = vmatprep.subr.mxu0 0.0
    %1952 = vmatpush1.msra.mxu0 0.0
    %1953 = vmatprep.subr.mxu0 0.0
    %1954 = vmatpush1.msra.mxu0 0.0
    %1955 = vmatprep.subr.mxu0 0.0
    %1956 = vmatpush1.msra.mxu0 0.0
    %1957 = vmatprep.subr.mxu0 0.0
    %1958 = vmatpush1.msra.mxu0 0.0
    %1959 = vmatprep.subr.mxu0 0.0
    %1960 = vmatpush1.msra.mxu0 0.0
    %1961 = vmatprep.subr.mxu0 0.0
    %1962 = vmatpush1.msra.mxu0 0.0
    %1963 = vmatprep.subr.mxu0 0.0
    %1964 = vmatpush1.msra.mxu0 0.0
    %1965 = vmatprep.subr.mxu0 0.0
    %1966 = vmatpush1.msra.mxu0 0.0
    %1967 = vmatprep.subr.mxu0 0.0
    %1968 = vmatpush1.msra.mxu0 0.0
    %1969 = vmatprep.subr.mxu0 0.0
    %1970 = vmatpush1.msra.mxu0 0.0
    %1971 = vmatprep.subr.mxu0 0.0
    %1972 = vmatpush1.msra.mxu0 0.0
    %1973 = vmatprep.subr.mxu0 0.0
    %1974 = vmatpush1.msra.mxu0 0.0
    %1975 = vmatprep.subr.mxu0 0.0
    %1976 = vmatpush1.msra.mxu0 0.0
    %1977 = vmatprep.subr.mxu0 0.0
    %1978 = vmatpush1.msra.mxu0 0.0
    %1979 = vmatprep.subr.mxu0 0.0
    %1980 = vmatpush1.msra.mxu0 0.0
    %1981 = vmatprep.subr.mxu0 0.0
    %1982 = vmatpush1.msra.mxu0 0.0
    %1983 = vmatprep.subr.mxu0 0.0
    %1984 = vmatpush1.msra.mxu0 0.0
    %1985 = vmatprep.subr.mxu0 0.0
    %1986 = vmatpush1.msra.mxu0 0.0
    %1987 = vmatprep.subr.mxu0 0.0
    %1988 = vmatpush1.msra.mxu0 0.0
    %1989 = vmatprep.subr.mxu0 0.0
    %1990 = vmatpush1.msra.mxu0 0.0
    %1991 = vmatprep.subr.mxu0 0.0
    %1992 = vmatpush1.msra.mxu0 0.0
    %1993 = vmatprep.subr.mxu0 0.0
    %1994 = vmatpush1.msra.mxu0 0.0
    %1995 = vmatprep.subr.mxu0 0.0
    %1996 = vmatpush1.msra.mxu0 0.0
    %1997 = vmatprep.subr.mxu0 0.0
    %1998 = vmatpush1.msra.mxu0 0.0
    %1999 = vmatprep.subr.mxu0 0.0
    %2000 = vmatpush1.msra.mxu0 0.0
    %2001 = vmatprep.subr.mxu0 0.0
    %2002 = vmatpush1.msra.mxu0 0.0
    %2003 = vmatprep.mubr.f32.mxu0 0.0
    %2004 = vmatmul.mubr.f32.gmra.mrb[0].mxu0 %v1937
    %v2005 = vpop.f32.mrb[0].mxu0
    %v2006 = vadd.f32 %v66, %v2005
    %v2007 = vpop.f32.mrb[0].mxu0
    %2008 = vdwg.mxu0
    %v2009 = vxor.u32 %v2006, 2147483648
    %v2010 = vmul.f32 %v2009, 1.442695
    %v2011 = vpow.pop %v2010
    %v2012 = vadd.f32 %v2011, 1.0
    %v2013 = vrcp.pop %v2012
    %v2014 = vmul.f32 1.0, %v2013
    %v2015 = vtanh.pop %v2006
    %v2016 = vmul.f32 %v2014, %v1819
    %2018 = vrot.lane.b32.xlu0 %v2015, 64
    %v2019 = vpop.permute.xlu0 %2018
    %v2021 = vmul.f32 %v2014, %v2019
    %2023 = vrot.lane.b32.xlu0 %v2021, 32
    %v2024 = vpop.permute.xlu0 %2023
    %v2026 = vadd.f32 %v2016, %v2024
    %v2027 = vtanh.pop %v2026
    %2029 = vrot.lane.b32.xlu0 %v2027, 64
    %v2030 = vpop.permute.xlu0 %2029
    %v2032 = vmul.f32 %v2014, %v2030
    %v2033 = vld [vmem:[%s1 + $0x2] sm:$0x3]
    %2035 = vrot.lane.b32.xlu0 %v2032, 64
    %v2036 = vpop.permute.xlu0 %2035
    %2039 = vrot.lane.b32.xlu0 %v1934, 96
    %v2040 = vpop.permute.xlu0 %2039
    %v2042 = vsel %vm60, %v2033, %v2036
    %v2043 = vsel %vm68, %v2042, %v2040
    %v2045 = vsel %vm1837, %v2043, 0
    %2047 = vmatprep.subr.mxu0 0.0
    %2048 = vmatpush1.msra.mxu0 %v46
    %2049 = vmatprep.subr.mxu0 0.0
    %2050 = vmatpush1.msra.mxu0 %v47
    %2051 = vmatprep.subr.mxu0 0.0
    %2052 = vmatpush1.msra.mxu0 %v48
    %2053 = vmatprep.subr.mxu0 0.0
    %2054 = vmatpush1.msra.mxu0 %v49
    %2055 = vmatprep.subr.mxu0 0.0
    %2056 = vmatpush1.msra.mxu0 %v50
    %2057 = vmatprep.subr.mxu0 0.0
    %2058 = vmatpush1.msra.mxu0 %v51
    %2059 = vmatprep.subr.mxu0 0.0
    %2060 = vmatpush1.msra.mxu0 %v52
    %2061 = vmatprep.subr.mxu0 0.0
    %2062 = vmatpush1.msra.mxu0 %v53
    %2063 = vmatprep.subr.mxu0 0.0
    %2064 = vmatpush1.msra.mxu0 %v54
    %2065 = vmatprep.subr.mxu0 0.0
    %2066 = vmatpush1.msra.mxu0 %v55
    %2067 = vmatprep.subr.mxu0 0.0
    %2068 = vmatpush1.msra.mxu0 %v56
    %2069 = vmatprep.subr.mxu0 0.0
    %2070 = vmatpush1.msra.mxu0 %v57
    %2071 = vmatprep.subr.mxu0 0.0
    %2072 = vmatpush1.msra.mxu0 0.0
    %2073 = vmatprep.subr.mxu0 0.0
    %2074 = vmatpush1.msra.mxu0 0.0
    %2075 = vmatprep.subr.mxu0 0.0
    %2076 = vmatpush1.msra.mxu0 0.0
    %2077 = vmatprep.subr.mxu0 0.0
    %2078 = vmatpush1.msra.mxu0 0.0
    %2079 = vmatprep.subr.mxu0 0.0
    %2080 = vmatpush1.msra.mxu0 0.0
    %2081 = vmatprep.subr.mxu0 0.0
    %2082 = vmatpush1.msra.mxu0 0.0
    %2083 = vmatprep.subr.mxu0 0.0
    %2084 = vmatpush1.msra.mxu0 0.0
    %2085 = vmatprep.subr.mxu0 0.0
    %2086 = vmatpush1.msra.mxu0 0.0
    %2087 = vmatprep.subr.mxu0 0.0
    %2088 = vmatpush1.msra.mxu0 0.0
    %2089 = vmatprep.subr.mxu0 0.0
    %2090 = vmatpush1.msra.mxu0 0.0
    %2091 = vmatprep.subr.mxu0 0.0
    %2092 = vmatpush1.msra.mxu0 0.0
    %2093 = vmatprep.subr.mxu0 0.0
    %2094 = vmatpush1.msra.mxu0 0.0
    %2095 = vmatprep.subr.mxu0 0.0
    %2096 = vmatpush1.msra.mxu0 0.0
    %2097 = vmatprep.subr.mxu0 0.0
    %2098 = vmatpush1.msra.mxu0 0.0
    %2099 = vmatprep.subr.mxu0 0.0
    %2100 = vmatpush1.msra.mxu0 0.0
    %2101 = vmatprep.subr.mxu0 0.0
    %2102 = vmatpush1.msra.mxu0 0.0
    %2103 = vmatprep.subr.mxu0 0.0
    %2104 = vmatpush1.msra.mxu0 0.0
    %2105 = vmatprep.subr.mxu0 0.0
    %2106 = vmatpush1.msra.mxu0 0.0
    %2107 = vmatprep.subr.mxu0 0.0
    %2108 = vmatpush1.msra.mxu0 0.0
    %2109 = vmatprep.subr.mxu0 0.0
    %2110 = vmatpush1.msra.mxu0 0.0
    %2111 = vmatprep.mubr.f32.mxu0 0.0
    %2112 = vmatmul.mubr.f32.gmra.mrb[0].mxu0 %v2045
    %v2113 = vpop.f32.mrb[0].mxu0
    %v2114 = vadd.f32 %v175, %v2113
    %v2115 = vpop.f32.mrb[0].mxu0
    %2116 = vdwg.mxu0
    %v2117 = vxor.u32 %v2114, 2147483648
    %v2118 = vmul.f32 %v2117, 1.442695
    %v2119 = vpow.pop %v2118
    %v2120 = vadd.f32 %v2119, 1.0
    %v2121 = vrcp.pop %v2120
    %v2122 = vmul.f32 1.0, %v2121
    %v2123 = vtanh.pop %v2114
    %v2124 = vmul.f32 %v2122, %v1928
    %2126 = vrot.lane.b32.xlu0 %v2123, 64
    %v2127 = vpop.permute.xlu0 %2126
    %v2129 = vmul.f32 %v2122, %v2127
    %2131 = vrot.lane.b32.xlu0 %v2129, 32
    %v2132 = vpop.permute.xlu0 %2131
    %v2134 = vadd.f32 %v2124, %v2132
    %v2135 = vtanh.pop %v2134
    %2137 = vrot.lane.b32.xlu0 %v2135, 64
    %v2138 = vpop.permute.xlu0 %2137
    %v2140 = vmul.f32 %v2122, %v2138
    %2141 = vrot.lane.b32.xlu0 %v2032, 32
    %v2142 = vpop.permute.xlu0 %2141
    %v2143 = vsel %vm60, %v2142, 0
    %2145 = vmatprep.subr.mxu0 0.0
    %2146 = vmatpush1.msra.mxu0 %v41
    %2147 = vmatprep.subr.mxu0 0.0
    %2148 = vmatpush1.msra.mxu0 %v42
    %2149 = vmatprep.subr.mxu0 0.0
    %2150 = vmatpush1.msra.mxu0 %v43
    %2151 = vmatprep.subr.mxu0 0.0
    %2152 = vmatpush1.msra.mxu0 %v44
    %2153 = vmatprep.subr.mxu0 0.0
    %2154 = vmatpush1.msra.mxu0 0.0
    %2155 = vmatprep.subr.mxu0 0.0
    %2156 = vmatpush1.msra.mxu0 0.0
    %2157 = vmatprep.subr.mxu0 0.0
    %2158 = vmatpush1.msra.mxu0 0.0
    %2159 = vmatprep.subr.mxu0 0.0
    %2160 = vmatpush1.msra.mxu0 0.0
    %2161 = vmatprep.subr.mxu0 0.0
    %2162 = vmatpush1.msra.mxu0 0.0
    %2163 = vmatprep.subr.mxu0 0.0
    %2164 = vmatpush1.msra.mxu0 0.0
    %2165 = vmatprep.subr.mxu0 0.0
    %2166 = vmatpush1.msra.mxu0 0.0
    %2167 = vmatprep.subr.mxu0 0.0
    %2168 = vmatpush1.msra.mxu0 0.0
    %2169 = vmatprep.subr.mxu0 0.0
    %2170 = vmatpush1.msra.mxu0 0.0
    %2171 = vmatprep.subr.mxu0 0.0
    %2172 = vmatpush1.msra.mxu0 0.0
    %2173 = vmatprep.subr.mxu0 0.0
    %2174 = vmatpush1.msra.mxu0 0.0
    %2175 = vmatprep.subr.mxu0 0.0
    %2176 = vmatpush1.msra.mxu0 0.0
    %2177 = vmatprep.subr.mxu0 0.0
    %2178 = vmatpush1.msra.mxu0 0.0
    %2179 = vmatprep.subr.mxu0 0.0
    %2180 = vmatpush1.msra.mxu0 0.0
    %2181 = vmatprep.subr.mxu0 0.0
    %2182 = vmatpush1.msra.mxu0 0.0
    %2183 = vmatprep.subr.mxu0 0.0
    %2184 = vmatpush1.msra.mxu0 0.0
    %2185 = vmatprep.subr.mxu0 0.0
    %2186 = vmatpush1.msra.mxu0 0.0
    %2187 = vmatprep.subr.mxu0 0.0
    %2188 = vmatpush1.msra.mxu0 0.0
    %2189 = vmatprep.subr.mxu0 0.0
    %2190 = vmatpush1.msra.mxu0 0.0
    %2191 = vmatprep.subr.mxu0 0.0
    %2192 = vmatpush1.msra.mxu0 0.0
    %2193 = vmatprep.subr.mxu0 0.0
    %2194 = vmatpush1.msra.mxu0 0.0
    %2195 = vmatprep.subr.mxu0 0.0
    %2196 = vmatpush1.msra.mxu0 0.0
    %2197 = vmatprep.subr.mxu0 0.0
    %2198 = vmatpush1.msra.mxu0 0.0
    %2199 = vmatprep.subr.mxu0 0.0
    %2200 = vmatpush1.msra.mxu0 0.0
    %2201 = vmatprep.subr.mxu0 0.0
    %2202 = vmatpush1.msra.mxu0 0.0
    %2203 = vmatprep.subr.mxu0 0.0
    %2204 = vmatpush1.msra.mxu0 0.0
    %2205 = vmatprep.subr.mxu0 0.0
    %2206 = vmatpush1.msra.mxu0 0.0
    %2207 = vmatprep.subr.mxu0 0.0
    %2208 = vmatpush1.msra.mxu0 0.0
    %2209 = vmatprep.mubr.f32.mxu0 0.0
    %2210 = vmatmul.mubr.f32.gmra.mrb[0].mxu0 %v2143
    %v2211 = vpop.f32.mrb[0].mxu0
    %v2212 = vadd.f32 %v66, %v2211
    %v2213 = vpop.f32.mrb[0].mxu0
    %2214 = vdwg.mxu0
    %v2215 = vxor.u32 %v2212, 2147483648
    %v2216 = vmul.f32 %v2215, 1.442695
    %v2217 = vpow.pop %v2216
    %v2218 = vadd.f32 %v2217, 1.0
    %v2219 = vrcp.pop %v2218
    %v2220 = vmul.f32 1.0, %v2219
    %v2221 = vtanh.pop %v2212
    %v2222 = vmul.f32 %v2220, %v2026
    %2224 = vrot.lane.b32.xlu0 %v2221, 64
    %v2225 = vpop.permute.xlu0 %2224
    %v2227 = vmul.f32 %v2220, %v2225
    %2229 = vrot.lane.b32.xlu0 %v2227, 32
    %v2230 = vpop.permute.xlu0 %2229
    %v2232 = vadd.f32 %v2222, %v2230
    %v2233 = vtanh.pop %v2232
    %2235 = vrot.lane.b32.xlu0 %v2233, 64
    %v2236 = vpop.permute.xlu0 %2235
    %v2238 = vmul.f32 %v2220, %v2236
    %v2239 = vld [vmem:[%s1 + $0x4] sm:$0x3]
    %2241 = vrot.lane.b32.xlu0 %v2238, 64
    %v2242 = vpop.permute.xlu0 %2241
    %2245 = vrot.lane.b32.xlu0 %v2140, 96
    %v2246 = vpop.permute.xlu0 %2245
    %v2248 = vsel %vm60, %v2239, %v2242
    %v2249 = vsel %vm68, %v2248, %v2246
    %v2251 = vsel %vm1837, %v2249, 0
    %2253 = vmatprep.subr.mxu0 0.0
    %2254 = vmatpush1.msra.mxu0 %v46
    %2255 = vmatprep.subr.mxu0 0.0
    %2256 = vmatpush1.msra.mxu0 %v47
    %2257 = vmatprep.subr.mxu0 0.0
    %2258 = vmatpush1.msra.mxu0 %v48
    %2259 = vmatprep.subr.mxu0 0.0
    %2260 = vmatpush1.msra.mxu0 %v49
    %2261 = vmatprep.subr.mxu0 0.0
    %2262 = vmatpush1.msra.mxu0 %v50
    %2263 = vmatprep.subr.mxu0 0.0
    %2264 = vmatpush1.msra.mxu0 %v51
    %2265 = vmatprep.subr.mxu0 0.0
    %2266 = vmatpush1.msra.mxu0 %v52
    %2267 = vmatprep.subr.mxu0 0.0
    %2268 = vmatpush1.msra.mxu0 %v53
    %2269 = vmatprep.subr.mxu0 0.0
    %2270 = vmatpush1.msra.mxu0 %v54
    %2271 = vmatprep.subr.mxu0 0.0
    %2272 = vmatpush1.msra.mxu0 %v55
    %2273 = vmatprep.subr.mxu0 0.0
    %2274 = vmatpush1.msra.mxu0 %v56
    %2275 = vmatprep.subr.mxu0 0.0
    %2276 = vmatpush1.msra.mxu0 %v57
    %2277 = vmatprep.subr.mxu0 0.0
    %2278 = vmatpush1.msra.mxu0 0.0
    %2279 = vmatprep.subr.mxu0 0.0
    %2280 = vmatpush1.msra.mxu0 0.0
    %2281 = vmatprep.subr.mxu0 0.0
    %2282 = vmatpush1.msra.mxu0 0.0
    %2283 = vmatprep.subr.mxu0 0.0
    %2284 = vmatpush1.msra.mxu0 0.0
    %2285 = vmatprep.subr.mxu0 0.0
    %2286 = vmatpush1.msra.mxu0 0.0
    %2287 = vmatprep.subr.mxu0 0.0
    %2288 = vmatpush1.msra.mxu0 0.0
    %2289 = vmatprep.subr.mxu0 0.0
    %2290 = vmatpush1.msra.mxu0 0.0
    %2291 = vmatprep.subr.mxu0 0.0
    %2292 = vmatpush1.msra.mxu0 0.0
    %2293 = vmatprep.subr.mxu0 0.0
    %2294 = vmatpush1.msra.mxu0 0.0
    %2295 = vmatprep.subr.mxu0 0.0
    %2296 = vmatpush1.msra.mxu0 0.0
    %2297 = vmatprep.subr.mxu0 0.0
    %2298 = vmatpush1.msra.mxu0 0.0
    %2299 = vmatprep.subr.mxu0 0.0
    %2300 = vmatpush1.msra.mxu0 0.0
    %2301 = vmatprep.subr.mxu0 0.0
    %2302 = vmatpush1.msra.mxu0 0.0
    %2303 = vmatprep.subr.mxu0 0.0
    %2304 = vmatpush1.msra.mxu0 0.0
    %2305 = vmatprep.subr.mxu0 0.0
    %2306 = vmatpush1.msra.mxu0 0.0
    %2307 = vmatprep.subr.mxu0 0.0
    %2308 = vmatpush1.msra.mxu0 0.0
    %2309 = vmatprep.subr.mxu0 0.0
    %2310 = vmatpush1.msra.mxu0 0.0
    %2311 = vmatprep.subr.mxu0 0.0
    %2312 = vmatpush1.msra.mxu0 0.0
    %2313 = vmatprep.subr.mxu0 0.0
    %2314 = vmatpush1.msra.mxu0 0.0
    %2315 = vmatprep.subr.mxu0 0.0
    %2316 = vmatpush1.msra.mxu0 0.0
    %2317 = vmatprep.mubr.f32.mxu0 0.0
    %2318 = vmatmul.mubr.f32.gmra.mrb[0].mxu0 %v2251
    %v2319 = vpop.f32.mrb[0].mxu0
    %v2320 = vadd.f32 %v175, %v2319
    %v2321 = vpop.f32.mrb[0].mxu0
    %2322 = vdwg.mxu0
    %v2323 = vxor.u32 %v2320, 2147483648
    %v2324 = vmul.f32 %v2323, 1.442695
    %v2325 = vpow.pop %v2324
    %v2326 = vadd.f32 %v2325, 1.0
    %v2327 = vrcp.pop %v2326
    %v2328 = vmul.f32 1.0, %v2327
    %v2329 = vtanh.pop %v2320
    %v2330 = vmul.f32 %v2328, %v2134
    %2332 = vrot.lane.b32.xlu0 %v2329, 64
    %v2333 = vpop.permute.xlu0 %2332
    %v2335 = vmul.f32 %v2328, %v2333
    %2337 = vrot.lane.b32.xlu0 %v2335, 32
    %v2338 = vpop.permute.xlu0 %2337
    %v2340 = vadd.f32 %v2330, %v2338
    %v2341 = vtanh.pop %v2340
    %2343 = vrot.lane.b32.xlu0 %v2341, 64
    %v2344 = vpop.permute.xlu0 %2343
    %v2346 = vmul.f32 %v2328, %v2344
    %2347 = vrot.lane.b32.xlu0 %v2238, 32
    %v2348 = vpop.permute.xlu0 %2347
    %v2349 = vsel %vm60, %v2348, 0
    %2351 = vmatprep.subr.mxu0 0.0
    %2352 = vmatpush1.msra.mxu0 %v41
    %2353 = vmatprep.subr.mxu0 0.0
    %2354 = vmatpush1.msra.mxu0 %v42
    %2355 = vmatprep.subr.mxu0 0.0
    %2356 = vmatpush1.msra.mxu0 %v43
    %2357 = vmatprep.subr.mxu0 0.0
    %2358 = vmatpush1.msra.mxu0 %v44
    %2359 = vmatprep.subr.mxu0 0.0
    %2360 = vmatpush1.msra.mxu0 0.0
    %2361 = vmatprep.subr.mxu0 0.0
    %2362 = vmatpush1.msra.mxu0 0.0
    %2363 = vmatprep.subr.mxu0 0.0
    %2364 = vmatpush1.msra.mxu0 0.0
    %2365 = vmatprep.subr.mxu0 0.0
    %2366 = vmatpush1.msra.mxu0 0.0
    %2367 = vmatprep.subr.mxu0 0.0
    %2368 = vmatpush1.msra.mxu0 0.0
    %2369 = vmatprep.subr.mxu0 0.0
    %2370 = vmatpush1.msra.mxu0 0.0
    %2371 = vmatprep.subr.mxu0 0.0
    %2372 = vmatpush1.msra.mxu0 0.0
    %2373 = vmatprep.subr.mxu0 0.0
    %2374 = vmatpush1.msra.mxu0 0.0
    %2375 = vmatprep.subr.mxu0 0.0
    %2376 = vmatpush1.msra.mxu0 0.0
    %2377 = vmatprep.subr.mxu0 0.0
    %2378 = vmatpush1.msra.mxu0 0.0
    %2379 = vmatprep.subr.mxu0 0.0
    %2380 = vmatpush1.msra.mxu0 0.0
    %2381 = vmatprep.subr.mxu0 0.0
    %2382 = vmatpush1.msra.mxu0 0.0
    %2383 = vmatprep.subr.mxu0 0.0
    %2384 = vmatpush1.msra.mxu0 0.0
    %2385 = vmatprep.subr.mxu0 0.0
    %2386 = vmatpush1.msra.mxu0 0.0
    %2387 = vmatprep.subr.mxu0 0.0
    %2388 = vmatpush1.msra.mxu0 0.0
    %2389 = vmatprep.subr.mxu0 0.0
    %2390 = vmatpush1.msra.mxu0 0.0
    %2391 = vmatprep.subr.mxu0 0.0
    %2392 = vmatpush1.msra.mxu0 0.0
    %2393 = vmatprep.subr.mxu0 0.0
    %2394 = vmatpush1.msra.mxu0 0.0
    %2395 = vmatprep.subr.mxu0 0.0
    %2396 = vmatpush1.msra.mxu0 0.0
    %2397 = vmatprep.subr.mxu0 0.0
    %2398 = vmatpush1.msra.mxu0 0.0
    %2399 = vmatprep.subr.mxu0 0.0
    %2400 = vmatpush1.msra.mxu0 0.0
    %2401 = vmatprep.subr.mxu0 0.0
    %2402 = vmatpush1.msra.mxu0 0.0
    %2403 = vmatprep.subr.mxu0 0.0
    %2404 = vmatpush1.msra.mxu0 0.0
    %2405 = vmatprep.subr.mxu0 0.0
    %2406 = vmatpush1.msra.mxu0 0.0
    %2407 = vmatprep.subr.mxu0 0.0
    %2408 = vmatpush1.msra.mxu0 0.0
    %2409 = vmatprep.subr.mxu0 0.0
    %2410 = vmatpush1.msra.mxu0 0.0
    %2411 = vmatprep.subr.mxu0 0.0
    %2412 = vmatpush1.msra.mxu0 0.0
    %2413 = vmatprep.subr.mxu0 0.0
    %2414 = vmatpush1.msra.mxu0 0.0
    %2415 = vmatprep.mubr.f32.mxu0 0.0
    %2416 = vmatmul.mubr.f32.gmra.mrb[0].mxu0 %v2349
    %v2417 = vpop.f32.mrb[0].mxu0
    %v2418 = vadd.f32 %v66, %v2417
    %v2419 = vpop.f32.mrb[0].mxu0
    %2420 = vdwg.mxu0
    %v2421 = vxor.u32 %v2418, 2147483648
    %v2422 = vmul.f32 %v2421, 1.442695
    %v2423 = vpow.pop %v2422
    %v2424 = vadd.f32 %v2423, 1.0
    %v2425 = vrcp.pop %v2424
    %v2426 = vmul.f32 1.0, %v2425
    %v2427 = vtanh.pop %v2418
    %v2428 = vmul.f32 %v2426, %v2232
    %2430 = vrot.lane.b32.xlu0 %v2427, 64
    %v2431 = vpop.permute.xlu0 %2430
    %v2433 = vmul.f32 %v2426, %v2431
    %2435 = vrot.lane.b32.xlu0 %v2433, 32
    %v2436 = vpop.permute.xlu0 %2435
    %v2438 = vadd.f32 %v2428, %v2436
    %v2439 = vtanh.pop %v2438
    %2441 = vrot.lane.b32.xlu0 %v2439, 64
    %v2442 = vpop.permute.xlu0 %2441
    %v2444 = vmul.f32 %v2426, %v2442
    %v2445 = vld [vmem:[%s1 + $0x6] sm:$0x3]
    %2447 = vrot.lane.b32.xlu0 %v2444, 64
    %v2448 = vpop.permute.xlu0 %2447
    %2451 = vrot.lane.b32.xlu0 %v2346, 96
    %v2452 = vpop.permute.xlu0 %2451
    %v2454 = vsel %vm60, %v2445, %v2448
    %v2455 = vsel %vm68, %v2454, %v2452
    %v2457 = vsel %vm1837, %v2455, 0
    %2459 = vmatprep.subr.mxu0 0.0
    %2460 = vmatpush1.msra.mxu0 %v46
    %2461 = vmatprep.subr.mxu0 0.0
    %2462 = vmatpush1.msra.mxu0 %v47
    %2463 = vmatprep.subr.mxu0 0.0
    %2464 = vmatpush1.msra.mxu0 %v48
    %2465 = vmatprep.subr.mxu0 0.0
    %2466 = vmatpush1.msra.mxu0 %v49
    %2467 = vmatprep.subr.mxu0 0.0
    %2468 = vmatpush1.msra.mxu0 %v50
    %2469 = vmatprep.subr.mxu0 0.0
    %2470 = vmatpush1.msra.mxu0 %v51
    %2471 = vmatprep.subr.mxu0 0.0
    %2472 = vmatpush1.msra.mxu0 %v52
    %2473 = vmatprep.subr.mxu0 0.0
    %2474 = vmatpush1.msra.mxu0 %v53
    %2475 = vmatprep.subr.mxu0 0.0
    %2476 = vmatpush1.msra.mxu0 %v54
    %2477 = vmatprep.subr.mxu0 0.0
    %2478 = vmatpush1.msra.mxu0 %v55
    %2479 = vmatprep.subr.mxu0 0.0
    %2480 = vmatpush1.msra.mxu0 %v56
    %2481 = vmatprep.subr.mxu0 0.0
    %2482 = vmatpush1.msra.mxu0 %v57
    %2483 = vmatprep.subr.mxu0 0.0
    %2484 = vmatpush1.msra.mxu0 0.0
    %2485 = vmatprep.subr.mxu0 0.0
    %2486 = vmatpush1.msra.mxu0 0.0
    %2487 = vmatprep.subr.mxu0 0.0
    %2488 = vmatpush1.msra.mxu0 0.0
    %2489 = vmatprep.subr.mxu0 0.0
    %2490 = vmatpush1.msra.mxu0 0.0
    %2491 = vmatprep.subr.mxu0 0.0
    %2492 = vmatpush1.msra.mxu0 0.0
    %2493 = vmatprep.subr.mxu0 0.0
    %2494 = vmatpush1.msra.mxu0 0.0
    %2495 = vmatprep.subr.mxu0 0.0
    %2496 = vmatpush1.msra.mxu0 0.0
    %2497 = vmatprep.subr.mxu0 0.0
    %2498 = vmatpush1.msra.mxu0 0.0
    %2499 = vmatprep.subr.mxu0 0.0
    %2500 = vmatpush1.msra.mxu0 0.0
    %2501 = vmatprep.subr.mxu0 0.0
    %2502 = vmatpush1.msra.mxu0 0.0
    %2503 = vmatprep.subr.mxu0 0.0
    %2504 = vmatpush1.msra.mxu0 0.0
    %2505 = vmatprep.subr.mxu0 0.0
    %2506 = vmatpush1.msra.mxu0 0.0
    %2507 = vmatprep.subr.mxu0 0.0
    %2508 = vmatpush1.msra.mxu0 0.0
    %2509 = vmatprep.subr.mxu0 0.0
    %2510 = vmatpush1.msra.mxu0 0.0
    %2511 = vmatprep.subr.mxu0 0.0
    %2512 = vmatpush1.msra.mxu0 0.0
    %2513 = vmatprep.subr.mxu0 0.0
    %2514 = vmatpush1.msra.mxu0 0.0
    %2515 = vmatprep.subr.mxu0 0.0
    %2516 = vmatpush1.msra.mxu0 0.0
    %2517 = vmatprep.subr.mxu0 0.0
    %2518 = vmatpush1.msra.mxu0 0.0
    %2519 = vmatprep.subr.mxu0 0.0
    %2520 = vmatpush1.msra.mxu0 0.0
    %2521 = vmatprep.subr.mxu0 0.0
    %2522 = vmatpush1.msra.mxu0 0.0
    %2523 = vmatprep.mubr.f32.mxu0 0.0
    %2524 = vmatmul.mubr.f32.gmra.mrb[0].mxu0 %v2457
    %v2525 = vpop.f32.mrb[0].mxu0
    %v2526 = vadd.f32 %v175, %v2525
    %v2527 = vpop.f32.mrb[0].mxu0
    %2528 = vdwg.mxu0
    %v2529 = vxor.u32 %v2526, 2147483648
    %v2530 = vmul.f32 %v2529, 1.442695
    %v2531 = vpow.pop %v2530
    %v2532 = vadd.f32 %v2531, 1.0
    %v2533 = vrcp.pop %v2532
    %v2534 = vmul.f32 1.0, %v2533
    %v2535 = vtanh.pop %v2526
    %v2536 = vmul.f32 %v2534, %v2340
    %2538 = vrot.lane.b32.xlu0 %v2535, 64
    %v2539 = vpop.permute.xlu0 %2538
    %v2541 = vmul.f32 %v2534, %v2539
    %2543 = vrot.lane.b32.xlu0 %v2541, 32
    %v2544 = vpop.permute.xlu0 %2543
    %v2546 = vadd.f32 %v2536, %v2544
    %v2547 = vtanh.pop %v2546
    %2549 = vrot.lane.b32.xlu0 %v2547, 64
    %v2550 = vpop.permute.xlu0 %2549
    %v2552 = vmul.f32 %v2534, %v2550
    %2553 = vrot.lane.b32.xlu0 %v2444, 32
    %v2554 = vpop.permute.xlu0 %2553
    %v2555 = vsel %vm60, %v2554, 0
    %2557 = vmatprep.subr.mxu0 0.0
    %2558 = vmatpush1.msra.mxu0 %v41
    %2559 = vmatprep.subr.mxu0 0.0
    %2560 = vmatpush1.msra.mxu0 %v42
    %2561 = vmatprep.subr.mxu0 0.0
    %2562 = vmatpush1.msra.mxu0 %v43
    %2563 = vmatprep.subr.mxu0 0.0
    %2564 = vmatpush1.msra.mxu0 %v44
    %2565 = vmatprep.subr.mxu0 0.0
    %2566 = vmatpush1.msra.mxu0 0.0
    %2567 = vmatprep.subr.mxu0 0.0
    %2568 = vmatpush1.msra.mxu0 0.0
    %2569 = vmatprep.subr.mxu0 0.0
    %2570 = vmatpush1.msra.mxu0 0.0
    %2571 = vmatprep.subr.mxu0 0.0
    %2572 = vmatpush1.msra.mxu0 0.0
    %2573 = vmatprep.subr.mxu0 0.0
    %2574 = vmatpush1.msra.mxu0 0.0
    %2575 = vmatprep.subr.mxu0 0.0
    %2576 = vmatpush1.msra.mxu0 0.0
    %2577 = vmatprep.subr.mxu0 0.0
    %2578 = vmatpush1.msra.mxu0 0.0
    %2579 = vmatprep.subr.mxu0 0.0
    %2580 = vmatpush1.msra.mxu0 0.0
    %2581 = vmatprep.subr.mxu0 0.0
    %2582 = vmatpush1.msra.mxu0 0.0
    %2583 = vmatprep.subr.mxu0 0.0
    %2584 = vmatpush1.msra.mxu0 0.0
    %2585 = vmatprep.subr.mxu0 0.0
    %2586 = vmatpush1.msra.mxu0 0.0
    %2587 = vmatprep.subr.mxu0 0.0
    %2588 = vmatpush1.msra.mxu0 0.0
    %2589 = vmatprep.subr.mxu0 0.0
    %2590 = vmatpush1.msra.mxu0 0.0
    %2591 = vmatprep.subr.mxu0 0.0
    %2592 = vmatpush1.msra.mxu0 0.0
    %2593 = vmatprep.subr.mxu0 0.0
    %2594 = vmatpush1.msra.mxu0 0.0
    %2595 = vmatprep.subr.mxu0 0.0
    %2596 = vmatpush1.msra.mxu0 0.0
    %2597 = vmatprep.subr.mxu0 0.0
    %2598 = vmatpush1.msra.mxu0 0.0
    %2599 = vmatprep.subr.mxu0 0.0
    %2600 = vmatpush1.msra.mxu0 0.0
    %2601 = vmatprep.subr.mxu0 0.0
    %2602 = vmatpush1.msra.mxu0 0.0
    %2603 = vmatprep.subr.mxu0 0.0
    %2604 = vmatpush1.msra.mxu0 0.0
    %2605 = vmatprep.subr.mxu0 0.0
    %2606 = vmatpush1.msra.mxu0 0.0
    %2607 = vmatprep.subr.mxu0 0.0
    %2608 = vmatpush1.msra.mxu0 0.0
    %2609 = vmatprep.subr.mxu0 0.0
    %2610 = vmatpush1.msra.mxu0 0.0
    %2611 = vmatprep.subr.mxu0 0.0
    %2612 = vmatpush1.msra.mxu0 0.0
    %2613 = vmatprep.subr.mxu0 0.0
    %2614 = vmatpush1.msra.mxu0 0.0
    %2615 = vmatprep.subr.mxu0 0.0
    %2616 = vmatpush1.msra.mxu0 0.0
    %2617 = vmatprep.subr.mxu0 0.0
    %2618 = vmatpush1.msra.mxu0 0.0
    %2619 = vmatprep.subr.mxu0 0.0
    %2620 = vmatpush1.msra.mxu0 0.0
    %2621 = vmatprep.mubr.f32.mxu0 0.0
    %2622 = vmatmul.mubr.f32.gmra.mrb[0].mxu0 %v2555
    %v2623 = vpop.f32.mrb[0].mxu0
    %v2624 = vadd.f32 %v66, %v2623
    %v2625 = vpop.f32.mrb[0].mxu0
    %2626 = vdwg.mxu0
    %v2627 = vxor.u32 %v2624, 2147483648
    %v2628 = vmul.f32 %v2627, 1.442695
    %v2629 = vpow.pop %v2628
    %v2630 = vadd.f32 %v2629, 1.0
    %v2631 = vrcp.pop %v2630
    %v2632 = vmul.f32 1.0, %v2631
    %v2633 = vtanh.pop %v2624
    %v2634 = vmul.f32 %v2632, %v2438
    %2636 = vrot.lane.b32.xlu0 %v2633, 64
    %v2637 = vpop.permute.xlu0 %2636
    %v2639 = vmul.f32 %v2632, %v2637
    %2641 = vrot.lane.b32.xlu0 %v2639, 32
    %v2642 = vpop.permute.xlu0 %2641
    %v2644 = vadd.f32 %v2634, %v2642
    %v2645 = vtanh.pop %v2644
    %2647 = vrot.lane.b32.xlu0 %v2645, 64
    %v2648 = vpop.permute.xlu0 %2647
    %v2650 = vmul.f32 %v2632, %v2648
    %v2651 = vld [vmem:[%s1 + $0x8] sm:$0x3]
    %2653 = vrot.lane.b32.xlu0 %v2650, 64
    %v2654 = vpop.permute.xlu0 %2653
    %2657 = vrot.lane.b32.xlu0 %v2552, 96
    %v2658 = vpop.permute.xlu0 %2657
    %v2660 = vsel %vm60, %v2651, %v2654
    %v2661 = vsel %vm68, %v2660, %v2658
    %v2663 = vsel %vm1837, %v2661, 0
    %2665 = vmatprep.subr.mxu0 0.0
    %2666 = vmatpush1.msra.mxu0 %v46
    %2667 = vmatprep.subr.mxu0 0.0
    %2668 = vmatpush1.msra.mxu0 %v47
    %2669 = vmatprep.subr.mxu0 0.0
    %2670 = vmatpush1.msra.mxu0 %v48
    %2671 = vmatprep.subr.mxu0 0.0
    %2672 = vmatpush1.msra.mxu0 %v49
    %2673 = vmatprep.subr.mxu0 0.0
    %2674 = vmatpush1.msra.mxu0 %v50
    %2675 = vmatprep.subr.mxu0 0.0
    %2676 = vmatpush1.msra.mxu0 %v51
    %2677 = vmatprep.subr.mxu0 0.0
    %2678 = vmatpush1.msra.mxu0 %v52
    %2679 = vmatprep.subr.mxu0 0.0
    %2680 = vmatpush1.msra.mxu0 %v53
    %2681 = vmatprep.subr.mxu0 0.0
    %2682 = vmatpush1.msra.mxu0 %v54
    %2683 = vmatprep.subr.mxu0 0.0
    %2684 = vmatpush1.msra.mxu0 %v55
    %2685 = vmatprep.subr.mxu0 0.0
    %2686 = vmatpush1.msra.mxu0 %v56
    %2687 = vmatprep.subr.mxu0 0.0
    %2688 = vmatpush1.msra.mxu0 %v57
    %2689 = vmatprep.subr.mxu0 0.0
    %2690 = vmatpush1.msra.mxu0 0.0
    %2691 = vmatprep.subr.mxu0 0.0
    %2692 = vmatpush1.msra.mxu0 0.0
    %2693 = vmatprep.subr.mxu0 0.0
    %2694 = vmatpush1.msra.mxu0 0.0
    %2695 = vmatprep.subr.mxu0 0.0
    %2696 = vmatpush1.msra.mxu0 0.0
    %2697 = vmatprep.subr.mxu0 0.0
    %2698 = vmatpush1.msra.mxu0 0.0
    %2699 = vmatprep.subr.mxu0 0.0
    %2700 = vmatpush1.msra.mxu0 0.0
    %2701 = vmatprep.subr.mxu0 0.0
    %2702 = vmatpush1.msra.mxu0 0.0
    %2703 = vmatprep.subr.mxu0 0.0
    %2704 = vmatpush1.msra.mxu0 0.0
    %2705 = vmatprep.subr.mxu0 0.0
    %2706 = vmatpush1.msra.mxu0 0.0
    %2707 = vmatprep.subr.mxu0 0.0
    %2708 = vmatpush1.msra.mxu0 0.0
    %2709 = vmatprep.subr.mxu0 0.0
    %2710 = vmatpush1.msra.mxu0 0.0
    %2711 = vmatprep.subr.mxu0 0.0
    %2712 = vmatpush1.msra.mxu0 0.0
    %2713 = vmatprep.subr.mxu0 0.0
    %2714 = vmatpush1.msra.mxu0 0.0
    %2715 = vmatprep.subr.mxu0 0.0
    %2716 = vmatpush1.msra.mxu0 0.0
    %2717 = vmatprep.subr.mxu0 0.0
    %2718 = vmatpush1.msra.mxu0 0.0
    %2719 = vmatprep.subr.mxu0 0.0
    %2720 = vmatpush1.msra.mxu0 0.0
    %2721 = vmatprep.subr.mxu0 0.0
    %2722 = vmatpush1.msra.mxu0 0.0
    %2723 = vmatprep.subr.mxu0 0.0
    %2724 = vmatpush1.msra.mxu0 0.0
    %2725 = vmatprep.subr.mxu0 0.0
    %2726 = vmatpush1.msra.mxu0 0.0
    %2727 = vmatprep.subr.mxu0 0.0
    %2728 = vmatpush1.msra.mxu0 0.0
    %2729 = vmatprep.mubr.f32.mxu0 0.0
    %2730 = vmatmul.mubr.f32.gmra.mrb[0].mxu0 %v2663
    %v2731 = vpop.f32.mrb[0].mxu0
    %v2732 = vadd.f32 %v175, %v2731
    %v2733 = vpop.f32.mrb[0].mxu0
    %2734 = vdwg.mxu0
    %v2735 = vxor.u32 %v2732, 2147483648
    %v2736 = vmul.f32 %v2735, 1.442695
    %v2737 = vpow.pop %v2736
    %v2738 = vadd.f32 %v2737, 1.0
    %v2739 = vrcp.pop %v2738
    %v2740 = vmul.f32 1.0, %v2739
    %v2741 = vtanh.pop %v2732
    %v2742 = vmul.f32 %v2740, %v2546
    %2744 = vrot.lane.b32.xlu0 %v2741, 64
    %v2745 = vpop.permute.xlu0 %2744
    %v2747 = vmul.f32 %v2740, %v2745
    %2749 = vrot.lane.b32.xlu0 %v2747, 32
    %v2750 = vpop.permute.xlu0 %2749
    %v2752 = vadd.f32 %v2742, %v2750
    %v2753 = vtanh.pop %v2752
    %2755 = vrot.lane.b32.xlu0 %v2753, 64
    %v2756 = vpop.permute.xlu0 %2755
    %v2758 = vmul.f32 %v2740, %v2756
    %2759 = vrot.lane.b32.xlu0 %v2650, 32
    %v2760 = vpop.permute.xlu0 %2759
    %v2761 = vsel %vm60, %v2760, 0
    %2763 = vmatprep.subr.mxu0 0.0
    %2764 = vmatpush1.msra.mxu0 %v41
    %2765 = vmatprep.subr.mxu0 0.0
    %2766 = vmatpush1.msra.mxu0 %v42
    %2767 = vmatprep.subr.mxu0 0.0
    %2768 = vmatpush1.msra.mxu0 %v43
    %2769 = vmatprep.subr.mxu0 0.0
    %2770 = vmatpush1.msra.mxu0 %v44
    %2771 = vmatprep.subr.mxu0 0.0
    %2772 = vmatpush1.msra.mxu0 0.0
    %2773 = vmatprep.subr.mxu0 0.0
    %2774 = vmatpush1.msra.mxu0 0.0
    %2775 = vmatprep.subr.mxu0 0.0
    %2776 = vmatpush1.msra.mxu0 0.0
    %2777 = vmatprep.subr.mxu0 0.0
    %2778 = vmatpush1.msra.mxu0 0.0
    %2779 = vmatprep.subr.mxu0 0.0
    %2780 = vmatpush1.msra.mxu0 0.0
    %2781 = vmatprep.subr.mxu0 0.0
    %2782 = vmatpush1.msra.mxu0 0.0
    %2783 = vmatprep.subr.mxu0 0.0
    %2784 = vmatpush1.msra.mxu0 0.0
    %2785 = vmatprep.subr.mxu0 0.0
    %2786 = vmatpush1.msra.mxu0 0.0
    %2787 = vmatprep.subr.mxu0 0.0
    %2788 = vmatpush1.msra.mxu0 0.0
    %2789 = vmatprep.subr.mxu0 0.0
    %2790 = vmatpush1.msra.mxu0 0.0
    %2791 = vmatprep.subr.mxu0 0.0
    %2792 = vmatpush1.msra.mxu0 0.0
    %2793 = vmatprep.subr.mxu0 0.0
    %2794 = vmatpush1.msra.mxu0 0.0
    %2795 = vmatprep.subr.mxu0 0.0
    %2796 = vmatpush1.msra.mxu0 0.0
    %2797 = vmatprep.subr.mxu0 0.0
    %2798 = vmatpush1.msra.mxu0 0.0
    %2799 = vmatprep.subr.mxu0 0.0
    %2800 = vmatpush1.msra.mxu0 0.0
    %2801 = vmatprep.subr.mxu0 0.0
    %2802 = vmatpush1.msra.mxu0 0.0
    %2803 = vmatprep.subr.mxu0 0.0
    %2804 = vmatpush1.msra.mxu0 0.0
    %2805 = vmatprep.subr.mxu0 0.0
    %2806 = vmatpush1.msra.mxu0 0.0
    %2807 = vmatprep.subr.mxu0 0.0
    %2808 = vmatpush1.msra.mxu0 0.0
    %2809 = vmatprep.subr.mxu0 0.0
    %2810 = vmatpush1.msra.mxu0 0.0
    %2811 = vmatprep.subr.mxu0 0.0
    %2812 = vmatpush1.msra.mxu0 0.0
    %2813 = vmatprep.subr.mxu0 0.0
    %2814 = vmatpush1.msra.mxu0 0.0
    %2815 = vmatprep.subr.mxu0 0.0
    %2816 = vmatpush1.msra.mxu0 0.0
    %2817 = vmatprep.subr.mxu0 0.0
    %2818 = vmatpush1.msra.mxu0 0.0
    %2819 = vmatprep.subr.mxu0 0.0
    %2820 = vmatpush1.msra.mxu0 0.0
    %2821 = vmatprep.subr.mxu0 0.0
    %2822 = vmatpush1.msra.mxu0 0.0
    %2823 = vmatprep.subr.mxu0 0.0
    %2824 = vmatpush1.msra.mxu0 0.0
    %2825 = vmatprep.subr.mxu0 0.0
    %2826 = vmatpush1.msra.mxu0 0.0
    %2827 = vmatprep.mubr.f32.mxu0 0.0
    %2828 = vmatmul.mubr.f32.gmra.mrb[0].mxu0 %v2761
    %v2829 = vpop.f32.mrb[0].mxu0
    %v2830 = vadd.f32 %v66, %v2829
    %v2831 = vpop.f32.mrb[0].mxu0
    %2832 = vdwg.mxu0
    %v2833 = vxor.u32 %v2830, 2147483648
    %v2834 = vmul.f32 %v2833, 1.442695
    %v2835 = vpow.pop %v2834
    %v2836 = vadd.f32 %v2835, 1.0
    %v2837 = vrcp.pop %v2836
    %v2838 = vmul.f32 1.0, %v2837
    %v2839 = vtanh.pop %v2830
    %v2840 = vmul.f32 %v2838, %v2644
    %2842 = vrot.lane.b32.xlu0 %v2839, 64
    %v2843 = vpop.permute.xlu0 %2842
    %v2845 = vmul.f32 %v2838, %v2843
    %2847 = vrot.lane.b32.xlu0 %v2845, 32
    %v2848 = vpop.permute.xlu0 %2847
    %v2850 = vadd.f32 %v2840, %v2848
    %v2851 = vtanh.pop %v2850
    %2853 = vrot.lane.b32.xlu0 %v2851, 64
    %v2854 = vpop.permute.xlu0 %2853
    %v2856 = vmul.f32 %v2838, %v2854
    %v2857 = vld [vmem:[%s1 + $0xa] sm:$0x3]
    %2859 = vrot.lane.b32.xlu0 %v2856, 64
    %v2860 = vpop.permute.xlu0 %2859
    %2863 = vrot.lane.b32.xlu0 %v2758, 96
    %v2864 = vpop.permute.xlu0 %2863
    %v2866 = vsel %vm60, %v2857, %v2860
    %v2867 = vsel %vm68, %v2866, %v2864
    %v2869 = vsel %vm1837, %v2867, 0
    %2871 = vmatprep.subr.mxu0 0.0
    %2872 = vmatpush1.msra.mxu0 %v46
    %2873 = vmatprep.subr.mxu0 0.0
    %2874 = vmatpush1.msra.mxu0 %v47
    %2875 = vmatprep.subr.mxu0 0.0
    %2876 = vmatpush1.msra.mxu0 %v48
    %2877 = vmatprep.subr.mxu0 0.0
    %2878 = vmatpush1.msra.mxu0 %v49
    %2879 = vmatprep.subr.mxu0 0.0
    %2880 = vmatpush1.msra.mxu0 %v50
    %2881 = vmatprep.subr.mxu0 0.0
    %2882 = vmatpush1.msra.mxu0 %v51
    %2883 = vmatprep.subr.mxu0 0.0
    %2884 = vmatpush1.msra.mxu0 %v52
    %2885 = vmatprep.subr.mxu0 0.0
    %2886 = vmatpush1.msra.mxu0 %v53
    %2887 = vmatprep.subr.mxu0 0.0
    %2888 = vmatpush1.msra.mxu0 %v54
    %2889 = vmatprep.subr.mxu0 0.0
    %2890 = vmatpush1.msra.mxu0 %v55
    %2891 = vmatprep.subr.mxu0 0.0
    %2892 = vmatpush1.msra.mxu0 %v56
    %2893 = vmatprep.subr.mxu0 0.0
    %2894 = vmatpush1.msra.mxu0 %v57
    %2895 = vmatprep.subr.mxu0 0.0
    %2896 = vmatpush1.msra.mxu0 0.0
    %2897 = vmatprep.subr.mxu0 0.0
    %2898 = vmatpush1.msra.mxu0 0.0
    %2899 = vmatprep.subr.mxu0 0.0
    %2900 = vmatpush1.msra.mxu0 0.0
    %2901 = vmatprep.subr.mxu0 0.0
    %2902 = vmatpush1.msra.mxu0 0.0
    %2903 = vmatprep.subr.mxu0 0.0
    %2904 = vmatpush1.msra.mxu0 0.0
    %2905 = vmatprep.subr.mxu0 0.0
    %2906 = vmatpush1.msra.mxu0 0.0
    %2907 = vmatprep.subr.mxu0 0.0
    %2908 = vmatpush1.msra.mxu0 0.0
    %2909 = vmatprep.subr.mxu0 0.0
    %2910 = vmatpush1.msra.mxu0 0.0
    %2911 = vmatprep.subr.mxu0 0.0
    %2912 = vmatpush1.msra.mxu0 0.0
    %2913 = vmatprep.subr.mxu0 0.0
    %2914 = vmatpush1.msra.mxu0 0.0
    %2915 = vmatprep.subr.mxu0 0.0
    %2916 = vmatpush1.msra.mxu0 0.0
    %2917 = vmatprep.subr.mxu0 0.0
    %2918 = vmatpush1.msra.mxu0 0.0
    %2919 = vmatprep.subr.mxu0 0.0
    %2920 = vmatpush1.msra.mxu0 0.0
    %2921 = vmatprep.subr.mxu0 0.0
    %2922 = vmatpush1.msra.mxu0 0.0
    %2923 = vmatprep.subr.mxu0 0.0
    %2924 = vmatpush1.msra.mxu0 0.0
    %2925 = vmatprep.subr.mxu0 0.0
    %2926 = vmatpush1.msra.mxu0 0.0
    %2927 = vmatprep.subr.mxu0 0.0
    %2928 = vmatpush1.msra.mxu0 0.0
    %2929 = vmatprep.subr.mxu0 0.0
    %2930 = vmatpush1.msra.mxu0 0.0
    %2931 = vmatprep.subr.mxu0 0.0
    %2932 = vmatpush1.msra.mxu0 0.0
    %2933 = vmatprep.subr.mxu0 0.0
    %2934 = vmatpush1.msra.mxu0 0.0
    %2935 = vmatprep.mubr.f32.mxu0 0.0
    %2936 = vmatmul.mubr.f32.gmra.mrb[0].mxu0 %v2869
    %v2937 = vpop.f32.mrb[0].mxu0
    %v2938 = vadd.f32 %v175, %v2937
    %v2939 = vpop.f32.mrb[0].mxu0
    %2940 = vdwg.mxu0
    %v2941 = vxor.u32 %v2938, 2147483648
    %v2942 = vmul.f32 %v2941, 1.442695
    %v2943 = vpow.pop %v2942
    %v2944 = vadd.f32 %v2943, 1.0
    %v2945 = vrcp.pop %v2944
    %v2946 = vmul.f32 1.0, %v2945
    %v2947 = vtanh.pop %v2938
    %v2948 = vmul.f32 %v2946, %v2752
    %2950 = vrot.lane.b32.xlu0 %v2947, 64
    %v2951 = vpop.permute.xlu0 %2950
    %v2953 = vmul.f32 %v2946, %v2951
    %2955 = vrot.lane.b32.xlu0 %v2953, 32
    %v2956 = vpop.permute.xlu0 %2955
    %v2958 = vadd.f32 %v2948, %v2956
    %v2959 = vtanh.pop %v2958
    %2961 = vrot.lane.b32.xlu0 %v2959, 64
    %v2962 = vpop.permute.xlu0 %2961
    %v2964 = vmul.f32 %v2946, %v2962
    %2965 = vrot.lane.b32.xlu0 %v2856, 32
    %v2966 = vpop.permute.xlu0 %2965
    %v2967 = vsel %vm60, %v2966, 0
    %2969 = vmatprep.subr.mxu0 0.0
    %2970 = vmatpush1.msra.mxu0 %v41
    %2971 = vmatprep.subr.mxu0 0.0
    %2972 = vmatpush1.msra.mxu0 %v42
    %2973 = vmatprep.subr.mxu0 0.0
    %2974 = vmatpush1.msra.mxu0 %v43
    %2975 = vmatprep.subr.mxu0 0.0
    %2976 = vmatpush1.msra.mxu0 %v44
    %2977 = vmatprep.subr.mxu0 0.0
    %2978 = vmatpush1.msra.mxu0 0.0
    %2979 = vmatprep.subr.mxu0 0.0
    %2980 = vmatpush1.msra.mxu0 0.0
    %2981 = vmatprep.subr.mxu0 0.0
    %2982 = vmatpush1.msra.mxu0 0.0
    %2983 = vmatprep.subr.mxu0 0.0
    %2984 = vmatpush1.msra.mxu0 0.0
    %2985 = vmatprep.subr.mxu0 0.0
    %2986 = vmatpush1.msra.mxu0 0.0
    %2987 = vmatprep.subr.mxu0 0.0
    %2988 = vmatpush1.msra.mxu0 0.0
    %2989 = vmatprep.subr.mxu0 0.0
    %2990 = vmatpush1.msra.mxu0 0.0
    %2991 = vmatprep.subr.mxu0 0.0
    %2992 = vmatpush1.msra.mxu0 0.0
    %2993 = vmatprep.subr.mxu0 0.0
    %2994 = vmatpush1.msra.mxu0 0.0
    %2995 = vmatprep.subr.mxu0 0.0
    %2996 = vmatpush1.msra.mxu0 0.0
    %2997 = vmatprep.subr.mxu0 0.0
    %2998 = vmatpush1.msra.mxu0 0.0
    %2999 = vmatprep.subr.mxu0 0.0
    %3000 = vmatpush1.msra.mxu0 0.0
    %3001 = vmatprep.subr.mxu0 0.0
    %3002 = vmatpush1.msra.mxu0 0.0
    %3003 = vmatprep.subr.mxu0 0.0
    %3004 = vmatpush1.msra.mxu0 0.0
    %3005 = vmatprep.subr.mxu0 0.0
    %3006 = vmatpush1.msra.mxu0 0.0
    %3007 = vmatprep.subr.mxu0 0.0
    %3008 = vmatpush1.msra.mxu0 0.0
    %3009 = vmatprep.subr.mxu0 0.0
    %3010 = vmatpush1.msra.mxu0 0.0
    %3011 = vmatprep.subr.mxu0 0.0
    %3012 = vmatpush1.msra.mxu0 0.0
    %3013 = vmatprep.subr.mxu0 0.0
    %3014 = vmatpush1.msra.mxu0 0.0
    %3015 = vmatprep.subr.mxu0 0.0
    %3016 = vmatpush1.msra.mxu0 0.0
    %3017 = vmatprep.subr.mxu0 0.0
    %3018 = vmatpush1.msra.mxu0 0.0
    %3019 = vmatprep.subr.mxu0 0.0
    %3020 = vmatpush1.msra.mxu0 0.0
    %3021 = vmatprep.subr.mxu0 0.0
    %3022 = vmatpush1.msra.mxu0 0.0
    %3023 = vmatprep.subr.mxu0 0.0
    %3024 = vmatpush1.msra.mxu0 0.0
    %3025 = vmatprep.subr.mxu0 0.0
    %3026 = vmatpush1.msra.mxu0 0.0
    %3027 = vmatprep.subr.mxu0 0.0
    %3028 = vmatpush1.msra.mxu0 0.0
    %3029 = vmatprep.subr.mxu0 0.0
    %3030 = vmatpush1.msra.mxu0 0.0
    %3031 = vmatprep.subr.mxu0 0.0
    %3032 = vmatpush1.msra.mxu0 0.0
    %3033 = vmatprep.mubr.f32.mxu0 0.0
    %3034 = vmatmul.mubr.f32.gmra.mrb[0].mxu0 %v2967
    %v3035 = vpop.f32.mrb[0].mxu0
    %v3036 = vadd.f32 %v66, %v3035
    %v3037 = vpop.f32.mrb[0].mxu0
    %3038 = vdwg.mxu0
    %v3039 = vxor.u32 %v3036, 2147483648
    %v3040 = vmul.f32 %v3039, 1.442695
    %v3041 = vpow.pop %v3040
    %v3042 = vadd.f32 %v3041, 1.0
    %v3043 = vrcp.pop %v3042
    %v3044 = vmul.f32 1.0, %v3043
    %v3045 = vtanh.pop %v3036
    %v3046 = vmul.f32 %v3044, %v2850
    %3048 = vrot.lane.b32.xlu0 %v3045, 64
    %v3049 = vpop.permute.xlu0 %3048
    %v3051 = vmul.f32 %v3044, %v3049
    %3053 = vrot.lane.b32.xlu0 %v3051, 32
    %v3054 = vpop.permute.xlu0 %3053
    %v3056 = vadd.f32 %v3046, %v3054
    %v3057 = vtanh.pop %v3056
    %3059 = vrot.lane.b32.xlu0 %v3057, 64
    %v3060 = vpop.permute.xlu0 %3059
    %v3062 = vmul.f32 %v3044, %v3060
    %v3063 = vld [vmem:[%s1 + $0xc] sm:$0x3]
    %3065 = vrot.lane.b32.xlu0 %v3062, 64
    %v3066 = vpop.permute.xlu0 %3065
    %3069 = vrot.lane.b32.xlu0 %v2964, 96
    %v3070 = vpop.permute.xlu0 %3069
    %v3072 = vsel %vm60, %v3063, %v3066
    %v3073 = vsel %vm68, %v3072, %v3070
    %v3075 = vsel %vm1837, %v3073, 0
    %3077 = vmatprep.subr.mxu0 0.0
    %3078 = vmatpush1.msra.mxu0 %v46
    %3079 = vmatprep.subr.mxu0 0.0
    %3080 = vmatpush1.msra.mxu0 %v47
    %3081 = vmatprep.subr.mxu0 0.0
    %3082 = vmatpush1.msra.mxu0 %v48
    %3083 = vmatprep.subr.mxu0 0.0
    %3084 = vmatpush1.msra.mxu0 %v49
    %3085 = vmatprep.subr.mxu0 0.0
    %3086 = vmatpush1.msra.mxu0 %v50
    %3087 = vmatprep.subr.mxu0 0.0
    %3088 = vmatpush1.msra.mxu0 %v51
    %3089 = vmatprep.subr.mxu0 0.0
    %3090 = vmatpush1.msra.mxu0 %v52
    %3091 = vmatprep.subr.mxu0 0.0
    %3092 = vmatpush1.msra.mxu0 %v53
    %3093 = vmatprep.subr.mxu0 0.0
    %3094 = vmatpush1.msra.mxu0 %v54
    %3095 = vmatprep.subr.mxu0 0.0
    %3096 = vmatpush1.msra.mxu0 %v55
    %3097 = vmatprep.subr.mxu0 0.0
    %3098 = vmatpush1.msra.mxu0 %v56
    %3099 = vmatprep.subr.mxu0 0.0
    %3100 = vmatpush1.msra.mxu0 %v57
    %3101 = vmatprep.subr.mxu0 0.0
    %3102 = vmatpush1.msra.mxu0 0.0
    %3103 = vmatprep.subr.mxu0 0.0
    %3104 = vmatpush1.msra.mxu0 0.0
    %3105 = vmatprep.subr.mxu0 0.0
    %3106 = vmatpush1.msra.mxu0 0.0
    %3107 = vmatprep.subr.mxu0 0.0
    %3108 = vmatpush1.msra.mxu0 0.0
    %3109 = vmatprep.subr.mxu0 0.0
    %3110 = vmatpush1.msra.mxu0 0.0
    %3111 = vmatprep.subr.mxu0 0.0
    %3112 = vmatpush1.msra.mxu0 0.0
    %3113 = vmatprep.subr.mxu0 0.0
    %3114 = vmatpush1.msra.mxu0 0.0
    %3115 = vmatprep.subr.mxu0 0.0
    %3116 = vmatpush1.msra.mxu0 0.0
    %3117 = vmatprep.subr.mxu0 0.0
    %3118 = vmatpush1.msra.mxu0 0.0
    %3119 = vmatprep.subr.mxu0 0.0
    %3120 = vmatpush1.msra.mxu0 0.0
    %3121 = vmatprep.subr.mxu0 0.0
    %3122 = vmatpush1.msra.mxu0 0.0
    %3123 = vmatprep.subr.mxu0 0.0
    %3124 = vmatpush1.msra.mxu0 0.0
    %3125 = vmatprep.subr.mxu0 0.0
    %3126 = vmatpush1.msra.mxu0 0.0
    %3127 = vmatprep.subr.mxu0 0.0
    %3128 = vmatpush1.msra.mxu0 0.0
    %3129 = vmatprep.subr.mxu0 0.0
    %3130 = vmatpush1.msra.mxu0 0.0
    %3131 = vmatprep.subr.mxu0 0.0
    %3132 = vmatpush1.msra.mxu0 0.0
    %3133 = vmatprep.subr.mxu0 0.0
    %3134 = vmatpush1.msra.mxu0 0.0
    %3135 = vmatprep.subr.mxu0 0.0
    %3136 = vmatpush1.msra.mxu0 0.0
    %3137 = vmatprep.subr.mxu0 0.0
    %3138 = vmatpush1.msra.mxu0 0.0
    %3139 = vmatprep.subr.mxu0 0.0
    %3140 = vmatpush1.msra.mxu0 0.0
    %3141 = vmatprep.mubr.f32.mxu0 0.0
    %3142 = vmatmul.mubr.f32.gmra.mrb[0].mxu0 %v3075
    %v3143 = vpop.f32.mrb[0].mxu0
    %v3144 = vadd.f32 %v175, %v3143
    %v3145 = vpop.f32.mrb[0].mxu0
    %3146 = vdwg.mxu0
    %v3147 = vxor.u32 %v3144, 2147483648
    %v3148 = vmul.f32 %v3147, 1.442695
    %v3149 = vpow.pop %v3148
    %v3150 = vadd.f32 %v3149, 1.0
    %v3151 = vrcp.pop %v3150
    %v3152 = vmul.f32 1.0, %v3151
    %v3153 = vtanh.pop %v3144
    %v3154 = vmul.f32 %v3152, %v2958
    %3156 = vrot.lane.b32.xlu0 %v3153, 64
    %v3157 = vpop.permute.xlu0 %3156
    %v3159 = vmul.f32 %v3152, %v3157
    %3161 = vrot.lane.b32.xlu0 %v3159, 32
    %v3162 = vpop.permute.xlu0 %3161
    %v3164 = vadd.f32 %v3154, %v3162
    %v3165 = vtanh.pop %v3164
    %3167 = vrot.lane.b32.xlu0 %v3165, 64
    %v3168 = vpop.permute.xlu0 %3167
    %v3170 = vmul.f32 %v3152, %v3168
    %3171 = vrot.lane.b32.xlu0 %v3062, 32
    %v3172 = vpop.permute.xlu0 %3171
    %v3173 = vsel %vm60, %v3172, 0
    %3175 = vmatprep.subr.mxu0 0.0
    %3176 = vmatpush1.msra.mxu0 %v41
    %3177 = vmatprep.subr.mxu0 0.0
    %3178 = vmatpush1.msra.mxu0 %v42
    %3179 = vmatprep.subr.mxu0 0.0
    %3180 = vmatpush1.msra.mxu0 %v43
    %3181 = vmatprep.subr.mxu0 0.0
    %3182 = vmatpush1.msra.mxu0 %v44
    %3183 = vmatprep.subr.mxu0 0.0
    %3184 = vmatpush1.msra.mxu0 0.0
    %3185 = vmatprep.subr.mxu0 0.0
    %3186 = vmatpush1.msra.mxu0 0.0
    %3187 = vmatprep.subr.mxu0 0.0
    %3188 = vmatpush1.msra.mxu0 0.0
    %3189 = vmatprep.subr.mxu0 0.0
    %3190 = vmatpush1.msra.mxu0 0.0
    %3191 = vmatprep.subr.mxu0 0.0
    %3192 = vmatpush1.msra.mxu0 0.0
    %3193 = vmatprep.subr.mxu0 0.0
    %3194 = vmatpush1.msra.mxu0 0.0
    %3195 = vmatprep.subr.mxu0 0.0
    %3196 = vmatpush1.msra.mxu0 0.0
    %3197 = vmatprep.subr.mxu0 0.0
    %3198 = vmatpush1.msra.mxu0 0.0
    %3199 = vmatprep.subr.mxu0 0.0
    %3200 = vmatpush1.msra.mxu0 0.0
    %3201 = vmatprep.subr.mxu0 0.0
    %3202 = vmatpush1.msra.mxu0 0.0
    %3203 = vmatprep.subr.mxu0 0.0
    %3204 = vmatpush1.msra.mxu0 0.0
    %3205 = vmatprep.subr.mxu0 0.0
    %3206 = vmatpush1.msra.mxu0 0.0
    %3207 = vmatprep.subr.mxu0 0.0
    %3208 = vmatpush1.msra.mxu0 0.0
    %3209 = vmatprep.subr.mxu0 0.0
    %3210 = vmatpush1.msra.mxu0 0.0
    %3211 = vmatprep.subr.mxu0 0.0
    %3212 = vmatpush1.msra.mxu0 0.0
    %3213 = vmatprep.subr.mxu0 0.0
    %3214 = vmatpush1.msra.mxu0 0.0
    %3215 = vmatprep.subr.mxu0 0.0
    %3216 = vmatpush1.msra.mxu0 0.0
    %3217 = vmatprep.subr.mxu0 0.0
    %3218 = vmatpush1.msra.mxu0 0.0
    %3219 = vmatprep.subr.mxu0 0.0
    %3220 = vmatpush1.msra.mxu0 0.0
    %3221 = vmatprep.subr.mxu0 0.0
    %3222 = vmatpush1.msra.mxu0 0.0
    %3223 = vmatprep.subr.mxu0 0.0
    %3224 = vmatpush1.msra.mxu0 0.0
    %3225 = vmatprep.subr.mxu0 0.0
    %3226 = vmatpush1.msra.mxu0 0.0
    %3227 = vmatprep.subr.mxu0 0.0
    %3228 = vmatpush1.msra.mxu0 0.0
    %3229 = vmatprep.subr.mxu0 0.0
    %3230 = vmatpush1.msra.mxu0 0.0
    %3231 = vmatprep.subr.mxu0 0.0
    %3232 = vmatpush1.msra.mxu0 0.0
    %3233 = vmatprep.subr.mxu0 0.0
    %3234 = vmatpush1.msra.mxu0 0.0
    %3235 = vmatprep.subr.mxu0 0.0
    %3236 = vmatpush1.msra.mxu0 0.0
    %3237 = vmatprep.subr.mxu0 0.0
    %3238 = vmatpush1.msra.mxu0 0.0
    %3239 = vmatprep.mubr.f32.mxu0 0.0
    %3240 = vmatmul.mubr.f32.gmra.mrb[0].mxu0 %v3173
    %v3241 = vpop.f32.mrb[0].mxu0
    %v3242 = vadd.f32 %v66, %v3241
    %v3243 = vpop.f32.mrb[0].mxu0
    %3244 = vdwg.mxu0
    %v3245 = vxor.u32 %v3242, 2147483648
    %v3246 = vmul.f32 %v3245, 1.442695
    %v3247 = vpow.pop %v3246
    %v3248 = vadd.f32 %v3247, 1.0
    %v3249 = vrcp.pop %v3248
    %v3250 = vmul.f32 1.0, %v3249
    %v3251 = vtanh.pop %v3242
    %v3252 = vmul.f32 %v3250, %v3056
    %3254 = vrot.lane.b32.xlu0 %v3251, 64
    %v3255 = vpop.permute.xlu0 %3254
    %v3257 = vmul.f32 %v3250, %v3255
    %3259 = vrot.lane.b32.xlu0 %v3257, 32
    %v3260 = vpop.permute.xlu0 %3259
    %v3262 = vadd.f32 %v3252, %v3260
    %v3263 = vtanh.pop %v3262
    %3265 = vrot.lane.b32.xlu0 %v3263, 64
    %v3266 = vpop.permute.xlu0 %3265
    %v3268 = vmul.f32 %v3250, %v3266
    %v3269 = vld [vmem:[%s1 + $0xe] sm:$0x3]
    %3271 = vrot.lane.b32.xlu0 %v3268, 64
    %v3272 = vpop.permute.xlu0 %3271
    %3275 = vrot.lane.b32.xlu0 %v3170, 96
    %v3276 = vpop.permute.xlu0 %3275
    %v3278 = vsel %vm60, %v3269, %v3272
    %v3279 = vsel %vm68, %v3278, %v3276
    %v3281 = vsel %vm1837, %v3279, 0
    %3283 = vmatprep.subr.mxu0 0.0
    %3284 = vmatpush1.msra.mxu0 %v46
    %3285 = vmatprep.subr.mxu0 0.0
    %3286 = vmatpush1.msra.mxu0 %v47
    %3287 = vmatprep.subr.mxu0 0.0
    %3288 = vmatpush1.msra.mxu0 %v48
    %3289 = vmatprep.subr.mxu0 0.0
    %3290 = vmatpush1.msra.mxu0 %v49
    %3291 = vmatprep.subr.mxu0 0.0
    %3292 = vmatpush1.msra.mxu0 %v50
    %3293 = vmatprep.subr.mxu0 0.0
    %3294 = vmatpush1.msra.mxu0 %v51
    %3295 = vmatprep.subr.mxu0 0.0
    %3296 = vmatpush1.msra.mxu0 %v52
    %3297 = vmatprep.subr.mxu0 0.0
    %3298 = vmatpush1.msra.mxu0 %v53
    %3299 = vmatprep.subr.mxu0 0.0
    %3300 = vmatpush1.msra.mxu0 %v54
    %3301 = vmatprep.subr.mxu0 0.0
    %3302 = vmatpush1.msra.mxu0 %v55
    %3303 = vmatprep.subr.mxu0 0.0
    %3304 = vmatpush1.msra.mxu0 %v56
    %3305 = vmatprep.subr.mxu0 0.0
    %3306 = vmatpush1.msra.mxu0 %v57
    %3307 = vmatprep.subr.mxu0 0.0
    %3308 = vmatpush1.msra.mxu0 0.0
    %3309 = vmatprep.subr.mxu0 0.0
    %3310 = vmatpush1.msra.mxu0 0.0
    %3311 = vmatprep.subr.mxu0 0.0
    %3312 = vmatpush1.msra.mxu0 0.0
    %3313 = vmatprep.subr.mxu0 0.0
    %3314 = vmatpush1.msra.mxu0 0.0
    %3315 = vmatprep.subr.mxu0 0.0
    %3316 = vmatpush1.msra.mxu0 0.0
    %3317 = vmatprep.subr.mxu0 0.0
    %3318 = vmatpush1.msra.mxu0 0.0
    %3319 = vmatprep.subr.mxu0 0.0
    %3320 = vmatpush1.msra.mxu0 0.0
    %3321 = vmatprep.subr.mxu0 0.0
    %3322 = vmatpush1.msra.mxu0 0.0
    %3323 = vmatprep.subr.mxu0 0.0
    %3324 = vmatpush1.msra.mxu0 0.0
    %3325 = vmatprep.subr.mxu0 0.0
    %3326 = vmatpush1.msra.mxu0 0.0
    %3327 = vmatprep.subr.mxu0 0.0
    %3328 = vmatpush1.msra.mxu0 0.0
    %3329 = vmatprep.subr.mxu0 0.0
    %3330 = vmatpush1.msra.mxu0 0.0
    %3331 = vmatprep.subr.mxu0 0.0
    %3332 = vmatpush1.msra.mxu0 0.0
    %3333 = vmatprep.subr.mxu0 0.0
    %3334 = vmatpush1.msra.mxu0 0.0
    %3335 = vmatprep.subr.mxu0 0.0
    %3336 = vmatpush1.msra.mxu0 0.0
    %3337 = vmatprep.subr.mxu0 0.0
    %3338 = vmatpush1.msra.mxu0 0.0
    %3339 = vmatprep.subr.mxu0 0.0
    %3340 = vmatpush1.msra.mxu0 0.0
    %3341 = vmatprep.subr.mxu0 0.0
    %3342 = vmatpush1.msra.mxu0 0.0
    %3343 = vmatprep.subr.mxu0 0.0
    %3344 = vmatpush1.msra.mxu0 0.0
    %3345 = vmatprep.subr.mxu0 0.0
    %3346 = vmatpush1.msra.mxu0 0.0
    %3347 = vmatprep.mubr.f32.mxu0 0.0
    %3348 = vmatmul.mubr.f32.gmra.mrb[0].mxu0 %v3281
    %v3349 = vpop.f32.mrb[0].mxu0
    %v3350 = vadd.f32 %v175, %v3349
    %v3351 = vpop.f32.mrb[0].mxu0
    %3352 = vdwg.mxu0
    %v3353 = vxor.u32 %v3350, 2147483648
    %v3354 = vmul.f32 %v3353, 1.442695
    %v3355 = vpow.pop %v3354
    %v3356 = vadd.f32 %v3355, 1.0
    %v3357 = vrcp.pop %v3356
    %v3358 = vmul.f32 1.0, %v3357
    %v3359 = vtanh.pop %v3350
    %v3360 = vmul.f32 %v3358, %v3164
    %3362 = vrot.lane.b32.xlu0 %v3359, 64
    %v3363 = vpop.permute.xlu0 %3362
    %v3365 = vmul.f32 %v3358, %v3363
    %3367 = vrot.lane.b32.xlu0 %v3365, 32
    %v3368 = vpop.permute.xlu0 %3367
    %v3370 = vadd.f32 %v3360, %v3368
    %v3371 = vtanh.pop %v3370
    %3373 = vrot.lane.b32.xlu0 %v3371, 64
    %v3374 = vpop.permute.xlu0 %3373
    %v3376 = vmul.f32 %v3358, %v3374
    %v3377 = vrot.slane %v2140, 6
    %v3379 = vrot.slane %v2346, 4
    %v3381 = vrot.slane %v2552, 2
    %v3383 = vrot.slane %v2964, 6
    %v3385 = vrot.slane %v3170, 4
    %v3388 = vrot.slane %v3376, 2
    %vm3390 = vcmask 1041408
    %v3391 = vsel %vm3390, %v1934, %v3377
    %vm3392 = vcmask 1043456
    %v3393 = vsel %vm3392, %v3391, %v3379
    %vm3394 = vcmask 1045504
    %v3395 = vsel %vm3394, %v3393, %v3381
    %v3396 = vsel %vm3390, %v2758, %v3383
    %v3397 = vsel %vm3392, %v3396, %v3385
    %v3398 = vsel %vm3394, %v3397, %v3388
    %v3399 = vld [vmem:[%s6] sm:$0xff]
    %v3400 = vld [vmem:[%s6 + $0x8] sm:$0xff]
    %v3401 = vld [vmem:[%s6 + $0x10] sm:$0xff]
    %v3402 = vld [vmem:[%s6 + $0x18] sm:$0xff]
    %v3403 = vld [vmem:[%s7] sm:$0x1]
    %v3405 = vlaneseq
    %v3406 = vshrl.u32 %v3405, 7
    %v3407 = vsub.s32 0, %v3406
    %v3408 = vrot.slane %v3403, %v3407
    %3412 = vrot.lane.b32.xlu0 %v3395, 32
    %v3413 = vpop.permute.xlu0 %3412
    %3414 = vrot.lane.b32.xlu0 %v3398, 32
    %v3415 = vpop.permute.xlu0 %3414
    %v3416 = vsel %vm60, %v3413, 0
    %v3418 = vsel %vm60, %v3415, 0
    %3420 = vmatprep.subr.mxu0 0.0
    %3421 = vmatpush1.msra.mxu0 %v3399
    %3422 = vmatprep.subr.mxu0 0.0
    %3423 = vmatpush1.msra.mxu0 %v3400
    %3424 = vmatprep.subr.mxu0 0.0
    %3425 = vmatpush1.msra.mxu0 %v3401
    %3426 = vmatprep.subr.mxu0 0.0
    %3427 = vmatpush1.msra.mxu0 %v3402
    %3428 = vmatprep.subr.mxu0 0.0
    %3429 = vmatpush1.msra.mxu0 0.0
    %3430 = vmatprep.subr.mxu0 0.0
    %3431 = vmatpush1.msra.mxu0 0.0
    %3432 = vmatprep.subr.mxu0 0.0
    %3433 = vmatpush1.msra.mxu0 0.0
    %3434 = vmatprep.subr.mxu0 0.0
    %3435 = vmatpush1.msra.mxu0 0.0
    %3436 = vmatprep.subr.mxu0 0.0
    %3437 = vmatpush1.msra.mxu0 0.0
    %3438 = vmatprep.subr.mxu0 0.0
    %3439 = vmatpush1.msra.mxu0 0.0
    %3440 = vmatprep.subr.mxu0 0.0
    %3441 = vmatpush1.msra.mxu0 0.0
    %3442 = vmatprep.subr.mxu0 0.0
    %3443 = vmatpush1.msra.mxu0 0.0
    %3444 = vmatprep.subr.mxu0 0.0
    %3445 = vmatpush1.msra.mxu0 0.0
    %3446 = vmatprep.subr.mxu0 0.0
    %3447 = vmatpush1.msra.mxu0 0.0
    %3448 = vmatprep.subr.mxu0 0.0
    %3449 = vmatpush1.msra.mxu0 0.0
    %3450 = vmatprep.subr.mxu0 0.0
    %3451 = vmatpush1.msra.mxu0 0.0
    %3452 = vmatprep.subr.mxu0 0.0
    %3453 = vmatpush1.msra.mxu0 0.0
    %3454 = vmatprep.subr.mxu0 0.0
    %3455 = vmatpush1.msra.mxu0 0.0
    %3456 = vmatprep.subr.mxu0 0.0
    %3457 = vmatpush1.msra.mxu0 0.0
    %3458 = vmatprep.subr.mxu0 0.0
    %3459 = vmatpush1.msra.mxu0 0.0
    %3460 = vmatprep.subr.mxu0 0.0
    %3461 = vmatpush1.msra.mxu0 0.0
    %3462 = vmatprep.subr.mxu0 0.0
    %3463 = vmatpush1.msra.mxu0 0.0
    %3464 = vmatprep.subr.mxu0 0.0
    %3465 = vmatpush1.msra.mxu0 0.0
    %3466 = vmatprep.subr.mxu0 0.0
    %3467 = vmatpush1.msra.mxu0 0.0
    %3468 = vmatprep.subr.mxu0 0.0
    %3469 = vmatpush1.msra.mxu0 0.0
    %3470 = vmatprep.subr.mxu0 0.0
    %3471 = vmatpush1.msra.mxu0 0.0
    %3472 = vmatprep.subr.mxu0 0.0
    %3473 = vmatpush1.msra.mxu0 0.0
    %3474 = vmatprep.subr.mxu0 0.0
    %3475 = vmatpush1.msra.mxu0 0.0
    %3476 = vmatprep.subr.mxu0 0.0
    %3477 = vmatpush1.msra.mxu0 0.0
    %3478 = vmatprep.subr.mxu0 0.0
    %3479 = vmatpush1.msra.mxu0 0.0
    %3480 = vmatprep.subr.mxu0 0.0
    %3481 = vmatpush1.msra.mxu0 0.0
    %3482 = vmatprep.subr.mxu0 0.0
    %3483 = vmatpush1.msra.mxu0 0.0
    %3484 = vmatprep.mubr.f32.mxu0 0.0
    %3485 = vmatmul.mubr.f32.gmra.mrb[0].mxu0 %v3416
    %v3486 = vpop.f32.mrb[0].mxu0
    %v3487 = vadd.f32 %v3408, %v3486
    %v3488 = vpop.f32.mrb[0].mxu0
    %3489 = vmatprep.mubr.f32.mxu0 0.0
    %3490 = vmatmul.mubr.f32.gmra.mrb[0].mxu0 %v3418
    %v3491 = vpop.f32.mrb[0].mxu0
    %v3492 = vadd.f32 %v3408, %v3491
    %v3493 = vpop.f32.mrb[0].mxu0
    %3494 = vdwg.mxu0
    %3495 = vst.msk [vmem:[#allocation2] sm:$0xff] %vm68, %v3487
    %3496 = vst.msk [vmem:[#allocation2 + $0x8] sm:$0xff] %vm68, %v3492
    %3497 = vrot.lane.b32.xlu0 %v3268, 32
    %v3498 = vpop.permute.xlu0 %3497
    %vm3500 = vcmask 254976
    %3501 = vst.msk [vmem:[#allocation4] sm:$0x3] %vm3500, %v3498
    %3503 = vrot.lane.b32.xlu0 %v3262, 96
    %v3504 = vpop.permute.xlu0 %3503
    %3506 = vst.msk [vmem:[#allocation6] sm:$0x3] %vm3500, %v3504
    %3507 = vrot.lane.b32.xlu0 %v3376, 32
    %v3508 = vpop.permute.xlu0 %3507
    %3510 = vst.msk [vmem:[#allocation7] sm:$0x3] %vm3500, %v3508
    %3512 = vrot.lane.b32.xlu0 %v3370, 96
    %v3513 = vpop.permute.xlu0 %3512
    %3515 = vst.msk [vmem:[#allocation9] sm:$0x3] %vm3500, %v3513
    // Predicated region
    $region34: #{new_seq2seq_forward.1} parent=1 // pred_check
      _
    $region35: #{new_seq2seq_forward.1} parent=1 // pred_check_branch
      %3517 = sbr.rel (0) target = $region37
    $region36: #{new_seq2seq_forward.1} parent=1 // pred_region
      %s3519 = ssub.s32 256, 256
      %3520 = vsyncadd [#allocation3], %s3519
      %s3521 = sshll.u32 [#allocation2], 4
      %s3522 = int_to_ptr.vmem [resolvable:$true] %s3521
      %3527 = dma.vmem_to_hbm [thread:$0]  %s3522, 256, %s8, [#allocation3], 128, 128, 8
    $region37: #{new_seq2seq_forward.1} parent=1 // pred_fallthru
      _
    // Predicated region
    $region38: #{new_seq2seq_forward.1} parent=1 // pred_check
      _
    $region39: #{new_seq2seq_forward.1} parent=1 // pred_check_branch
      %3529 = sbr.rel (0) target = $region41
    $region40: #{new_seq2seq_forward.1} parent=1 // pred_region
      %s3531 = ssub.s32 32, 32
      %3532 = vsyncadd [#allocation5], %s3531
      %s3534 = sshll.u32 [#allocation4], 4
      %s3535 = int_to_ptr.vmem [resolvable:$true] %s3534
      %3537 = dma.vmem_to_hbm [thread:$0]  %s3535, 32, %s9, [#allocation5]
    $region41: #{new_seq2seq_forward.1} parent=1 // pred_fallthru
      _
    // Predicated region
    $region42: #{new_seq2seq_forward.1} parent=1 // pred_check
      _
    $region43: #{new_seq2seq_forward.1} parent=1 // pred_check_branch
      %3539 = sbr.rel (0) target = $region45
    $region44: #{new_seq2seq_forward.1} parent=1 // pred_region
      %s3541 = ssub.s32 32, 32
      %3542 = vsyncadd [#allocation5], %s3541
      %s3544 = sshll.u32 [#allocation6], 4
      %s3545 = int_to_ptr.vmem [resolvable:$true] %s3544
      %3547 = dma.vmem_to_hbm [thread:$0]  %s3545, 32, %s10, [#allocation5]
    $region45: #{new_seq2seq_forward.1} parent=1 // pred_fallthru
      _
    // Predicated region
    $region46: #{new_seq2seq_forward.1} parent=1 // pred_check
      _
    $region47: #{new_seq2seq_forward.1} parent=1 // pred_check_branch
      %3549 = sbr.rel (0) target = $region49
    $region48: #{new_seq2seq_forward.1} parent=1 // pred_region
      %s3551 = ssub.s32 32, 32
      %3552 = vsyncadd [#allocation8], %s3551
      %s3554 = sshll.u32 [#allocation7], 4
      %s3555 = int_to_ptr.vmem [resolvable:$true] %s3554
      %3557 = dma.vmem_to_hbm [thread:$0]  %s3555, 32, %s11, [#allocation8]
    $region49: #{new_seq2seq_forward.1} parent=1 // pred_fallthru
      _
    // Predicated region
    $region50: #{new_seq2seq_forward.1} parent=1 // pred_check
      _
    $region51: #{new_seq2seq_forward.1} parent=1 // pred_check_branch
      %3559 = sbr.rel (0) target = $region53
    $region52: #{new_seq2seq_forward.1} parent=1 // pred_region
      %s3561 = ssub.s32 32, 32
      %3562 = vsyncadd [#allocation8], %s3561
      %s3564 = sshll.u32 [#allocation9], 4
      %s3565 = int_to_ptr.vmem [resolvable:$true] %s3564
      %3567 = dma.vmem_to_hbm [thread:$0]  %s3565, 32, %s12, [#allocation8]
    $region53: #{new_seq2seq_forward.1} parent=1 // pred_fallthru
      _
    // Predicated region
    $region54: #{new_seq2seq_forward.1} parent=1 // pred_check
      _
    $region55: #{new_seq2seq_forward.1} parent=1 // pred_check_branch
      %3569 = sbr.rel (0) target = $region57
    $region56: #{new_seq2seq_forward.1} parent=1 // pred_region
      %3570 = dma.done [#allocation3], 256
    $region57: #{new_seq2seq_forward.1} parent=1 // pred_fallthru
      _
    // Predicated region
    $region58: #{new_seq2seq_forward.1} parent=1 // pred_check
      _
    $region59: #{new_seq2seq_forward.1} parent=1 // pred_check_branch
      %3572 = sbr.rel (0) target = $region61
    $region60: #{new_seq2seq_forward.1} parent=1 // pred_region
      %3573 = dma.done [#allocation5], 32
    $region61: #{new_seq2seq_forward.1} parent=1 // pred_fallthru
      _
    // Predicated region
    $region62: #{new_seq2seq_forward.1} parent=1 // pred_check
      _
    $region63: #{new_seq2seq_forward.1} parent=1 // pred_check_branch
      %3575 = sbr.rel (0) target = $region65
    $region64: #{new_seq2seq_forward.1} parent=1 // pred_region
      %3576 = dma.done [#allocation5], 32
    $region65: #{new_seq2seq_forward.1} parent=1 // pred_fallthru
      _
    // Predicated region
    $region66: #{new_seq2seq_forward.1} parent=1 // pred_check
      _
    $region67: #{new_seq2seq_forward.1} parent=1 // pred_check_branch
      %3578 = sbr.rel (0) target = $region69
    $region68: #{new_seq2seq_forward.1} parent=1 // pred_region
      %3579 = dma.done [#allocation8], 32
    $region69: #{new_seq2seq_forward.1} parent=1 // pred_fallthru
      _
    // Predicated region
    $region70: #{new_seq2seq_forward.1} parent=1 // pred_check
      _
    $region71: #{new_seq2seq_forward.1} parent=1 // pred_check_branch
      %3581 = sbr.rel (0) target = $region73
    $region72: #{new_seq2seq_forward.1} parent=1 // pred_region
      %3582 = dma.done [#allocation8], 32
    $region73: #{new_seq2seq_forward.1} parent=1 // pred_fallthru
      _
    %3583 = vsyncpa [#allocation3], 1
    %3584 = vsyncpa [#allocation5], 1
    %3585 = vsyncpa [#allocation8], 1

</llo_original>
